<compile_context>
chip_gen: v7x
topology: tpu7x:2x2x1
jax: 0.10.0
libtpu: 0.0.40
codegen_flags: <defaults>
</compile_context>

<pallas_src>
import functools

import jax
import jax.numpy as jnp
from jax.experimental import pallas as pl
from jax.experimental.pallas import tpu as pltpu


def _expand_kernel(x_ref, o_ref, *, gain):
    # x_ref: (1, C,  th,   W)      one batch element, a tile of `th` input rows
    # o_ref: (1, Cp, th*s, W*s)    the matching output row tile (lane-dense)
    s = gain
    _, C, th, W = x_ref.shape
    _, Cp, _, _ = o_ref.shape
    f32 = jnp.float32
    hi = jax.lax.Precision.HIGHEST

    # Column-spread selection matrices Cm[s2]: (W, s*W), Cm[w, c] = 1 iff c == w*s + s2.
    cw = jax.lax.broadcasted_iota(jnp.int32, (W, s * W), 0)
    cc = jax.lax.broadcasted_iota(jnp.int32, (W, s * W), 1)
    Cm = [(cc == cw * s + s2).astype(f32) for s2 in range(s)]

    # Row-spread selection matrices R[s1]: (s*th, th), R[r, h] = 1 iff r == h*s + s1.
    ri = jax.lax.broadcasted_iota(jnp.int32, (s * th, th), 0)
    rh = jax.lax.broadcasted_iota(jnp.int32, (s * th, th), 1)
    R = [(ri == rh * s + s1).astype(f32) for s1 in range(s)]

    # Lane (column) interleave, batched over all output channels at once:
    #   lanes[s1][cp*th + h, w*s + s2] = x[(s1*s + s2)*Cp + cp, h, w]
    lanes = []
    for s1 in range(s):
        acc = None
        for s2 in range(s):
            c0 = (s1 * s + s2) * Cp
            blk = x_ref[0, c0:c0 + Cp, :, :].astype(f32).reshape(Cp * th, W)
            part = jnp.dot(blk, Cm[s2], preferred_element_type=f32, precision=hi)
            acc = part if acc is None else acc + part
        lanes.append(acc)

    # Sublane (row) interleave per output channel, then one dense store per channel.
    # Each output element is produced by exactly one product-by-1.0 (plus zeros),
    # so the result is bit-exact for the permutation.
    for cp in range(Cp):
        tile = None
        for s1 in range(s):
            part = jnp.dot(R[s1], lanes[s1][cp * th:(cp + 1) * th, :],
                           preferred_element_type=f32, precision=hi)
            tile = part if tile is None else tile + part
        o_ref[0, cp, :, :] = tile.astype(o_ref.dtype)


def _pick_row_tile(H, C, W, itemsize):
    """Largest legal row tile whose (input + output) block stays under budget."""
    per_row_bytes = 2 * C * W * itemsize          # input row + output row (same #elements)
    budget = 4 * 1024 * 1024                      # per-step block budget; x2 double-buffering << VMEM
    if H % 8 != 0:
        return H                                  # must use the full extent (no (8,·)-aligned tile)
    cands = [d for d in range(8, H + 1, 8) if H % d == 0]
    fitting = [d for d in cands if d * per_row_bytes <= budget]
    return max(fitting) if fitting else min(cands)


def expand_pallas(x, gain=2):
    """Depth-to-space `Expand` forward. x: (N, C, H, W) -> (N, C//gain**2, H*gain, W*gain)."""
    s = int(gain)
    N, C, H, W = x.shape
    if C % (s * s) != 0:
        raise ValueError("channels must be divisible by gain**2")
    if s == 1:
        return x
    Cp = C // (s * s)

    th = _pick_row_tile(H, C, W, jnp.dtype(x.dtype).itemsize)
    grid = (N, H // th)

    kernel = functools.partial(_expand_kernel, gain=s)
    return pl.pallas_call(
        kernel,
        out_shape=jax.ShapeDtypeStruct((N, Cp, H * s, W * s), x.dtype),
        grid=grid,
        in_specs=[pl.BlockSpec((1, C, th, W), lambda n, t: (n, 0, t, 0))],
        out_specs=pl.BlockSpec((1, Cp, th * s, W * s), lambda n, t: (n, 0, t, 0)),
        compiler_params=pltpu.CompilerParams(
            dimension_semantics=("parallel", "parallel")),
    )(x)


def _reference(x, gain=2):
    s = gain
    N, C, H, W = x.shape
    Cp = C // (s * s)
    y = x.reshape(N, s, s, Cp, H, W)
    y = jnp.transpose(y, (0, 3, 4, 1, 5, 2))
    return y.reshape(N, Cp, H * s, W * s)


if __name__ == "__main__":
    key = jax.random.PRNGKey(0)
    N, C, H, W, GAIN = 2, 4, 16, 16, 2

    x = jax.random.normal(key, (N, C, H, W), jnp.float32)

    out = expand_pallas(x, gain=GAIN)
    out = jax.block_until_ready(out)

    ref = _reference(x, gain=GAIN)
    assert out.shape == (N, C // GAIN ** 2, H * GAIN, W * GAIN)
    assert jnp.allclose(out, ref, atol=1e-6, rtol=1e-6), "mismatch vs reference"

    print("KERNEL_OK")
</pallas_src>

<mosaic_0001>
module attributes {stable_mosaic.version = 11 : i64} {
  func.func @_expand_kernel(%arg0: i32, %arg1: i32, %arg2: memref<1x4x16x16xf32, #tpu.memory_space<vmem>>, %arg3: memref<1x1x32x32xf32, #tpu.memory_space<vmem>>) attributes {dimension_semantics = [#tpu.dimension_semantics<parallel>, #tpu.dimension_semantics<parallel>], iteration_bounds = array<i64: 2, 1>, scalar_prefetch = 0 : i64, scratch_operands = 0 : i64, tpu.core_type = #tpu.core_type<tc>, window_params = [{transform_indices = @transform_0, window_bounds = array<i64: 1, 4, 16, 16>}, {transform_indices = @transform_1, window_bounds = array<i64: 1, 1, 32, 32>}]} {
    %0 = tpu.iota {dimensions = array<i32: 0>} : vector<16x32xi32>
    %1 = tpu.iota {dimensions = array<i32: 1>} : vector<16x32xi32>
    %c2_i32 = arith.constant 2 : i32
    %2 = vector.broadcast %c2_i32 : i32 to vector<16x32xi32>
    %3 = arith.muli %0, %2 : vector<16x32xi32>
    %c0_i32 = arith.constant 0 : i32
    %4 = vector.broadcast %c0_i32 : i32 to vector<16x32xi32>
    %5 = arith.addi %3, %4 : vector<16x32xi32>
    %6 = arith.cmpi eq, %1, %5 : vector<16x32xi32>
    %7 = arith.extui %6 : vector<16x32xi1> to vector<16x32xi32>
    %8 = arith.sitofp %7 : vector<16x32xi32> to vector<16x32xf32>
    %c2_i32_0 = arith.constant 2 : i32
    %9 = vector.broadcast %c2_i32_0 : i32 to vector<16x32xi32>
    %10 = arith.muli %0, %9 : vector<16x32xi32>
    %c1_i32 = arith.constant 1 : i32
    %11 = vector.broadcast %c1_i32 : i32 to vector<16x32xi32>
    %12 = arith.addi %10, %11 : vector<16x32xi32>
    %13 = arith.cmpi eq, %1, %12 : vector<16x32xi32>
    %14 = arith.extui %13 : vector<16x32xi1> to vector<16x32xi32>
    %15 = arith.sitofp %14 : vector<16x32xi32> to vector<16x32xf32>
    %16 = tpu.iota {dimensions = array<i32: 0>} : vector<32x16xi32>
    %17 = tpu.iota {dimensions = array<i32: 1>} : vector<32x16xi32>
    %c2_i32_1 = arith.constant 2 : i32
    %18 = vector.broadcast %c2_i32_1 : i32 to vector<32x16xi32>
    %19 = arith.muli %17, %18 : vector<32x16xi32>
    %c0_i32_2 = arith.constant 0 : i32
    %20 = vector.broadcast %c0_i32_2 : i32 to vector<32x16xi32>
    %21 = arith.addi %19, %20 : vector<32x16xi32>
    %22 = arith.cmpi eq, %16, %21 : vector<32x16xi32>
    %23 = arith.extui %22 : vector<32x16xi1> to vector<32x16xi32>
    %24 = arith.sitofp %23 : vector<32x16xi32> to vector<32x16xf32>
    %c2_i32_3 = arith.constant 2 : i32
    %25 = vector.broadcast %c2_i32_3 : i32 to vector<32x16xi32>
    %26 = arith.muli %17, %25 : vector<32x16xi32>
    %c1_i32_4 = arith.constant 1 : i32
    %27 = vector.broadcast %c1_i32_4 : i32 to vector<32x16xi32>
    %28 = arith.addi %26, %27 : vector<32x16xi32>
    %29 = arith.cmpi eq, %16, %28 : vector<32x16xi32>
    %30 = arith.extui %29 : vector<32x16xi1> to vector<32x16xi32>
    %31 = arith.sitofp %30 : vector<32x16xi32> to vector<32x16xf32>
    %c0 = arith.constant 0 : index
    %c0_5 = arith.constant 0 : index
    %c0_6 = arith.constant 0 : index
    %c0_7 = arith.constant 0 : index
    %32 = vector.load %arg2[%c0, %c0_5, %c0_6, %c0_7] : memref<1x4x16x16xf32, #tpu.memory_space<vmem>>, vector<1x1x16x16xf32>
    %33 = vector.shape_cast %32 : vector<1x1x16x16xf32> to vector<1x16x16xf32>
    %34 = vector.shape_cast %33 : vector<1x16x16xf32> to vector<16x16xf32>
    %cst = arith.constant dense<0.000000e+00> : vector<16x32xf32>
    %35 = tpu.matmul %34, %8, %cst {dimension_numbers = #tpu.dot_dimension_numbers<[1], [0], [0], [1], [0, 0, 1, 1], [], []>, precision = #tpu.contract_precision<fp32>} : vector<16x16xf32>, vector<16x32xf32>, vector<16x32xf32> -> vector<16x32xf32>
    %c0_8 = arith.constant 0 : index
    %c1 = arith.constant 1 : index
    %c0_9 = arith.constant 0 : index
    %c0_10 = arith.constant 0 : index
    %36 = vector.load %arg2[%c0_8, %c1, %c0_9, %c0_10] : memref<1x4x16x16xf32, #tpu.memory_space<vmem>>, vector<1x1x16x16xf32>
    %37 = vector.shape_cast %36 : vector<1x1x16x16xf32> to vector<1x16x16xf32>
    %38 = vector.shape_cast %37 : vector<1x16x16xf32> to vector<16x16xf32>
    %cst_11 = arith.constant dense<0.000000e+00> : vector<16x32xf32>
    %39 = tpu.matmul %38, %15, %cst_11 {dimension_numbers = #tpu.dot_dimension_numbers<[1], [0], [0], [1], [0, 0, 1, 1], [], []>, precision = #tpu.contract_precision<fp32>} : vector<16x16xf32>, vector<16x32xf32>, vector<16x32xf32> -> vector<16x32xf32>
    %40 = arith.addf %35, %39 : vector<16x32xf32>
    %c0_12 = arith.constant 0 : index
    %c2 = arith.constant 2 : index
    %c0_13 = arith.constant 0 : index
    %c0_14 = arith.constant 0 : index
    %41 = vector.load %arg2[%c0_12, %c2, %c0_13, %c0_14] : memref<1x4x16x16xf32, #tpu.memory_space<vmem>>, vector<1x1x16x16xf32>
    %42 = vector.shape_cast %41 : vector<1x1x16x16xf32> to vector<1x16x16xf32>
    %43 = vector.shape_cast %42 : vector<1x16x16xf32> to vector<16x16xf32>
    %cst_15 = arith.constant dense<0.000000e+00> : vector<16x32xf32>
    %44 = tpu.matmul %43, %8, %cst_15 {dimension_numbers = #tpu.dot_dimension_numbers<[1], [0], [0], [1], [0, 0, 1, 1], [], []>, precision = #tpu.contract_precision<fp32>} : vector<16x16xf32>, vector<16x32xf32>, vector<16x32xf32> -> vector<16x32xf32>
    %c0_16 = arith.constant 0 : index
    %c3 = arith.constant 3 : index
    %c0_17 = arith.constant 0 : index
    %c0_18 = arith.constant 0 : index
    %45 = vector.load %arg2[%c0_16, %c3, %c0_17, %c0_18] : memref<1x4x16x16xf32, #tpu.memory_space<vmem>>, vector<1x1x16x16xf32>
    %46 = vector.shape_cast %45 : vector<1x1x16x16xf32> to vector<1x16x16xf32>
    %47 = vector.shape_cast %46 : vector<1x16x16xf32> to vector<16x16xf32>
    %cst_19 = arith.constant dense<0.000000e+00> : vector<16x32xf32>
    %48 = tpu.matmul %47, %15, %cst_19 {dimension_numbers = #tpu.dot_dimension_numbers<[1], [0], [0], [1], [0, 0, 1, 1], [], []>, precision = #tpu.contract_precision<fp32>} : vector<16x16xf32>, vector<16x32xf32>, vector<16x32xf32> -> vector<16x32xf32>
    %49 = arith.addf %44, %48 : vector<16x32xf32>
    %cst_20 = arith.constant dense<0.000000e+00> : vector<32x32xf32>
    %50 = tpu.matmul %24, %40, %cst_20 {dimension_numbers = #tpu.dot_dimension_numbers<[1], [0], [0], [1], [0, 0, 1, 1], [], []>, precision = #tpu.contract_precision<fp32>} : vector<32x16xf32>, vector<16x32xf32>, vector<32x32xf32> -> vector<32x32xf32>
    %cst_21 = arith.constant dense<0.000000e+00> : vector<32x32xf32>
    %51 = tpu.matmul %31, %49, %cst_21 {dimension_numbers = #tpu.dot_dimension_numbers<[1], [0], [0], [1], [0, 0, 1, 1], [], []>, precision = #tpu.contract_precision<fp32>} : vector<32x16xf32>, vector<16x32xf32>, vector<32x32xf32> -> vector<32x32xf32>
    %52 = arith.addf %50, %51 : vector<32x32xf32>
    %c0_22 = arith.constant 0 : index
    %c0_23 = arith.constant 0 : index
    %c0_24 = arith.constant 0 : index
    %c0_25 = arith.constant 0 : index
    %53 = vector.load %arg3[%c0_22, %c0_23, %c0_24, %c0_25] : memref<1x1x32x32xf32, #tpu.memory_space<vmem>>, vector<1x1x32x32xf32>
    %54 = vector.shape_cast %53 : vector<1x1x32x32xf32> to vector<32x32xf32>
    %55 = vector.shape_cast %52 : vector<32x32xf32> to vector<1x1x32x32xf32>
    tpu.vector_store %arg3[%c0_22, %c0_23, %c0_24, %c0_25], %55 {strides = array<i32>} : memref<1x1x32x32xf32, #tpu.memory_space<vmem>>, vector<1x1x32x32xf32>,
    return
  }
  func.func @transform_0(%arg0: i32, %arg1: i32) -> (i32, i32, i32, i32) {
    %c0_i32 = arith.constant 0 : i32
    %c0_i32_0 = arith.constant 0 : i32
    %c0_i32_1 = arith.constant 0 : i32
    return %arg0, %c0_i32, %arg1, %c0_i32_0 : i32, i32, i32, i32
  }
  func.func @transform_1(%arg0: i32, %arg1: i32) -> (i32, i32, i32, i32) {
    %c0_i32 = arith.constant 0 : i32
    %c0_i32_0 = arith.constant 0 : i32
    %c0_i32_1 = arith.constant 0 : i32
    return %arg0, %c0_i32, %arg1, %c0_i32_0 : i32, i32, i32, i32
  }
}

</mosaic_0001>

<llo_original>
// kernel: tpu_custom_call.1
$region0: #{tpu_custom_call.1}
  #allocation0 [shape = 'u32[]', space=smem, size = 0x4, offset = 0x4, fixed_abs, tag = 'smem constant byte address 0x4 - core index']
  #allocation1 [shape = 'u32[144,128]{1,0:T(1,128)}', space=vmem, size = 0x12000, scoped, tag = 'internal scratch']
  %s0 = inlined_call_operand.hbm [shape: f32[2,4,16,16], index: 0, kind: input, shape index: {}]
  %s1 = inlined_call_operand.hbm [shape: f32[2,1,32,32], index: 1, kind: output, shape index: {}]
  %s2 = sld [smem:[#allocation0]]
  $region41: #{tpu_custom_call.1} parent=0
    _
  %s4 = ssub.s32 1, %s2
  %s5 = scalar_select 0, %s4, %s2
  $region1: #{tpu_custom_call.1} parent=0
    #allocation2 [shape = 'u8[65536]{0}', space=vmem, size = 0x10000, scoped, tag = 'input window, operand 0']
    #allocation3 [shape = 's32[2]{0}', space=sflag, size = 0x8, scoped, tag = 'scoped memory for tpu_custom_call.1']
    #allocation4 [shape = 's32[2]{0}', space=sflag, size = 0x8, scoped, tag = 'scoped memory for tpu_custom_call.1']
    #allocation5 [shape = 'u8[32768]{0}', space=vmem, size = 0x8000, scoped, tag = 'output window, operand 0']
    %6 = vsyncpa [#allocation3], 0
    %s7 = scalar_lea.sflag [#allocation3], 1
    %8 = vsyncpa %s7, 0
    %9 = vsyncpa [#allocation4], 0
    %s10 = scalar_lea.sflag [#allocation4], 1
    %11 = vsyncpa %s10, 0
    loop: start=0, step=1, limit=4
    $region2: #{tpu_custom_call.1} parent=1 // loop_pre_header
      _
    $region3: #{tpu_custom_call.1} parent=1 // loop_header
      %s13 = sphi 0, %s17
      %p14 = scmp.ge.s32.totalorder %s13, 4
      %s20 = sphi 0, %s32
      %s21 = sphi 0, %s28
      %s22 = sphi 0, %s20
      %s23 = sphi 0, %s21
      %s24 = sphi 0, %s22
      %s25 = sphi 0, %s23
      %s37 = sphi 0, %s39
      %s40 = sphi 0, %s37
      %s41 = sphi 0, %s40
      %s57 = sphi 0, %s41
      %s65 = sphi 0, %s67
      %s68 = sphi 0, %s65
      %s69 = sphi 0, %s68
      %s85 = sphi 0, %s69
    $region4: #{tpu_custom_call.1} parent=1 // loop_header_branch
      %16 = sbr.rel (%p14) target = $region8
    $region5: #{tpu_custom_call.1} parent=1 // loop_body
      %s18 = ssub.s32 %s13, 1
      %s19 = ssub.s32 %s13, 2
      %s26 = sadd.s32 1, %s21
      %p27 = scmp.ge.s32.totalorder %s26, 1
      %s28 = scalar_select %p27, 0, %s26
      %s29 = sadd.s32 1, %s20
      %s30 = scalar_select %p27, %s29, %s20
      %p31 = scmp.ge.s32.totalorder %s30, 2
      %s32 = scalar_select %p31, 0, %s30
      %s33 = ssub.s32 %s20, %s32
      %s34 = ssub.s32 %s21, %s28
      %s35 = sor.u32 %s33, %s34
      %p36 = scmp.eq.s32.totalorder %s35, 0
      %s38 = sadd.s32 %s37, 1
      %s39 = scalar_select %p36, %s37, %s38
      %p42 = pneg %p36
      %p43 = scmp.eq.s32.totalorder %s13, 1
      %p44 = por %p42, %p43
      %p45 = scmp.ne.s32.totalorder %s37, %s40
      %p46 = scmp.eq.s32.totalorder %s13, 0
      %p47 = por %p45, %p46
      %p48 = scmp.ne.s32.totalorder %s37, %s40
      %p49 = scmp.eq.s32.totalorder %s18, 1
      %p50 = por %p48, %p49
      %p51 = scmp.ne.s32.totalorder %s40, %s41
      %p52 = scmp.eq.s32.totalorder %s18, 0
      %p53 = por %p51, %p52
      %p54 = scmp.ne.s32.totalorder %s40, %s41
      %p55 = scmp.eq.s32.totalorder %s19, 1
      %p56 = por %p54, %p55
      %p58 = scmp.ne.s32.totalorder %s41, %s57
      %p59 = scmp.eq.s32.totalorder %s19, 0
      %p60 = por %p58, %p59
      %s61 = ssub.s32 %s20, %s32
      %s62 = ssub.s32 %s21, %s28
      %s63 = sor.u32 %s61, %s62
      %p64 = scmp.eq.s32.totalorder %s63, 0
      %s66 = sadd.s32 %s65, 1
      %s67 = scalar_select %p64, %s65, %s66
      %p70 = pneg %p64
      %p71 = scmp.eq.s32.totalorder %s13, 1
      %p72 = por %p70, %p71
      %p73 = scmp.ne.s32.totalorder %s65, %s68
      %p74 = scmp.eq.s32.totalorder %s13, 0
      %p75 = por %p73, %p74
      %p76 = scmp.ne.s32.totalorder %s65, %s68
      %p77 = scmp.eq.s32.totalorder %s18, 1
      %p78 = por %p76, %p77
      %p79 = scmp.ne.s32.totalorder %s68, %s69
      %p80 = scmp.eq.s32.totalorder %s18, 0
      %p81 = por %p79, %p80
      %p82 = scmp.ne.s32.totalorder %s68, %s69
      %p83 = scmp.eq.s32.totalorder %s19, 1
      %p84 = por %p82, %p83
      %p86 = scmp.ne.s32.totalorder %s69, %s85
      %p87 = scmp.eq.s32.totalorder %s19, 0
      %p88 = por %p86, %p87
      %p89 = scmp.le.s32.totalorder 1, %s13
      %p90 = scmp.lt.s32.totalorder %s13, 3
      %p91 = pnand %p89, %p90
      %p92 = pneg %p91
      // Predicated region
      $region9: #{tpu_custom_call.1} parent=5 // pred_check
        _
      $region10: #{tpu_custom_call.1} parent=5 // pred_check_branch
        %94 = sbr.rel (%p91) target = $region12
      $region11: #{tpu_custom_call.1} parent=5 // pred_region
        %s95 = ssub.s32 %s13, 1
      $region12: #{tpu_custom_call.1} parent=5 // pred_fallthru
        _
      %p96 = scmp.lt.s32.totalorder %s13, 2
      // Predicated region
      $region13: #{tpu_custom_call.1} parent=5 // pred_check
        %p97 = pneg %p96
      $region14: #{tpu_custom_call.1} parent=5 // pred_check_branch
        %99 = sbr.rel (%p97) target = $region16
      $region15: #{tpu_custom_call.1} parent=5 // pred_region
        // Predicated region
        $region17: #{tpu_custom_call.1} parent=15 // pred_check
          %p100 = pneg %p47
        $region18: #{tpu_custom_call.1} parent=15 // pred_check_branch
          %102 = sbr.rel (%p100) target = $region20
        $region19: #{tpu_custom_call.1} parent=15 // pred_region
          %s103 = sand.u32 %s37, 1
          %s104 = scalar_lea.sflag [#allocation3], %s103
          %s105 = sand.u32 %s37, 1
          %s106 = smul.addr %s105, 64
          %s107 = scalar_lea.vmem [#allocation2], %s106
          %s108 = smul.u32 2, %s21
          %s110 = ssub.s32 1024, 1024
          %111 = vsyncadd %s104, %s110
          %s112 = smul.addr %s20, 8
          %s113 = sadd.s32 %s108, %s112
          %s114 = smul.addr %s113, 128
          %s115 = scalar_lea.hbm %s0, %s114
          %s116 = sshll.u32 %s107, 4
          %s117 = int_to_ptr.vmem [resolvable:$true] %s116
          %122 = dma.hbm_to_vmem [thread:$0]  %s115, 1024, %s117, %s104, 128, 128, 8
        $region20: #{tpu_custom_call.1} parent=15 // pred_fallthru
          _
      $region16: #{tpu_custom_call.1} parent=5 // pred_fallthru
        _
      %p123 = scmp.le.s32.totalorder 1, %s13
      %p124 = scmp.lt.s32.totalorder %s13, 3
      %p125 = pnand %p123, %p124
      %p126 = pneg %p125
      // Predicated region
      $region21: #{tpu_custom_call.1} parent=5 // pred_check
        _
      $region22: #{tpu_custom_call.1} parent=5 // pred_check_branch
        %128 = sbr.rel (%p125) target = $region24
      $region23: #{tpu_custom_call.1} parent=5 // pred_region
        %s129 = ssub.s32 %s13, 1
        %s130 = sand.u32 %s40, 1
        %s131 = scalar_lea.sflag [#allocation3], %s130
        %s132 = sand.u32 %s40, 1
        %s133 = smul.addr %s132, 64
        %s134 = scalar_lea.vmem [#allocation2], %s133
        // Predicated region
        $region25: #{tpu_custom_call.1} parent=23 // pred_check
          %p135 = pneg %p53
        $region26: #{tpu_custom_call.1} parent=23 // pred_check_branch
          %137 = sbr.rel (%p135) target = $region28
        $region27: #{tpu_custom_call.1} parent=23 // pred_region
          %138 = dma.done %s131, 1024
        $region28: #{tpu_custom_call.1} parent=23 // pred_fallthru
          _
        %s139 = sand.u32 %s40, 1
        %s140 = scalar_lea.sflag [#allocation3], %s139
        %s141 = sand.u32 %s40, 1
        %s142 = smul.addr %s141, 64
        %s143 = scalar_lea.vmem [#allocation2], %s142
        %p144 = pneg %p53
        %p145 = pneg %p50
        %p146 = pneg %p81
        %p147 = pneg %p78
        %s148 = sand.u32 %s68, 1
        %s149 = scalar_lea.sflag [#allocation4], %s148
        %s150 = sand.u32 %s68, 1
        %s151 = smul.addr %s150, 32
        %s152 = scalar_lea.vmem [#allocation5], %s151
        %s153 = smul.u32 2, %s23
        %s154 = smul.u32 4, %s23
        %v155 = vlaneseq
        %v156 = vshrl.u32 %v155, 7
        %v157 = vadd.s32 %v156, 8
        %v158 = vlaneseq
        %v159 = vand.u32 %v158, 127
        %v160 = vmul.u32 %v156, 2
        %v161 = vmul.u32 %v157, 2
        %vm162 = vcmp.eq.s32.totalorder %v159, %v160
        %vm163 = vcmp.eq.s32.totalorder %v159, %v161
        %v164 = vsel %vm162, 1, 0
        %v165 = vsel %vm163, 1, 0
        %v166 = vcvt.s32.f32 %v164
        %v167 = vcvt.s32.f32 %v165
        %v168 = vadd.s32 %v160, 1
        %v169 = vadd.s32 %v161, 1
        %vm170 = vcmp.eq.s32.totalorder %v159, %v168
        %vm171 = vcmp.eq.s32.totalorder %v159, %v169
        %v172 = vsel %vm170, 1, 0
        %v173 = vsel %vm171, 1, 0
        %v174 = vcvt.s32.f32 %v172
        %v175 = vcvt.s32.f32 %v173
        %v176 = vadd.s32 %v156, 16
        %v177 = vadd.s32 %v156, 24
        %v178 = vmul.u32 %v159, 2
        %vm179 = vcmp.eq.s32.totalorder %v156, %v178
        %vm180 = vcmp.eq.s32.totalorder %v157, %v178
        %vm181 = vcmp.eq.s32.totalorder %v176, %v178
        %vm182 = vcmp.eq.s32.totalorder %v177, %v178
        %v183 = vsel %vm179, 1, 0
        %v184 = vsel %vm180, 1, 0
        %v185 = vsel %vm181, 1, 0
        %v186 = vsel %vm182, 1, 0
        %v187 = vcvt.s32.f32 %v183
        %v188 = vcvt.s32.f32 %v184
        %v189 = vcvt.s32.f32 %v185
        %v190 = vcvt.s32.f32 %v186
        %v191 = vadd.s32 %v178, 1
        %vm192 = vcmp.eq.s32.totalorder %v156, %v191
        %vm193 = vcmp.eq.s32.totalorder %v157, %v191
        %vm194 = vcmp.eq.s32.totalorder %v176, %v191
        %vm195 = vcmp.eq.s32.totalorder %v177, %v191
        %v196 = vsel %vm192, 1, 0
        %v197 = vsel %vm193, 1, 0
        %v198 = vsel %vm194, 1, 0
        %v199 = vsel %vm195, 1, 0
        %v200 = vcvt.s32.f32 %v196
        %v201 = vcvt.s32.f32 %v197
        %v202 = vcvt.s32.f32 %v198
        %v203 = vcvt.s32.f32 %v199
        %v204 = vld [vmem:[%s134] sm:$0xff]
        %v205 = vld [vmem:[%s134 + $0x8] sm:$0xff]
        %s206 = scalar_lea.vmem %s134, 16 [#allocation2]
        %v207 = vld [vmem:[%s206] sm:$0xff]
        %v208 = vld [vmem:[%s206 + $0x8] sm:$0xff]
        %vm209 = vcmask 130048
        %v211 = vsel %vm209, %v207, 0
        %v214 = vsel %vm209, %v208, 0
        %216 = vmatprep.subr.mxu0 0.0
        %v217 = vand.u32 %v174, 4294901760
        %218 = vmatpush1.msra.mxu0 %v217
        %219 = vmatprep.subr.mxu0 0.0
        %v220 = vand.u32 %v175, 4294901760
        %221 = vmatpush1.msra.mxu0 %v220
        %222 = vmatprep.subr.mxu0 0.0
        %223 = vmatpush1.msra.mxu0 0.0
        %224 = vmatprep.subr.mxu0 0.0
        %225 = vmatpush1.msra.mxu0 0.0
        %226 = vmatprep.subr.mxu0 0.0
        %227 = vmatpush1.msra.mxu0 0.0
        %228 = vmatprep.subr.mxu0 0.0
        %229 = vmatpush1.msra.mxu0 0.0
        %230 = vmatprep.subr.mxu0 0.0
        %231 = vmatpush1.msra.mxu0 0.0
        %232 = vmatprep.subr.mxu0 0.0
        %233 = vmatpush1.msra.mxu0 0.0
        %234 = vmatprep.subr.mxu0 0.0
        %235 = vmatpush1.msra.mxu0 0.0
        %236 = vmatprep.subr.mxu0 0.0
        %237 = vmatpush1.msra.mxu0 0.0
        %238 = vmatprep.subr.mxu0 0.0
        %239 = vmatpush1.msra.mxu0 0.0
        %240 = vmatprep.subr.mxu0 0.0
        %241 = vmatpush1.msra.mxu0 0.0
        %242 = vmatprep.subr.mxu0 0.0
        %243 = vmatpush1.msra.mxu0 0.0
        %244 = vmatprep.subr.mxu0 0.0
        %245 = vmatpush1.msra.mxu0 0.0
        %246 = vmatprep.subr.mxu0 0.0
        %247 = vmatpush1.msra.mxu0 0.0
        %248 = vmatprep.subr.mxu0 0.0
        %249 = vmatpush1.msra.mxu0 0.0
        %250 = vmatprep.subr.mxu0 0.0
        %251 = vmatpush1.msra.mxu0 0.0
        %252 = vmatprep.subr.mxu0 0.0
        %253 = vmatpush1.msra.mxu0 0.0
        %254 = vmatprep.subr.mxu0 0.0
        %255 = vmatpush1.msra.mxu0 0.0
        %256 = vmatprep.subr.mxu0 0.0
        %257 = vmatpush1.msra.mxu0 0.0
        %258 = vmatprep.subr.mxu0 0.0
        %259 = vmatpush1.msra.mxu0 0.0
        %260 = vmatprep.subr.mxu0 0.0
        %261 = vmatpush1.msra.mxu0 0.0
        %262 = vmatprep.subr.mxu0 0.0
        %263 = vmatpush1.msra.mxu0 0.0
        %264 = vmatprep.subr.mxu0 0.0
        %265 = vmatpush1.msra.mxu0 0.0
        %266 = vmatprep.subr.mxu0 0.0
        %267 = vmatpush1.msra.mxu0 0.0
        %268 = vmatprep.subr.mxu0 0.0
        %269 = vmatpush1.msra.mxu0 0.0
        %270 = vmatprep.subr.mxu0 0.0
        %271 = vmatpush1.msra.mxu0 0.0
        %272 = vmatprep.subr.mxu0 0.0
        %273 = vmatpush1.msra.mxu0 0.0
        %274 = vmatprep.subr.mxu0 0.0
        %275 = vmatpush1.msra.mxu0 0.0
        %276 = vmatprep.subr.mxu0 0.0
        %277 = vmatpush1.msra.mxu0 0.0
        %278 = vmatprep.subr.mxu0 0.0
        %279 = vmatpush1.msra.mxu0 0.0
        %280 = vmatprep.subr.mxu0 0.0
        %281 = vmatpush1.msra.mxu0 0.0
        %282 = vmatprep.mubr.f32.mxu0 0.0
        %v283 = vand.u32 %v211, 4294901760
        %v284 = vsub.f32 %v211, %v283
        %v285 = vand.u32 %v284, 4294901760
        %v286 = vsub.f32 %v284, %v285
        %v287 = vand.u32 %v286, 4294901760
        %288 = vmatmul.mubr.f32.gmra.mrb[0].mxu0 %v287
        %v289 = vpop.f32.mrb[0].mxu0
        %v290 = vadd.f32 0.0, %v289
        %v291 = vpop.f32.mrb[0].mxu0
        %292 = vmatprep.mubr.f32.mxu0 0.0
        %v293 = vand.u32 %v214, 4294901760
        %v294 = vsub.f32 %v214, %v293
        %v295 = vand.u32 %v294, 4294901760
        %v296 = vsub.f32 %v294, %v295
        %v297 = vand.u32 %v296, 4294901760
        %298 = vmatmul.mubr.f32.gmra.mrb[0].mxu0 %v297
        %v299 = vpop.f32.mrb[0].mxu0
        %v300 = vadd.f32 0.0, %v299
        %v301 = vpop.f32.mrb[0].mxu0
        %302 = vdwg.mxu0
        %303 = vmatprep.subr.mxu0 0.0
        %v304 = vand.u32 %v174, 4294901760
        %v305 = vsub.f32 %v174, %v304
        %v306 = vand.u32 %v305, 4294901760
        %v307 = vsub.f32 %v305, %v306
        %v308 = vand.u32 %v307, 4294901760
        %309 = vmatpush1.msra.mxu0 %v308
        %310 = vmatprep.subr.mxu0 0.0
        %v311 = vand.u32 %v175, 4294901760
        %v312 = vsub.f32 %v175, %v311
        %v313 = vand.u32 %v312, 4294901760
        %v314 = vsub.f32 %v312, %v313
        %v315 = vand.u32 %v314, 4294901760
        %316 = vmatpush1.msra.mxu0 %v315
        %317 = vmatprep.subr.mxu0 0.0
        %318 = vmatpush1.msra.mxu0 0.0
        %319 = vmatprep.subr.mxu0 0.0
        %320 = vmatpush1.msra.mxu0 0.0
        %321 = vmatprep.subr.mxu0 0.0
        %322 = vmatpush1.msra.mxu0 0.0
        %323 = vmatprep.subr.mxu0 0.0
        %324 = vmatpush1.msra.mxu0 0.0
        %325 = vmatprep.subr.mxu0 0.0
        %326 = vmatpush1.msra.mxu0 0.0
        %327 = vmatprep.subr.mxu0 0.0
        %328 = vmatpush1.msra.mxu0 0.0
        %329 = vmatprep.subr.mxu0 0.0
        %330 = vmatpush1.msra.mxu0 0.0
        %331 = vmatprep.subr.mxu0 0.0
        %332 = vmatpush1.msra.mxu0 0.0
        %333 = vmatprep.subr.mxu0 0.0
        %334 = vmatpush1.msra.mxu0 0.0
        %335 = vmatprep.subr.mxu0 0.0
        %336 = vmatpush1.msra.mxu0 0.0
        %337 = vmatprep.subr.mxu0 0.0
        %338 = vmatpush1.msra.mxu0 0.0
        %339 = vmatprep.subr.mxu0 0.0
        %340 = vmatpush1.msra.mxu0 0.0
        %341 = vmatprep.subr.mxu0 0.0
        %342 = vmatpush1.msra.mxu0 0.0
        %343 = vmatprep.subr.mxu0 0.0
        %344 = vmatpush1.msra.mxu0 0.0
        %345 = vmatprep.subr.mxu0 0.0
        %346 = vmatpush1.msra.mxu0 0.0
        %347 = vmatprep.subr.mxu0 0.0
        %348 = vmatpush1.msra.mxu0 0.0
        %349 = vmatprep.subr.mxu0 0.0
        %350 = vmatpush1.msra.mxu0 0.0
        %351 = vmatprep.subr.mxu0 0.0
        %352 = vmatpush1.msra.mxu0 0.0
        %353 = vmatprep.subr.mxu0 0.0
        %354 = vmatpush1.msra.mxu0 0.0
        %355 = vmatprep.subr.mxu0 0.0
        %356 = vmatpush1.msra.mxu0 0.0
        %357 = vmatprep.subr.mxu0 0.0
        %358 = vmatpush1.msra.mxu0 0.0
        %359 = vmatprep.subr.mxu0 0.0
        %360 = vmatpush1.msra.mxu0 0.0
        %361 = vmatprep.subr.mxu0 0.0
        %362 = vmatpush1.msra.mxu0 0.0
        %363 = vmatprep.subr.mxu0 0.0
        %364 = vmatpush1.msra.mxu0 0.0
        %365 = vmatprep.subr.mxu0 0.0
        %366 = vmatpush1.msra.mxu0 0.0
        %367 = vmatprep.subr.mxu0 0.0
        %368 = vmatpush1.msra.mxu0 0.0
        %369 = vmatprep.subr.mxu0 0.0
        %370 = vmatpush1.msra.mxu0 0.0
        %371 = vmatprep.subr.mxu0 0.0
        %372 = vmatpush1.msra.mxu0 0.0
        %373 = vmatprep.subr.mxu0 0.0
        %374 = vmatpush1.msra.mxu0 0.0
        %375 = vmatprep.subr.mxu0 0.0
        %376 = vmatpush1.msra.mxu0 0.0
        %377 = vmatprep.mubr.f32.mxu0 0.0
        %v378 = vand.u32 %v211, 4294901760
        %379 = vmatmul.mubr.f32.gmra.mrb[0].mxu0 %v378
        %v380 = vpop.f32.mrb[0].mxu0
        %v381 = vadd.f32 %v290, %v380
        %v382 = vpop.f32.mrb[0].mxu0
        %383 = vmatprep.mubr.f32.mxu0 0.0
        %v384 = vand.u32 %v214, 4294901760
        %385 = vmatmul.mubr.f32.gmra.mrb[0].mxu0 %v384
        %v386 = vpop.f32.mrb[0].mxu0
        %v387 = vadd.f32 %v300, %v386
        %v388 = vpop.f32.mrb[0].mxu0
        %389 = vdwg.mxu0
        %390 = vmatprep.subr.mxu0 0.0
        %v391 = vand.u32 %v174, 4294901760
        %v392 = vsub.f32 %v174, %v391
        %393 = vmatpush1.msra.mxu0 %v392
        %394 = vmatprep.subr.mxu0 0.0
        %v395 = vand.u32 %v175, 4294901760
        %v396 = vsub.f32 %v175, %v395
        %397 = vmatpush1.msra.mxu0 %v396
        %398 = vmatprep.subr.mxu0 0.0
        %399 = vmatpush1.msra.mxu0 0.0
        %400 = vmatprep.subr.mxu0 0.0
        %401 = vmatpush1.msra.mxu0 0.0
        %402 = vmatprep.subr.mxu0 0.0
        %403 = vmatpush1.msra.mxu0 0.0
        %404 = vmatprep.subr.mxu0 0.0
        %405 = vmatpush1.msra.mxu0 0.0
        %406 = vmatprep.subr.mxu0 0.0
        %407 = vmatpush1.msra.mxu0 0.0
        %408 = vmatprep.subr.mxu0 0.0
        %409 = vmatpush1.msra.mxu0 0.0
        %410 = vmatprep.subr.mxu0 0.0
        %411 = vmatpush1.msra.mxu0 0.0
        %412 = vmatprep.subr.mxu0 0.0
        %413 = vmatpush1.msra.mxu0 0.0
        %414 = vmatprep.subr.mxu0 0.0
        %415 = vmatpush1.msra.mxu0 0.0
        %416 = vmatprep.subr.mxu0 0.0
        %417 = vmatpush1.msra.mxu0 0.0
        %418 = vmatprep.subr.mxu0 0.0
        %419 = vmatpush1.msra.mxu0 0.0
        %420 = vmatprep.subr.mxu0 0.0
        %421 = vmatpush1.msra.mxu0 0.0
        %422 = vmatprep.subr.mxu0 0.0
        %423 = vmatpush1.msra.mxu0 0.0
        %424 = vmatprep.subr.mxu0 0.0
        %425 = vmatpush1.msra.mxu0 0.0
        %426 = vmatprep.subr.mxu0 0.0
        %427 = vmatpush1.msra.mxu0 0.0
        %428 = vmatprep.subr.mxu0 0.0
        %429 = vmatpush1.msra.mxu0 0.0
        %430 = vmatprep.subr.mxu0 0.0
        %431 = vmatpush1.msra.mxu0 0.0
        %432 = vmatprep.subr.mxu0 0.0
        %433 = vmatpush1.msra.mxu0 0.0
        %434 = vmatprep.subr.mxu0 0.0
        %435 = vmatpush1.msra.mxu0 0.0
        %436 = vmatprep.subr.mxu0 0.0
        %437 = vmatpush1.msra.mxu0 0.0
        %438 = vmatprep.subr.mxu0 0.0
        %439 = vmatpush1.msra.mxu0 0.0
        %440 = vmatprep.subr.mxu0 0.0
        %441 = vmatpush1.msra.mxu0 0.0
        %442 = vmatprep.subr.mxu0 0.0
        %443 = vmatpush1.msra.mxu0 0.0
        %444 = vmatprep.subr.mxu0 0.0
        %445 = vmatpush1.msra.mxu0 0.0
        %446 = vmatprep.subr.mxu0 0.0
        %447 = vmatpush1.msra.mxu0 0.0
        %448 = vmatprep.subr.mxu0 0.0
        %449 = vmatpush1.msra.mxu0 0.0
        %450 = vmatprep.subr.mxu0 0.0
        %451 = vmatpush1.msra.mxu0 0.0
        %452 = vmatprep.subr.mxu0 0.0
        %453 = vmatpush1.msra.mxu0 0.0
        %454 = vmatprep.subr.mxu0 0.0
        %455 = vmatpush1.msra.mxu0 0.0
        %456 = vmatprep.subr.mxu0 0.0
        %457 = vmatpush1.msra.mxu0 0.0
        %458 = vmatprep.mubr.f32.mxu0 0.0
        %v459 = vand.u32 %v211, 4294901760
        %v460 = vsub.f32 %v211, %v459
        %461 = vmatmul.mubr.f32.gmra.mrb[0].mxu0 %v460
        %v462 = vpop.f32.mrb[0].mxu0
        %v463 = vadd.f32 %v381, %v462
        %v464 = vpop.f32.mrb[0].mxu0
        %465 = vmatprep.mubr.f32.mxu0 0.0
        %v466 = vand.u32 %v214, 4294901760
        %v467 = vsub.f32 %v214, %v466
        %468 = vmatmul.mubr.f32.gmra.mrb[0].mxu0 %v467
        %v469 = vpop.f32.mrb[0].mxu0
        %v470 = vadd.f32 %v387, %v469
        %v471 = vpop.f32.mrb[0].mxu0
        %472 = vdwg.mxu0
        %473 = vmatprep.subr.mxu0 0.0
        %v474 = vand.u32 %v174, 4294901760
        %475 = vmatpush1.msra.mxu0 %v474
        %476 = vmatprep.subr.mxu0 0.0
        %v477 = vand.u32 %v175, 4294901760
        %478 = vmatpush1.msra.mxu0 %v477
        %479 = vmatprep.subr.mxu0 0.0
        %480 = vmatpush1.msra.mxu0 0.0
        %481 = vmatprep.subr.mxu0 0.0
        %482 = vmatpush1.msra.mxu0 0.0
        %483 = vmatprep.subr.mxu0 0.0
        %484 = vmatpush1.msra.mxu0 0.0
        %485 = vmatprep.subr.mxu0 0.0
        %486 = vmatpush1.msra.mxu0 0.0
        %487 = vmatprep.subr.mxu0 0.0
        %488 = vmatpush1.msra.mxu0 0.0
        %489 = vmatprep.subr.mxu0 0.0
        %490 = vmatpush1.msra.mxu0 0.0
        %491 = vmatprep.subr.mxu0 0.0
        %492 = vmatpush1.msra.mxu0 0.0
        %493 = vmatprep.subr.mxu0 0.0
        %494 = vmatpush1.msra.mxu0 0.0
        %495 = vmatprep.subr.mxu0 0.0
        %496 = vmatpush1.msra.mxu0 0.0
        %497 = vmatprep.subr.mxu0 0.0
        %498 = vmatpush1.msra.mxu0 0.0
        %499 = vmatprep.subr.mxu0 0.0
        %500 = vmatpush1.msra.mxu0 0.0
        %501 = vmatprep.subr.mxu0 0.0
        %502 = vmatpush1.msra.mxu0 0.0
        %503 = vmatprep.subr.mxu0 0.0
        %504 = vmatpush1.msra.mxu0 0.0
        %505 = vmatprep.subr.mxu0 0.0
        %506 = vmatpush1.msra.mxu0 0.0
        %507 = vmatprep.subr.mxu0 0.0
        %508 = vmatpush1.msra.mxu0 0.0
        %509 = vmatprep.subr.mxu0 0.0
        %510 = vmatpush1.msra.mxu0 0.0
        %511 = vmatprep.subr.mxu0 0.0
        %512 = vmatpush1.msra.mxu0 0.0
        %513 = vmatprep.subr.mxu0 0.0
        %514 = vmatpush1.msra.mxu0 0.0
        %515 = vmatprep.subr.mxu0 0.0
        %516 = vmatpush1.msra.mxu0 0.0
        %517 = vmatprep.subr.mxu0 0.0
        %518 = vmatpush1.msra.mxu0 0.0
        %519 = vmatprep.subr.mxu0 0.0
        %520 = vmatpush1.msra.mxu0 0.0
        %521 = vmatprep.subr.mxu0 0.0
        %522 = vmatpush1.msra.mxu0 0.0
        %523 = vmatprep.subr.mxu0 0.0
        %524 = vmatpush1.msra.mxu0 0.0
        %525 = vmatprep.subr.mxu0 0.0
        %526 = vmatpush1.msra.mxu0 0.0
        %527 = vmatprep.subr.mxu0 0.0
        %528 = vmatpush1.msra.mxu0 0.0
        %529 = vmatprep.subr.mxu0 0.0
        %530 = vmatpush1.msra.mxu0 0.0
        %531 = vmatprep.subr.mxu0 0.0
        %532 = vmatpush1.msra.mxu0 0.0
        %533 = vmatprep.subr.mxu0 0.0
        %534 = vmatpush1.msra.mxu0 0.0
        %535 = vmatprep.subr.mxu0 0.0
        %536 = vmatpush1.msra.mxu0 0.0
        %537 = vmatprep.subr.mxu0 0.0
        %538 = vmatpush1.msra.mxu0 0.0
        %539 = vmatprep.mubr.f32.mxu0 0.0
        %v540 = vand.u32 %v211, 4294901760
        %v541 = vsub.f32 %v211, %v540
        %v542 = vand.u32 %v541, 4294901760
        %543 = vmatmul.mubr.f32.gmra.mrb[0].mxu0 %v542
        %v544 = vpop.f32.mrb[0].mxu0
        %v545 = vadd.f32 %v463, %v544
        %v546 = vpop.f32.mrb[0].mxu0
        %547 = vmatprep.mubr.f32.mxu0 0.0
        %v548 = vand.u32 %v214, 4294901760
        %v549 = vsub.f32 %v214, %v548
        %v550 = vand.u32 %v549, 4294901760
        %551 = vmatmul.mubr.f32.gmra.mrb[0].mxu0 %v550
        %v552 = vpop.f32.mrb[0].mxu0
        %v553 = vadd.f32 %v470, %v552
        %v554 = vpop.f32.mrb[0].mxu0
        %555 = vdwg.mxu0
        %556 = vmatprep.subr.mxu0 0.0
        %v557 = vand.u32 %v174, 4294901760
        %v558 = vsub.f32 %v174, %v557
        %v559 = vand.u32 %v558, 4294901760
        %560 = vmatpush1.msra.mxu0 %v559
        %561 = vmatprep.subr.mxu0 0.0
        %v562 = vand.u32 %v175, 4294901760
        %v563 = vsub.f32 %v175, %v562
        %v564 = vand.u32 %v563, 4294901760
        %565 = vmatpush1.msra.mxu0 %v564
        %566 = vmatprep.subr.mxu0 0.0
        %567 = vmatpush1.msra.mxu0 0.0
        %568 = vmatprep.subr.mxu0 0.0
        %569 = vmatpush1.msra.mxu0 0.0
        %570 = vmatprep.subr.mxu0 0.0
        %571 = vmatpush1.msra.mxu0 0.0
        %572 = vmatprep.subr.mxu0 0.0
        %573 = vmatpush1.msra.mxu0 0.0
        %574 = vmatprep.subr.mxu0 0.0
        %575 = vmatpush1.msra.mxu0 0.0
        %576 = vmatprep.subr.mxu0 0.0
        %577 = vmatpush1.msra.mxu0 0.0
        %578 = vmatprep.subr.mxu0 0.0
        %579 = vmatpush1.msra.mxu0 0.0
        %580 = vmatprep.subr.mxu0 0.0
        %581 = vmatpush1.msra.mxu0 0.0
        %582 = vmatprep.subr.mxu0 0.0
        %583 = vmatpush1.msra.mxu0 0.0
        %584 = vmatprep.subr.mxu0 0.0
        %585 = vmatpush1.msra.mxu0 0.0
        %586 = vmatprep.subr.mxu0 0.0
        %587 = vmatpush1.msra.mxu0 0.0
        %588 = vmatprep.subr.mxu0 0.0
        %589 = vmatpush1.msra.mxu0 0.0
        %590 = vmatprep.subr.mxu0 0.0
        %591 = vmatpush1.msra.mxu0 0.0
        %592 = vmatprep.subr.mxu0 0.0
        %593 = vmatpush1.msra.mxu0 0.0
        %594 = vmatprep.subr.mxu0 0.0
        %595 = vmatpush1.msra.mxu0 0.0
        %596 = vmatprep.subr.mxu0 0.0
        %597 = vmatpush1.msra.mxu0 0.0
        %598 = vmatprep.subr.mxu0 0.0
        %599 = vmatpush1.msra.mxu0 0.0
        %600 = vmatprep.subr.mxu0 0.0
        %601 = vmatpush1.msra.mxu0 0.0
        %602 = vmatprep.subr.mxu0 0.0
        %603 = vmatpush1.msra.mxu0 0.0
        %604 = vmatprep.subr.mxu0 0.0
        %605 = vmatpush1.msra.mxu0 0.0
        %606 = vmatprep.subr.mxu0 0.0
        %607 = vmatpush1.msra.mxu0 0.0
        %608 = vmatprep.subr.mxu0 0.0
        %609 = vmatpush1.msra.mxu0 0.0
        %610 = vmatprep.subr.mxu0 0.0
        %611 = vmatpush1.msra.mxu0 0.0
        %612 = vmatprep.subr.mxu0 0.0
        %613 = vmatpush1.msra.mxu0 0.0
        %614 = vmatprep.subr.mxu0 0.0
        %615 = vmatpush1.msra.mxu0 0.0
        %616 = vmatprep.subr.mxu0 0.0
        %617 = vmatpush1.msra.mxu0 0.0
        %618 = vmatprep.subr.mxu0 0.0
        %619 = vmatpush1.msra.mxu0 0.0
        %620 = vmatprep.subr.mxu0 0.0
        %621 = vmatpush1.msra.mxu0 0.0
        %622 = vmatprep.subr.mxu0 0.0
        %623 = vmatpush1.msra.mxu0 0.0
        %624 = vmatprep.subr.mxu0 0.0
        %625 = vmatpush1.msra.mxu0 0.0
        %626 = vmatprep.mubr.f32.mxu0 0.0
        %v627 = vand.u32 %v211, 4294901760
        %628 = vmatmul.mubr.f32.gmra.mrb[0].mxu0 %v627
        %v629 = vpop.f32.mrb[0].mxu0
        %v630 = vadd.f32 %v545, %v629
        %v631 = vpop.f32.mrb[0].mxu0
        %632 = vmatprep.mubr.f32.mxu0 0.0
        %v633 = vand.u32 %v214, 4294901760
        %634 = vmatmul.mubr.f32.gmra.mrb[0].mxu0 %v633
        %v635 = vpop.f32.mrb[0].mxu0
        %v636 = vadd.f32 %v553, %v635
        %v637 = vpop.f32.mrb[0].mxu0
        %638 = vdwg.mxu0
        %639 = vmatprep.subr.mxu0 0.0
        %v640 = vand.u32 %v174, 4294901760
        %641 = vmatpush1.msra.mxu0 %v640
        %642 = vmatprep.subr.mxu0 0.0
        %v643 = vand.u32 %v175, 4294901760
        %644 = vmatpush1.msra.mxu0 %v643
        %645 = vmatprep.subr.mxu0 0.0
        %646 = vmatpush1.msra.mxu0 0.0
        %647 = vmatprep.subr.mxu0 0.0
        %648 = vmatpush1.msra.mxu0 0.0
        %649 = vmatprep.subr.mxu0 0.0
        %650 = vmatpush1.msra.mxu0 0.0
        %651 = vmatprep.subr.mxu0 0.0
        %652 = vmatpush1.msra.mxu0 0.0
        %653 = vmatprep.subr.mxu0 0.0
        %654 = vmatpush1.msra.mxu0 0.0
        %655 = vmatprep.subr.mxu0 0.0
        %656 = vmatpush1.msra.mxu0 0.0
        %657 = vmatprep.subr.mxu0 0.0
        %658 = vmatpush1.msra.mxu0 0.0
        %659 = vmatprep.subr.mxu0 0.0
        %660 = vmatpush1.msra.mxu0 0.0
        %661 = vmatprep.subr.mxu0 0.0
        %662 = vmatpush1.msra.mxu0 0.0
        %663 = vmatprep.subr.mxu0 0.0
        %664 = vmatpush1.msra.mxu0 0.0
        %665 = vmatprep.subr.mxu0 0.0
        %666 = vmatpush1.msra.mxu0 0.0
        %667 = vmatprep.subr.mxu0 0.0
        %668 = vmatpush1.msra.mxu0 0.0
        %669 = vmatprep.subr.mxu0 0.0
        %670 = vmatpush1.msra.mxu0 0.0
        %671 = vmatprep.subr.mxu0 0.0
        %672 = vmatpush1.msra.mxu0 0.0
        %673 = vmatprep.subr.mxu0 0.0
        %674 = vmatpush1.msra.mxu0 0.0
        %675 = vmatprep.subr.mxu0 0.0
        %676 = vmatpush1.msra.mxu0 0.0
        %677 = vmatprep.subr.mxu0 0.0
        %678 = vmatpush1.msra.mxu0 0.0
        %679 = vmatprep.subr.mxu0 0.0
        %680 = vmatpush1.msra.mxu0 0.0
        %681 = vmatprep.subr.mxu0 0.0
        %682 = vmatpush1.msra.mxu0 0.0
        %683 = vmatprep.subr.mxu0 0.0
        %684 = vmatpush1.msra.mxu0 0.0
        %685 = vmatprep.subr.mxu0 0.0
        %686 = vmatpush1.msra.mxu0 0.0
        %687 = vmatprep.subr.mxu0 0.0
        %688 = vmatpush1.msra.mxu0 0.0
        %689 = vmatprep.subr.mxu0 0.0
        %690 = vmatpush1.msra.mxu0 0.0
        %691 = vmatprep.subr.mxu0 0.0
        %692 = vmatpush1.msra.mxu0 0.0
        %693 = vmatprep.subr.mxu0 0.0
        %694 = vmatpush1.msra.mxu0 0.0
        %695 = vmatprep.subr.mxu0 0.0
        %696 = vmatpush1.msra.mxu0 0.0
        %697 = vmatprep.subr.mxu0 0.0
        %698 = vmatpush1.msra.mxu0 0.0
        %699 = vmatprep.subr.mxu0 0.0
        %700 = vmatpush1.msra.mxu0 0.0
        %701 = vmatprep.subr.mxu0 0.0
        %702 = vmatpush1.msra.mxu0 0.0
        %703 = vmatprep.subr.mxu0 0.0
        %704 = vmatpush1.msra.mxu0 0.0
        %705 = vmatprep.mubr.f32.mxu0 0.0
        %v706 = vand.u32 %v211, 4294901760
        %707 = vmatmul.mubr.f32.gmra.mrb[0].mxu0 %v706
        %v708 = vpop.f32.mrb[0].mxu0
        %v709 = vadd.f32 %v630, %v708
        %v710 = vpop.f32.mrb[0].mxu0
        %711 = vmatprep.mubr.f32.mxu0 0.0
        %v712 = vand.u32 %v214, 4294901760
        %713 = vmatmul.mubr.f32.gmra.mrb[0].mxu0 %v712
        %v714 = vpop.f32.mrb[0].mxu0
        %v715 = vadd.f32 %v636, %v714
        %v716 = vpop.f32.mrb[0].mxu0
        %717 = vdwg.mxu0
        %v719 = vsel %vm209, %v204, 0
        %v722 = vsel %vm209, %v205, 0
        %724 = vmatprep.subr.mxu0 0.0
        %v725 = vand.u32 %v166, 4294901760
        %726 = vmatpush1.msra.mxu0 %v725
        %727 = vmatprep.subr.mxu0 0.0
        %v728 = vand.u32 %v167, 4294901760
        %729 = vmatpush1.msra.mxu0 %v728
        %730 = vmatprep.subr.mxu0 0.0
        %731 = vmatpush1.msra.mxu0 0.0
        %732 = vmatprep.subr.mxu0 0.0
        %733 = vmatpush1.msra.mxu0 0.0
        %734 = vmatprep.subr.mxu0 0.0
        %735 = vmatpush1.msra.mxu0 0.0
        %736 = vmatprep.subr.mxu0 0.0
        %737 = vmatpush1.msra.mxu0 0.0
        %738 = vmatprep.subr.mxu0 0.0
        %739 = vmatpush1.msra.mxu0 0.0
        %740 = vmatprep.subr.mxu0 0.0
        %741 = vmatpush1.msra.mxu0 0.0
        %742 = vmatprep.subr.mxu0 0.0
        %743 = vmatpush1.msra.mxu0 0.0
        %744 = vmatprep.subr.mxu0 0.0
        %745 = vmatpush1.msra.mxu0 0.0
        %746 = vmatprep.subr.mxu0 0.0
        %747 = vmatpush1.msra.mxu0 0.0
        %748 = vmatprep.subr.mxu0 0.0
        %749 = vmatpush1.msra.mxu0 0.0
        %750 = vmatprep.subr.mxu0 0.0
        %751 = vmatpush1.msra.mxu0 0.0
        %752 = vmatprep.subr.mxu0 0.0
        %753 = vmatpush1.msra.mxu0 0.0
        %754 = vmatprep.subr.mxu0 0.0
        %755 = vmatpush1.msra.mxu0 0.0
        %756 = vmatprep.subr.mxu0 0.0
        %757 = vmatpush1.msra.mxu0 0.0
        %758 = vmatprep.subr.mxu0 0.0
        %759 = vmatpush1.msra.mxu0 0.0
        %760 = vmatprep.subr.mxu0 0.0
        %761 = vmatpush1.msra.mxu0 0.0
        %762 = vmatprep.subr.mxu0 0.0
        %763 = vmatpush1.msra.mxu0 0.0
        %764 = vmatprep.subr.mxu0 0.0
        %765 = vmatpush1.msra.mxu0 0.0
        %766 = vmatprep.subr.mxu0 0.0
        %767 = vmatpush1.msra.mxu0 0.0
        %768 = vmatprep.subr.mxu0 0.0
        %769 = vmatpush1.msra.mxu0 0.0
        %770 = vmatprep.subr.mxu0 0.0
        %771 = vmatpush1.msra.mxu0 0.0
        %772 = vmatprep.subr.mxu0 0.0
        %773 = vmatpush1.msra.mxu0 0.0
        %774 = vmatprep.subr.mxu0 0.0
        %775 = vmatpush1.msra.mxu0 0.0
        %776 = vmatprep.subr.mxu0 0.0
        %777 = vmatpush1.msra.mxu0 0.0
        %778 = vmatprep.subr.mxu0 0.0
        %779 = vmatpush1.msra.mxu0 0.0
        %780 = vmatprep.subr.mxu0 0.0
        %781 = vmatpush1.msra.mxu0 0.0
        %782 = vmatprep.subr.mxu0 0.0
        %783 = vmatpush1.msra.mxu0 0.0
        %784 = vmatprep.subr.mxu0 0.0
        %785 = vmatpush1.msra.mxu0 0.0
        %786 = vmatprep.subr.mxu0 0.0
        %787 = vmatpush1.msra.mxu0 0.0
        %788 = vmatprep.subr.mxu0 0.0
        %789 = vmatpush1.msra.mxu0 0.0
        %790 = vmatprep.mubr.f32.mxu0 0.0
        %v791 = vand.u32 %v719, 4294901760
        %v792 = vsub.f32 %v719, %v791
        %v793 = vand.u32 %v792, 4294901760
        %v794 = vsub.f32 %v792, %v793
        %v795 = vand.u32 %v794, 4294901760
        %796 = vmatmul.mubr.f32.gmra.mrb[0].mxu0 %v795
        %v797 = vpop.f32.mrb[0].mxu0
        %v798 = vadd.f32 %v709, %v797
        %v799 = vpop.f32.mrb[0].mxu0
        %800 = vmatprep.mubr.f32.mxu0 0.0
        %v801 = vand.u32 %v722, 4294901760
        %v802 = vsub.f32 %v722, %v801
        %v803 = vand.u32 %v802, 4294901760
        %v804 = vsub.f32 %v802, %v803
        %v805 = vand.u32 %v804, 4294901760
        %806 = vmatmul.mubr.f32.gmra.mrb[0].mxu0 %v805
        %v807 = vpop.f32.mrb[0].mxu0
        %v808 = vadd.f32 %v715, %v807
        %v809 = vpop.f32.mrb[0].mxu0
        %810 = vdwg.mxu0
        %811 = vmatprep.subr.mxu0 0.0
        %v812 = vand.u32 %v166, 4294901760
        %v813 = vsub.f32 %v166, %v812
        %v814 = vand.u32 %v813, 4294901760
        %v815 = vsub.f32 %v813, %v814
        %v816 = vand.u32 %v815, 4294901760
        %817 = vmatpush1.msra.mxu0 %v816
        %818 = vmatprep.subr.mxu0 0.0
        %v819 = vand.u32 %v167, 4294901760
        %v820 = vsub.f32 %v167, %v819
        %v821 = vand.u32 %v820, 4294901760
        %v822 = vsub.f32 %v820, %v821
        %v823 = vand.u32 %v822, 4294901760
        %824 = vmatpush1.msra.mxu0 %v823
        %825 = vmatprep.subr.mxu0 0.0
        %826 = vmatpush1.msra.mxu0 0.0
        %827 = vmatprep.subr.mxu0 0.0
        %828 = vmatpush1.msra.mxu0 0.0
        %829 = vmatprep.subr.mxu0 0.0
        %830 = vmatpush1.msra.mxu0 0.0
        %831 = vmatprep.subr.mxu0 0.0
        %832 = vmatpush1.msra.mxu0 0.0
        %833 = vmatprep.subr.mxu0 0.0
        %834 = vmatpush1.msra.mxu0 0.0
        %835 = vmatprep.subr.mxu0 0.0
        %836 = vmatpush1.msra.mxu0 0.0
        %837 = vmatprep.subr.mxu0 0.0
        %838 = vmatpush1.msra.mxu0 0.0
        %839 = vmatprep.subr.mxu0 0.0
        %840 = vmatpush1.msra.mxu0 0.0
        %841 = vmatprep.subr.mxu0 0.0
        %842 = vmatpush1.msra.mxu0 0.0
        %843 = vmatprep.subr.mxu0 0.0
        %844 = vmatpush1.msra.mxu0 0.0
        %845 = vmatprep.subr.mxu0 0.0
        %846 = vmatpush1.msra.mxu0 0.0
        %847 = vmatprep.subr.mxu0 0.0
        %848 = vmatpush1.msra.mxu0 0.0
        %849 = vmatprep.subr.mxu0 0.0
        %850 = vmatpush1.msra.mxu0 0.0
        %851 = vmatprep.subr.mxu0 0.0
        %852 = vmatpush1.msra.mxu0 0.0
        %853 = vmatprep.subr.mxu0 0.0
        %854 = vmatpush1.msra.mxu0 0.0
        %855 = vmatprep.subr.mxu0 0.0
        %856 = vmatpush1.msra.mxu0 0.0
        %857 = vmatprep.subr.mxu0 0.0
        %858 = vmatpush1.msra.mxu0 0.0
        %859 = vmatprep.subr.mxu0 0.0
        %860 = vmatpush1.msra.mxu0 0.0
        %861 = vmatprep.subr.mxu0 0.0
        %862 = vmatpush1.msra.mxu0 0.0
        %863 = vmatprep.subr.mxu0 0.0
        %864 = vmatpush1.msra.mxu0 0.0
        %865 = vmatprep.subr.mxu0 0.0
        %866 = vmatpush1.msra.mxu0 0.0
        %867 = vmatprep.subr.mxu0 0.0
        %868 = vmatpush1.msra.mxu0 0.0
        %869 = vmatprep.subr.mxu0 0.0
        %870 = vmatpush1.msra.mxu0 0.0
        %871 = vmatprep.subr.mxu0 0.0
        %872 = vmatpush1.msra.mxu0 0.0
        %873 = vmatprep.subr.mxu0 0.0
        %874 = vmatpush1.msra.mxu0 0.0
        %875 = vmatprep.subr.mxu0 0.0
        %876 = vmatpush1.msra.mxu0 0.0
        %877 = vmatprep.subr.mxu0 0.0
        %878 = vmatpush1.msra.mxu0 0.0
        %879 = vmatprep.subr.mxu0 0.0
        %880 = vmatpush1.msra.mxu0 0.0
        %881 = vmatprep.subr.mxu0 0.0
        %882 = vmatpush1.msra.mxu0 0.0
        %883 = vmatprep.subr.mxu0 0.0
        %884 = vmatpush1.msra.mxu0 0.0
        %885 = vmatprep.mubr.f32.mxu0 0.0
        %v886 = vand.u32 %v719, 4294901760
        %887 = vmatmul.mubr.f32.gmra.mrb[0].mxu0 %v886
        %v888 = vpop.f32.mrb[0].mxu0
        %v889 = vadd.f32 %v798, %v888
        %v890 = vpop.f32.mrb[0].mxu0
        %891 = vmatprep.mubr.f32.mxu0 0.0
        %v892 = vand.u32 %v722, 4294901760
        %893 = vmatmul.mubr.f32.gmra.mrb[0].mxu0 %v892
        %v894 = vpop.f32.mrb[0].mxu0
        %v895 = vadd.f32 %v808, %v894
        %v896 = vpop.f32.mrb[0].mxu0
        %897 = vdwg.mxu0
        %898 = vmatprep.subr.mxu0 0.0
        %v899 = vand.u32 %v166, 4294901760
        %v900 = vsub.f32 %v166, %v899
        %901 = vmatpush1.msra.mxu0 %v900
        %902 = vmatprep.subr.mxu0 0.0
        %v903 = vand.u32 %v167, 4294901760
        %v904 = vsub.f32 %v167, %v903
        %905 = vmatpush1.msra.mxu0 %v904
        %906 = vmatprep.subr.mxu0 0.0
        %907 = vmatpush1.msra.mxu0 0.0
        %908 = vmatprep.subr.mxu0 0.0
        %909 = vmatpush1.msra.mxu0 0.0
        %910 = vmatprep.subr.mxu0 0.0
        %911 = vmatpush1.msra.mxu0 0.0
        %912 = vmatprep.subr.mxu0 0.0
        %913 = vmatpush1.msra.mxu0 0.0
        %914 = vmatprep.subr.mxu0 0.0
        %915 = vmatpush1.msra.mxu0 0.0
        %916 = vmatprep.subr.mxu0 0.0
        %917 = vmatpush1.msra.mxu0 0.0
        %918 = vmatprep.subr.mxu0 0.0
        %919 = vmatpush1.msra.mxu0 0.0
        %920 = vmatprep.subr.mxu0 0.0
        %921 = vmatpush1.msra.mxu0 0.0
        %922 = vmatprep.subr.mxu0 0.0
        %923 = vmatpush1.msra.mxu0 0.0
        %924 = vmatprep.subr.mxu0 0.0
        %925 = vmatpush1.msra.mxu0 0.0
        %926 = vmatprep.subr.mxu0 0.0
        %927 = vmatpush1.msra.mxu0 0.0
        %928 = vmatprep.subr.mxu0 0.0
        %929 = vmatpush1.msra.mxu0 0.0
        %930 = vmatprep.subr.mxu0 0.0
        %931 = vmatpush1.msra.mxu0 0.0
        %932 = vmatprep.subr.mxu0 0.0
        %933 = vmatpush1.msra.mxu0 0.0
        %934 = vmatprep.subr.mxu0 0.0
        %935 = vmatpush1.msra.mxu0 0.0
        %936 = vmatprep.subr.mxu0 0.0
        %937 = vmatpush1.msra.mxu0 0.0
        %938 = vmatprep.subr.mxu0 0.0
        %939 = vmatpush1.msra.mxu0 0.0
        %940 = vmatprep.subr.mxu0 0.0
        %941 = vmatpush1.msra.mxu0 0.0
        %942 = vmatprep.subr.mxu0 0.0
        %943 = vmatpush1.msra.mxu0 0.0
        %944 = vmatprep.subr.mxu0 0.0
        %945 = vmatpush1.msra.mxu0 0.0
        %946 = vmatprep.subr.mxu0 0.0
        %947 = vmatpush1.msra.mxu0 0.0
        %948 = vmatprep.subr.mxu0 0.0
        %949 = vmatpush1.msra.mxu0 0.0
        %950 = vmatprep.subr.mxu0 0.0
        %951 = vmatpush1.msra.mxu0 0.0
        %952 = vmatprep.subr.mxu0 0.0
        %953 = vmatpush1.msra.mxu0 0.0
        %954 = vmatprep.subr.mxu0 0.0
        %955 = vmatpush1.msra.mxu0 0.0
        %956 = vmatprep.subr.mxu0 0.0
        %957 = vmatpush1.msra.mxu0 0.0
        %958 = vmatprep.subr.mxu0 0.0
        %959 = vmatpush1.msra.mxu0 0.0
        %960 = vmatprep.subr.mxu0 0.0
        %961 = vmatpush1.msra.mxu0 0.0
        %962 = vmatprep.subr.mxu0 0.0
        %963 = vmatpush1.msra.mxu0 0.0
        %964 = vmatprep.subr.mxu0 0.0
        %965 = vmatpush1.msra.mxu0 0.0
        %966 = vmatprep.mubr.f32.mxu0 0.0
        %v967 = vand.u32 %v719, 4294901760
        %v968 = vsub.f32 %v719, %v967
        %969 = vmatmul.mubr.f32.gmra.mrb[0].mxu0 %v968
        %v970 = vpop.f32.mrb[0].mxu0
        %v971 = vadd.f32 %v889, %v970
        %v972 = vpop.f32.mrb[0].mxu0
        %973 = vmatprep.mubr.f32.mxu0 0.0
        %v974 = vand.u32 %v722, 4294901760
        %v975 = vsub.f32 %v722, %v974
        %976 = vmatmul.mubr.f32.gmra.mrb[0].mxu0 %v975
        %v977 = vpop.f32.mrb[0].mxu0
        %v978 = vadd.f32 %v895, %v977
        %v979 = vpop.f32.mrb[0].mxu0
        %980 = vdwg.mxu0
        %981 = vmatprep.subr.mxu0 0.0
        %v982 = vand.u32 %v166, 4294901760
        %983 = vmatpush1.msra.mxu0 %v982
        %984 = vmatprep.subr.mxu0 0.0
        %v985 = vand.u32 %v167, 4294901760
        %986 = vmatpush1.msra.mxu0 %v985
        %987 = vmatprep.subr.mxu0 0.0
        %988 = vmatpush1.msra.mxu0 0.0
        %989 = vmatprep.subr.mxu0 0.0
        %990 = vmatpush1.msra.mxu0 0.0
        %991 = vmatprep.subr.mxu0 0.0
        %992 = vmatpush1.msra.mxu0 0.0
        %993 = vmatprep.subr.mxu0 0.0
        %994 = vmatpush1.msra.mxu0 0.0
        %995 = vmatprep.subr.mxu0 0.0
        %996 = vmatpush1.msra.mxu0 0.0
        %997 = vmatprep.subr.mxu0 0.0
        %998 = vmatpush1.msra.mxu0 0.0
        %999 = vmatprep.subr.mxu0 0.0
        %1000 = vmatpush1.msra.mxu0 0.0
        %1001 = vmatprep.subr.mxu0 0.0
        %1002 = vmatpush1.msra.mxu0 0.0
        %1003 = vmatprep.subr.mxu0 0.0
        %1004 = vmatpush1.msra.mxu0 0.0
        %1005 = vmatprep.subr.mxu0 0.0
        %1006 = vmatpush1.msra.mxu0 0.0
        %1007 = vmatprep.subr.mxu0 0.0
        %1008 = vmatpush1.msra.mxu0 0.0
        %1009 = vmatprep.subr.mxu0 0.0
        %1010 = vmatpush1.msra.mxu0 0.0
        %1011 = vmatprep.subr.mxu0 0.0
        %1012 = vmatpush1.msra.mxu0 0.0
        %1013 = vmatprep.subr.mxu0 0.0
        %1014 = vmatpush1.msra.mxu0 0.0
        %1015 = vmatprep.subr.mxu0 0.0
        %1016 = vmatpush1.msra.mxu0 0.0
        %1017 = vmatprep.subr.mxu0 0.0
        %1018 = vmatpush1.msra.mxu0 0.0
        %1019 = vmatprep.subr.mxu0 0.0
        %1020 = vmatpush1.msra.mxu0 0.0
        %1021 = vmatprep.subr.mxu0 0.0
        %1022 = vmatpush1.msra.mxu0 0.0
        %1023 = vmatprep.subr.mxu0 0.0
        %1024 = vmatpush1.msra.mxu0 0.0
        %1025 = vmatprep.subr.mxu0 0.0
        %1026 = vmatpush1.msra.mxu0 0.0
        %1027 = vmatprep.subr.mxu0 0.0
        %1028 = vmatpush1.msra.mxu0 0.0
        %1029 = vmatprep.subr.mxu0 0.0
        %1030 = vmatpush1.msra.mxu0 0.0
        %1031 = vmatprep.subr.mxu0 0.0
        %1032 = vmatpush1.msra.mxu0 0.0
        %1033 = vmatprep.subr.mxu0 0.0
        %1034 = vmatpush1.msra.mxu0 0.0
        %1035 = vmatprep.subr.mxu0 0.0
        %1036 = vmatpush1.msra.mxu0 0.0
        %1037 = vmatprep.subr.mxu0 0.0
        %1038 = vmatpush1.msra.mxu0 0.0
        %1039 = vmatprep.subr.mxu0 0.0
        %1040 = vmatpush1.msra.mxu0 0.0
        %1041 = vmatprep.subr.mxu0 0.0
        %1042 = vmatpush1.msra.mxu0 0.0
        %1043 = vmatprep.subr.mxu0 0.0
        %1044 = vmatpush1.msra.mxu0 0.0
        %1045 = vmatprep.subr.mxu0 0.0
        %1046 = vmatpush1.msra.mxu0 0.0
        %1047 = vmatprep.mubr.f32.mxu0 0.0
        %v1048 = vand.u32 %v719, 4294901760
        %v1049 = vsub.f32 %v719, %v1048
        %v1050 = vand.u32 %v1049, 4294901760
        %1051 = vmatmul.mubr.f32.gmra.mrb[0].mxu0 %v1050
        %v1052 = vpop.f32.mrb[0].mxu0
        %v1053 = vadd.f32 %v971, %v1052
        %v1054 = vpop.f32.mrb[0].mxu0
        %1055 = vmatprep.mubr.f32.mxu0 0.0
        %v1056 = vand.u32 %v722, 4294901760
        %v1057 = vsub.f32 %v722, %v1056
        %v1058 = vand.u32 %v1057, 4294901760
        %1059 = vmatmul.mubr.f32.gmra.mrb[0].mxu0 %v1058
        %v1060 = vpop.f32.mrb[0].mxu0
        %v1061 = vadd.f32 %v978, %v1060
        %v1062 = vpop.f32.mrb[0].mxu0
        %1063 = vdwg.mxu0
        %1064 = vmatprep.subr.mxu0 0.0
        %v1065 = vand.u32 %v166, 4294901760
        %v1066 = vsub.f32 %v166, %v1065
        %v1067 = vand.u32 %v1066, 4294901760
        %1068 = vmatpush1.msra.mxu0 %v1067
        %1069 = vmatprep.subr.mxu0 0.0
        %v1070 = vand.u32 %v167, 4294901760
        %v1071 = vsub.f32 %v167, %v1070
        %v1072 = vand.u32 %v1071, 4294901760
        %1073 = vmatpush1.msra.mxu0 %v1072
        %1074 = vmatprep.subr.mxu0 0.0
        %1075 = vmatpush1.msra.mxu0 0.0
        %1076 = vmatprep.subr.mxu0 0.0
        %1077 = vmatpush1.msra.mxu0 0.0
        %1078 = vmatprep.subr.mxu0 0.0
        %1079 = vmatpush1.msra.mxu0 0.0
        %1080 = vmatprep.subr.mxu0 0.0
        %1081 = vmatpush1.msra.mxu0 0.0
        %1082 = vmatprep.subr.mxu0 0.0
        %1083 = vmatpush1.msra.mxu0 0.0
        %1084 = vmatprep.subr.mxu0 0.0
        %1085 = vmatpush1.msra.mxu0 0.0
        %1086 = vmatprep.subr.mxu0 0.0
        %1087 = vmatpush1.msra.mxu0 0.0
        %1088 = vmatprep.subr.mxu0 0.0
        %1089 = vmatpush1.msra.mxu0 0.0
        %1090 = vmatprep.subr.mxu0 0.0
        %1091 = vmatpush1.msra.mxu0 0.0
        %1092 = vmatprep.subr.mxu0 0.0
        %1093 = vmatpush1.msra.mxu0 0.0
        %1094 = vmatprep.subr.mxu0 0.0
        %1095 = vmatpush1.msra.mxu0 0.0
        %1096 = vmatprep.subr.mxu0 0.0
        %1097 = vmatpush1.msra.mxu0 0.0
        %1098 = vmatprep.subr.mxu0 0.0
        %1099 = vmatpush1.msra.mxu0 0.0
        %1100 = vmatprep.subr.mxu0 0.0
        %1101 = vmatpush1.msra.mxu0 0.0
        %1102 = vmatprep.subr.mxu0 0.0
        %1103 = vmatpush1.msra.mxu0 0.0
        %1104 = vmatprep.subr.mxu0 0.0
        %1105 = vmatpush1.msra.mxu0 0.0
        %1106 = vmatprep.subr.mxu0 0.0
        %1107 = vmatpush1.msra.mxu0 0.0
        %1108 = vmatprep.subr.mxu0 0.0
        %1109 = vmatpush1.msra.mxu0 0.0
        %1110 = vmatprep.subr.mxu0 0.0
        %1111 = vmatpush1.msra.mxu0 0.0
        %1112 = vmatprep.subr.mxu0 0.0
        %1113 = vmatpush1.msra.mxu0 0.0
        %1114 = vmatprep.subr.mxu0 0.0
        %1115 = vmatpush1.msra.mxu0 0.0
        %1116 = vmatprep.subr.mxu0 0.0
        %1117 = vmatpush1.msra.mxu0 0.0
        %1118 = vmatprep.subr.mxu0 0.0
        %1119 = vmatpush1.msra.mxu0 0.0
        %1120 = vmatprep.subr.mxu0 0.0
        %1121 = vmatpush1.msra.mxu0 0.0
        %1122 = vmatprep.subr.mxu0 0.0
        %1123 = vmatpush1.msra.mxu0 0.0
        %1124 = vmatprep.subr.mxu0 0.0
        %1125 = vmatpush1.msra.mxu0 0.0
        %1126 = vmatprep.subr.mxu0 0.0
        %1127 = vmatpush1.msra.mxu0 0.0
        %1128 = vmatprep.subr.mxu0 0.0
        %1129 = vmatpush1.msra.mxu0 0.0
        %1130 = vmatprep.subr.mxu0 0.0
        %1131 = vmatpush1.msra.mxu0 0.0
        %1132 = vmatprep.subr.mxu0 0.0
        %1133 = vmatpush1.msra.mxu0 0.0
        %1134 = vmatprep.mubr.f32.mxu0 0.0
        %v1135 = vand.u32 %v719, 4294901760
        %1136 = vmatmul.mubr.f32.gmra.mrb[0].mxu0 %v1135
        %v1137 = vpop.f32.mrb[0].mxu0
        %v1138 = vadd.f32 %v1053, %v1137
        %v1139 = vpop.f32.mrb[0].mxu0
        %1140 = vmatprep.mubr.f32.mxu0 0.0
        %v1141 = vand.u32 %v722, 4294901760
        %1142 = vmatmul.mubr.f32.gmra.mrb[0].mxu0 %v1141
        %v1143 = vpop.f32.mrb[0].mxu0
        %v1144 = vadd.f32 %v1061, %v1143
        %v1145 = vpop.f32.mrb[0].mxu0
        %1146 = vdwg.mxu0
        %1147 = vmatprep.subr.mxu0 0.0
        %v1148 = vand.u32 %v166, 4294901760
        %1149 = vmatpush1.msra.mxu0 %v1148
        %1150 = vmatprep.subr.mxu0 0.0
        %v1151 = vand.u32 %v167, 4294901760
        %1152 = vmatpush1.msra.mxu0 %v1151
        %1153 = vmatprep.subr.mxu0 0.0
        %1154 = vmatpush1.msra.mxu0 0.0
        %1155 = vmatprep.subr.mxu0 0.0
        %1156 = vmatpush1.msra.mxu0 0.0
        %1157 = vmatprep.subr.mxu0 0.0
        %1158 = vmatpush1.msra.mxu0 0.0
        %1159 = vmatprep.subr.mxu0 0.0
        %1160 = vmatpush1.msra.mxu0 0.0
        %1161 = vmatprep.subr.mxu0 0.0
        %1162 = vmatpush1.msra.mxu0 0.0
        %1163 = vmatprep.subr.mxu0 0.0
        %1164 = vmatpush1.msra.mxu0 0.0
        %1165 = vmatprep.subr.mxu0 0.0
        %1166 = vmatpush1.msra.mxu0 0.0
        %1167 = vmatprep.subr.mxu0 0.0
        %1168 = vmatpush1.msra.mxu0 0.0
        %1169 = vmatprep.subr.mxu0 0.0
        %1170 = vmatpush1.msra.mxu0 0.0
        %1171 = vmatprep.subr.mxu0 0.0
        %1172 = vmatpush1.msra.mxu0 0.0
        %1173 = vmatprep.subr.mxu0 0.0
        %1174 = vmatpush1.msra.mxu0 0.0
        %1175 = vmatprep.subr.mxu0 0.0
        %1176 = vmatpush1.msra.mxu0 0.0
        %1177 = vmatprep.subr.mxu0 0.0
        %1178 = vmatpush1.msra.mxu0 0.0
        %1179 = vmatprep.subr.mxu0 0.0
        %1180 = vmatpush1.msra.mxu0 0.0
        %1181 = vmatprep.subr.mxu0 0.0
        %1182 = vmatpush1.msra.mxu0 0.0
        %1183 = vmatprep.subr.mxu0 0.0
        %1184 = vmatpush1.msra.mxu0 0.0
        %1185 = vmatprep.subr.mxu0 0.0
        %1186 = vmatpush1.msra.mxu0 0.0
        %1187 = vmatprep.subr.mxu0 0.0
        %1188 = vmatpush1.msra.mxu0 0.0
        %1189 = vmatprep.subr.mxu0 0.0
        %1190 = vmatpush1.msra.mxu0 0.0
        %1191 = vmatprep.subr.mxu0 0.0
        %1192 = vmatpush1.msra.mxu0 0.0
        %1193 = vmatprep.subr.mxu0 0.0
        %1194 = vmatpush1.msra.mxu0 0.0
        %1195 = vmatprep.subr.mxu0 0.0
        %1196 = vmatpush1.msra.mxu0 0.0
        %1197 = vmatprep.subr.mxu0 0.0
        %1198 = vmatpush1.msra.mxu0 0.0
        %1199 = vmatprep.subr.mxu0 0.0
        %1200 = vmatpush1.msra.mxu0 0.0
        %1201 = vmatprep.subr.mxu0 0.0
        %1202 = vmatpush1.msra.mxu0 0.0
        %1203 = vmatprep.subr.mxu0 0.0
        %1204 = vmatpush1.msra.mxu0 0.0
        %1205 = vmatprep.subr.mxu0 0.0
        %1206 = vmatpush1.msra.mxu0 0.0
        %1207 = vmatprep.subr.mxu0 0.0
        %1208 = vmatpush1.msra.mxu0 0.0
        %1209 = vmatprep.subr.mxu0 0.0
        %1210 = vmatpush1.msra.mxu0 0.0
        %1211 = vmatprep.subr.mxu0 0.0
        %1212 = vmatpush1.msra.mxu0 0.0
        %1213 = vmatprep.mubr.f32.mxu0 0.0
        %v1214 = vand.u32 %v719, 4294901760
        %1215 = vmatmul.mubr.f32.gmra.mrb[0].mxu0 %v1214
        %v1216 = vpop.f32.mrb[0].mxu0
        %v1217 = vadd.f32 %v1138, %v1216
        %v1218 = vpop.f32.mrb[0].mxu0
        %1219 = vmatprep.mubr.f32.mxu0 0.0
        %v1220 = vand.u32 %v722, 4294901760
        %1221 = vmatmul.mubr.f32.gmra.mrb[0].mxu0 %v1220
        %v1222 = vpop.f32.mrb[0].mxu0
        %v1223 = vadd.f32 %v1144, %v1222
        %v1224 = vpop.f32.mrb[0].mxu0
        %1225 = vdwg.mxu0
        %s1226 = scalar_lea.vmem %s134, 32 [#allocation2]
        %v1227 = vld [vmem:[%s1226] sm:$0xff]
        %v1228 = vld [vmem:[%s1226 + $0x8] sm:$0xff]
        %s1229 = scalar_lea.vmem %s134, 48 [#allocation2]
        %v1230 = vld [vmem:[%s1229] sm:$0xff]
        %v1231 = vld [vmem:[%s1229 + $0x8] sm:$0xff]
        %v1233 = vsel %vm209, %v1230, 0
        %v1236 = vsel %vm209, %v1231, 0
        %1238 = vmatprep.subr.mxu0 0.0
        %v1239 = vand.u32 %v174, 4294901760
        %1240 = vmatpush1.msra.mxu0 %v1239
        %1241 = vmatprep.subr.mxu0 0.0
        %v1242 = vand.u32 %v175, 4294901760
        %1243 = vmatpush1.msra.mxu0 %v1242
        %1244 = vmatprep.subr.mxu0 0.0
        %1245 = vmatpush1.msra.mxu0 0.0
        %1246 = vmatprep.subr.mxu0 0.0
        %1247 = vmatpush1.msra.mxu0 0.0
        %1248 = vmatprep.subr.mxu0 0.0
        %1249 = vmatpush1.msra.mxu0 0.0
        %1250 = vmatprep.subr.mxu0 0.0
        %1251 = vmatpush1.msra.mxu0 0.0
        %1252 = vmatprep.subr.mxu0 0.0
        %1253 = vmatpush1.msra.mxu0 0.0
        %1254 = vmatprep.subr.mxu0 0.0
        %1255 = vmatpush1.msra.mxu0 0.0
        %1256 = vmatprep.subr.mxu0 0.0
        %1257 = vmatpush1.msra.mxu0 0.0
        %1258 = vmatprep.subr.mxu0 0.0
        %1259 = vmatpush1.msra.mxu0 0.0
        %1260 = vmatprep.subr.mxu0 0.0
        %1261 = vmatpush1.msra.mxu0 0.0
        %1262 = vmatprep.subr.mxu0 0.0
        %1263 = vmatpush1.msra.mxu0 0.0
        %1264 = vmatprep.subr.mxu0 0.0
        %1265 = vmatpush1.msra.mxu0 0.0
        %1266 = vmatprep.subr.mxu0 0.0
        %1267 = vmatpush1.msra.mxu0 0.0
        %1268 = vmatprep.subr.mxu0 0.0
        %1269 = vmatpush1.msra.mxu0 0.0
        %1270 = vmatprep.subr.mxu0 0.0
        %1271 = vmatpush1.msra.mxu0 0.0
        %1272 = vmatprep.subr.mxu0 0.0
        %1273 = vmatpush1.msra.mxu0 0.0
        %1274 = vmatprep.subr.mxu0 0.0
        %1275 = vmatpush1.msra.mxu0 0.0
        %1276 = vmatprep.subr.mxu0 0.0
        %1277 = vmatpush1.msra.mxu0 0.0
        %1278 = vmatprep.subr.mxu0 0.0
        %1279 = vmatpush1.msra.mxu0 0.0
        %1280 = vmatprep.subr.mxu0 0.0
        %1281 = vmatpush1.msra.mxu0 0.0
        %1282 = vmatprep.subr.mxu0 0.0
        %1283 = vmatpush1.msra.mxu0 0.0
        %1284 = vmatprep.subr.mxu0 0.0
        %1285 = vmatpush1.msra.mxu0 0.0
        %1286 = vmatprep.subr.mxu0 0.0
        %1287 = vmatpush1.msra.mxu0 0.0
        %1288 = vmatprep.subr.mxu0 0.0
        %1289 = vmatpush1.msra.mxu0 0.0
        %1290 = vmatprep.subr.mxu0 0.0
        %1291 = vmatpush1.msra.mxu0 0.0
        %1292 = vmatprep.subr.mxu0 0.0
        %1293 = vmatpush1.msra.mxu0 0.0
        %1294 = vmatprep.subr.mxu0 0.0
        %1295 = vmatpush1.msra.mxu0 0.0
        %1296 = vmatprep.subr.mxu0 0.0
        %1297 = vmatpush1.msra.mxu0 0.0
        %1298 = vmatprep.subr.mxu0 0.0
        %1299 = vmatpush1.msra.mxu0 0.0
        %1300 = vmatprep.subr.mxu0 0.0
        %1301 = vmatpush1.msra.mxu0 0.0
        %1302 = vmatprep.subr.mxu0 0.0
        %1303 = vmatpush1.msra.mxu0 0.0
        %1304 = vmatprep.mubr.f32.mxu0 0.0
        %v1305 = vand.u32 %v1233, 4294901760
        %v1306 = vsub.f32 %v1233, %v1305
        %v1307 = vand.u32 %v1306, 4294901760
        %v1308 = vsub.f32 %v1306, %v1307
        %v1309 = vand.u32 %v1308, 4294901760
        %1310 = vmatmul.mubr.f32.gmra.mrb[0].mxu0 %v1309
        %v1311 = vpop.f32.mrb[0].mxu0
        %v1312 = vadd.f32 0.0, %v1311
        %v1313 = vpop.f32.mrb[0].mxu0
        %1314 = vmatprep.mubr.f32.mxu0 0.0
        %v1315 = vand.u32 %v1236, 4294901760
        %v1316 = vsub.f32 %v1236, %v1315
        %v1317 = vand.u32 %v1316, 4294901760
        %v1318 = vsub.f32 %v1316, %v1317
        %v1319 = vand.u32 %v1318, 4294901760
        %1320 = vmatmul.mubr.f32.gmra.mrb[0].mxu0 %v1319
        %v1321 = vpop.f32.mrb[0].mxu0
        %v1322 = vadd.f32 0.0, %v1321
        %v1323 = vpop.f32.mrb[0].mxu0
        %1324 = vdwg.mxu0
        %1325 = vmatprep.subr.mxu0 0.0
        %v1326 = vand.u32 %v174, 4294901760
        %v1327 = vsub.f32 %v174, %v1326
        %v1328 = vand.u32 %v1327, 4294901760
        %v1329 = vsub.f32 %v1327, %v1328
        %v1330 = vand.u32 %v1329, 4294901760
        %1331 = vmatpush1.msra.mxu0 %v1330
        %1332 = vmatprep.subr.mxu0 0.0
        %v1333 = vand.u32 %v175, 4294901760
        %v1334 = vsub.f32 %v175, %v1333
        %v1335 = vand.u32 %v1334, 4294901760
        %v1336 = vsub.f32 %v1334, %v1335
        %v1337 = vand.u32 %v1336, 4294901760
        %1338 = vmatpush1.msra.mxu0 %v1337
        %1339 = vmatprep.subr.mxu0 0.0
        %1340 = vmatpush1.msra.mxu0 0.0
        %1341 = vmatprep.subr.mxu0 0.0
        %1342 = vmatpush1.msra.mxu0 0.0
        %1343 = vmatprep.subr.mxu0 0.0
        %1344 = vmatpush1.msra.mxu0 0.0
        %1345 = vmatprep.subr.mxu0 0.0
        %1346 = vmatpush1.msra.mxu0 0.0
        %1347 = vmatprep.subr.mxu0 0.0
        %1348 = vmatpush1.msra.mxu0 0.0
        %1349 = vmatprep.subr.mxu0 0.0
        %1350 = vmatpush1.msra.mxu0 0.0
        %1351 = vmatprep.subr.mxu0 0.0
        %1352 = vmatpush1.msra.mxu0 0.0
        %1353 = vmatprep.subr.mxu0 0.0
        %1354 = vmatpush1.msra.mxu0 0.0
        %1355 = vmatprep.subr.mxu0 0.0
        %1356 = vmatpush1.msra.mxu0 0.0
        %1357 = vmatprep.subr.mxu0 0.0
        %1358 = vmatpush1.msra.mxu0 0.0
        %1359 = vmatprep.subr.mxu0 0.0
        %1360 = vmatpush1.msra.mxu0 0.0
        %1361 = vmatprep.subr.mxu0 0.0
        %1362 = vmatpush1.msra.mxu0 0.0
        %1363 = vmatprep.subr.mxu0 0.0
        %1364 = vmatpush1.msra.mxu0 0.0
        %1365 = vmatprep.subr.mxu0 0.0
        %1366 = vmatpush1.msra.mxu0 0.0
        %1367 = vmatprep.subr.mxu0 0.0
        %1368 = vmatpush1.msra.mxu0 0.0
        %1369 = vmatprep.subr.mxu0 0.0
        %1370 = vmatpush1.msra.mxu0 0.0
        %1371 = vmatprep.subr.mxu0 0.0
        %1372 = vmatpush1.msra.mxu0 0.0
        %1373 = vmatprep.subr.mxu0 0.0
        %1374 = vmatpush1.msra.mxu0 0.0
        %1375 = vmatprep.subr.mxu0 0.0
        %1376 = vmatpush1.msra.mxu0 0.0
        %1377 = vmatprep.subr.mxu0 0.0
        %1378 = vmatpush1.msra.mxu0 0.0
        %1379 = vmatprep.subr.mxu0 0.0
        %1380 = vmatpush1.msra.mxu0 0.0
        %1381 = vmatprep.subr.mxu0 0.0
        %1382 = vmatpush1.msra.mxu0 0.0
        %1383 = vmatprep.subr.mxu0 0.0
        %1384 = vmatpush1.msra.mxu0 0.0
        %1385 = vmatprep.subr.mxu0 0.0
        %1386 = vmatpush1.msra.mxu0 0.0
        %1387 = vmatprep.subr.mxu0 0.0
        %1388 = vmatpush1.msra.mxu0 0.0
        %1389 = vmatprep.subr.mxu0 0.0
        %1390 = vmatpush1.msra.mxu0 0.0
        %1391 = vmatprep.subr.mxu0 0.0
        %1392 = vmatpush1.msra.mxu0 0.0
        %1393 = vmatprep.subr.mxu0 0.0
        %1394 = vmatpush1.msra.mxu0 0.0
        %1395 = vmatprep.subr.mxu0 0.0
        %1396 = vmatpush1.msra.mxu0 0.0
        %1397 = vmatprep.subr.mxu0 0.0
        %1398 = vmatpush1.msra.mxu0 0.0
        %1399 = vmatprep.mubr.f32.mxu0 0.0
        %v1400 = vand.u32 %v1233, 4294901760
        %1401 = vmatmul.mubr.f32.gmra.mrb[0].mxu0 %v1400
        %v1402 = vpop.f32.mrb[0].mxu0
        %v1403 = vadd.f32 %v1312, %v1402
        %v1404 = vpop.f32.mrb[0].mxu0
        %1405 = vmatprep.mubr.f32.mxu0 0.0
        %v1406 = vand.u32 %v1236, 4294901760
        %1407 = vmatmul.mubr.f32.gmra.mrb[0].mxu0 %v1406
        %v1408 = vpop.f32.mrb[0].mxu0
        %v1409 = vadd.f32 %v1322, %v1408
        %v1410 = vpop.f32.mrb[0].mxu0
        %1411 = vdwg.mxu0
        %1412 = vmatprep.subr.mxu0 0.0
        %v1413 = vand.u32 %v174, 4294901760
        %v1414 = vsub.f32 %v174, %v1413
        %1415 = vmatpush1.msra.mxu0 %v1414
        %1416 = vmatprep.subr.mxu0 0.0
        %v1417 = vand.u32 %v175, 4294901760
        %v1418 = vsub.f32 %v175, %v1417
        %1419 = vmatpush1.msra.mxu0 %v1418
        %1420 = vmatprep.subr.mxu0 0.0
        %1421 = vmatpush1.msra.mxu0 0.0
        %1422 = vmatprep.subr.mxu0 0.0
        %1423 = vmatpush1.msra.mxu0 0.0
        %1424 = vmatprep.subr.mxu0 0.0
        %1425 = vmatpush1.msra.mxu0 0.0
        %1426 = vmatprep.subr.mxu0 0.0
        %1427 = vmatpush1.msra.mxu0 0.0
        %1428 = vmatprep.subr.mxu0 0.0
        %1429 = vmatpush1.msra.mxu0 0.0
        %1430 = vmatprep.subr.mxu0 0.0
        %1431 = vmatpush1.msra.mxu0 0.0
        %1432 = vmatprep.subr.mxu0 0.0
        %1433 = vmatpush1.msra.mxu0 0.0
        %1434 = vmatprep.subr.mxu0 0.0
        %1435 = vmatpush1.msra.mxu0 0.0
        %1436 = vmatprep.subr.mxu0 0.0
        %1437 = vmatpush1.msra.mxu0 0.0
        %1438 = vmatprep.subr.mxu0 0.0
        %1439 = vmatpush1.msra.mxu0 0.0
        %1440 = vmatprep.subr.mxu0 0.0
        %1441 = vmatpush1.msra.mxu0 0.0
        %1442 = vmatprep.subr.mxu0 0.0
        %1443 = vmatpush1.msra.mxu0 0.0
        %1444 = vmatprep.subr.mxu0 0.0
        %1445 = vmatpush1.msra.mxu0 0.0
        %1446 = vmatprep.subr.mxu0 0.0
        %1447 = vmatpush1.msra.mxu0 0.0
        %1448 = vmatprep.subr.mxu0 0.0
        %1449 = vmatpush1.msra.mxu0 0.0
        %1450 = vmatprep.subr.mxu0 0.0
        %1451 = vmatpush1.msra.mxu0 0.0
        %1452 = vmatprep.subr.mxu0 0.0
        %1453 = vmatpush1.msra.mxu0 0.0
        %1454 = vmatprep.subr.mxu0 0.0
        %1455 = vmatpush1.msra.mxu0 0.0
        %1456 = vmatprep.subr.mxu0 0.0
        %1457 = vmatpush1.msra.mxu0 0.0
        %1458 = vmatprep.subr.mxu0 0.0
        %1459 = vmatpush1.msra.mxu0 0.0
        %1460 = vmatprep.subr.mxu0 0.0
        %1461 = vmatpush1.msra.mxu0 0.0
        %1462 = vmatprep.subr.mxu0 0.0
        %1463 = vmatpush1.msra.mxu0 0.0
        %1464 = vmatprep.subr.mxu0 0.0
        %1465 = vmatpush1.msra.mxu0 0.0
        %1466 = vmatprep.subr.mxu0 0.0
        %1467 = vmatpush1.msra.mxu0 0.0
        %1468 = vmatprep.subr.mxu0 0.0
        %1469 = vmatpush1.msra.mxu0 0.0
        %1470 = vmatprep.subr.mxu0 0.0
        %1471 = vmatpush1.msra.mxu0 0.0
        %1472 = vmatprep.subr.mxu0 0.0
        %1473 = vmatpush1.msra.mxu0 0.0
        %1474 = vmatprep.subr.mxu0 0.0
        %1475 = vmatpush1.msra.mxu0 0.0
        %1476 = vmatprep.subr.mxu0 0.0
        %1477 = vmatpush1.msra.mxu0 0.0
        %1478 = vmatprep.subr.mxu0 0.0
        %1479 = vmatpush1.msra.mxu0 0.0
        %1480 = vmatprep.mubr.f32.mxu0 0.0
        %v1481 = vand.u32 %v1233, 4294901760
        %v1482 = vsub.f32 %v1233, %v1481
        %1483 = vmatmul.mubr.f32.gmra.mrb[0].mxu0 %v1482
        %v1484 = vpop.f32.mrb[0].mxu0
        %v1485 = vadd.f32 %v1403, %v1484
        %v1486 = vpop.f32.mrb[0].mxu0
        %1487 = vmatprep.mubr.f32.mxu0 0.0
        %v1488 = vand.u32 %v1236, 4294901760
        %v1489 = vsub.f32 %v1236, %v1488
        %1490 = vmatmul.mubr.f32.gmra.mrb[0].mxu0 %v1489
        %v1491 = vpop.f32.mrb[0].mxu0
        %v1492 = vadd.f32 %v1409, %v1491
        %v1493 = vpop.f32.mrb[0].mxu0
        %1494 = vdwg.mxu0
        %1495 = vmatprep.subr.mxu0 0.0
        %v1496 = vand.u32 %v174, 4294901760
        %1497 = vmatpush1.msra.mxu0 %v1496
        %1498 = vmatprep.subr.mxu0 0.0
        %v1499 = vand.u32 %v175, 4294901760
        %1500 = vmatpush1.msra.mxu0 %v1499
        %1501 = vmatprep.subr.mxu0 0.0
        %1502 = vmatpush1.msra.mxu0 0.0
        %1503 = vmatprep.subr.mxu0 0.0
        %1504 = vmatpush1.msra.mxu0 0.0
        %1505 = vmatprep.subr.mxu0 0.0
        %1506 = vmatpush1.msra.mxu0 0.0
        %1507 = vmatprep.subr.mxu0 0.0
        %1508 = vmatpush1.msra.mxu0 0.0
        %1509 = vmatprep.subr.mxu0 0.0
        %1510 = vmatpush1.msra.mxu0 0.0
        %1511 = vmatprep.subr.mxu0 0.0
        %1512 = vmatpush1.msra.mxu0 0.0
        %1513 = vmatprep.subr.mxu0 0.0
        %1514 = vmatpush1.msra.mxu0 0.0
        %1515 = vmatprep.subr.mxu0 0.0
        %1516 = vmatpush1.msra.mxu0 0.0
        %1517 = vmatprep.subr.mxu0 0.0
        %1518 = vmatpush1.msra.mxu0 0.0
        %1519 = vmatprep.subr.mxu0 0.0
        %1520 = vmatpush1.msra.mxu0 0.0
        %1521 = vmatprep.subr.mxu0 0.0
        %1522 = vmatpush1.msra.mxu0 0.0
        %1523 = vmatprep.subr.mxu0 0.0
        %1524 = vmatpush1.msra.mxu0 0.0
        %1525 = vmatprep.subr.mxu0 0.0
        %1526 = vmatpush1.msra.mxu0 0.0
        %1527 = vmatprep.subr.mxu0 0.0
        %1528 = vmatpush1.msra.mxu0 0.0
        %1529 = vmatprep.subr.mxu0 0.0
        %1530 = vmatpush1.msra.mxu0 0.0
        %1531 = vmatprep.subr.mxu0 0.0
        %1532 = vmatpush1.msra.mxu0 0.0
        %1533 = vmatprep.subr.mxu0 0.0
        %1534 = vmatpush1.msra.mxu0 0.0
        %1535 = vmatprep.subr.mxu0 0.0
        %1536 = vmatpush1.msra.mxu0 0.0
        %1537 = vmatprep.subr.mxu0 0.0
        %1538 = vmatpush1.msra.mxu0 0.0
        %1539 = vmatprep.subr.mxu0 0.0
        %1540 = vmatpush1.msra.mxu0 0.0
        %1541 = vmatprep.subr.mxu0 0.0
        %1542 = vmatpush1.msra.mxu0 0.0
        %1543 = vmatprep.subr.mxu0 0.0
        %1544 = vmatpush1.msra.mxu0 0.0
        %1545 = vmatprep.subr.mxu0 0.0
        %1546 = vmatpush1.msra.mxu0 0.0
        %1547 = vmatprep.subr.mxu0 0.0
        %1548 = vmatpush1.msra.mxu0 0.0
        %1549 = vmatprep.subr.mxu0 0.0
        %1550 = vmatpush1.msra.mxu0 0.0
        %1551 = vmatprep.subr.mxu0 0.0
        %1552 = vmatpush1.msra.mxu0 0.0
        %1553 = vmatprep.subr.mxu0 0.0
        %1554 = vmatpush1.msra.mxu0 0.0
        %1555 = vmatprep.subr.mxu0 0.0
        %1556 = vmatpush1.msra.mxu0 0.0
        %1557 = vmatprep.subr.mxu0 0.0
        %1558 = vmatpush1.msra.mxu0 0.0
        %1559 = vmatprep.subr.mxu0 0.0
        %1560 = vmatpush1.msra.mxu0 0.0
        %1561 = vmatprep.mubr.f32.mxu0 0.0
        %v1562 = vand.u32 %v1233, 4294901760
        %v1563 = vsub.f32 %v1233, %v1562
        %v1564 = vand.u32 %v1563, 4294901760
        %1565 = vmatmul.mubr.f32.gmra.mrb[0].mxu0 %v1564
        %v1566 = vpop.f32.mrb[0].mxu0
        %v1567 = vadd.f32 %v1485, %v1566
        %v1568 = vpop.f32.mrb[0].mxu0
        %1569 = vmatprep.mubr.f32.mxu0 0.0
        %v1570 = vand.u32 %v1236, 4294901760
        %v1571 = vsub.f32 %v1236, %v1570
        %v1572 = vand.u32 %v1571, 4294901760
        %1573 = vmatmul.mubr.f32.gmra.mrb[0].mxu0 %v1572
        %v1574 = vpop.f32.mrb[0].mxu0
        %v1575 = vadd.f32 %v1492, %v1574
        %v1576 = vpop.f32.mrb[0].mxu0
        %1577 = vdwg.mxu0
        %1578 = vmatprep.subr.mxu0 0.0
        %v1579 = vand.u32 %v174, 4294901760
        %v1580 = vsub.f32 %v174, %v1579
        %v1581 = vand.u32 %v1580, 4294901760
        %1582 = vmatpush1.msra.mxu0 %v1581
        %1583 = vmatprep.subr.mxu0 0.0
        %v1584 = vand.u32 %v175, 4294901760
        %v1585 = vsub.f32 %v175, %v1584
        %v1586 = vand.u32 %v1585, 4294901760
        %1587 = vmatpush1.msra.mxu0 %v1586
        %1588 = vmatprep.subr.mxu0 0.0
        %1589 = vmatpush1.msra.mxu0 0.0
        %1590 = vmatprep.subr.mxu0 0.0
        %1591 = vmatpush1.msra.mxu0 0.0
        %1592 = vmatprep.subr.mxu0 0.0
        %1593 = vmatpush1.msra.mxu0 0.0
        %1594 = vmatprep.subr.mxu0 0.0
        %1595 = vmatpush1.msra.mxu0 0.0
        %1596 = vmatprep.subr.mxu0 0.0
        %1597 = vmatpush1.msra.mxu0 0.0
        %1598 = vmatprep.subr.mxu0 0.0
        %1599 = vmatpush1.msra.mxu0 0.0
        %1600 = vmatprep.subr.mxu0 0.0
        %1601 = vmatpush1.msra.mxu0 0.0
        %1602 = vmatprep.subr.mxu0 0.0
        %1603 = vmatpush1.msra.mxu0 0.0
        %1604 = vmatprep.subr.mxu0 0.0
        %1605 = vmatpush1.msra.mxu0 0.0
        %1606 = vmatprep.subr.mxu0 0.0
        %1607 = vmatpush1.msra.mxu0 0.0
        %1608 = vmatprep.subr.mxu0 0.0
        %1609 = vmatpush1.msra.mxu0 0.0
        %1610 = vmatprep.subr.mxu0 0.0
        %1611 = vmatpush1.msra.mxu0 0.0
        %1612 = vmatprep.subr.mxu0 0.0
        %1613 = vmatpush1.msra.mxu0 0.0
        %1614 = vmatprep.subr.mxu0 0.0
        %1615 = vmatpush1.msra.mxu0 0.0
        %1616 = vmatprep.subr.mxu0 0.0
        %1617 = vmatpush1.msra.mxu0 0.0
        %1618 = vmatprep.subr.mxu0 0.0
        %1619 = vmatpush1.msra.mxu0 0.0
        %1620 = vmatprep.subr.mxu0 0.0
        %1621 = vmatpush1.msra.mxu0 0.0
        %1622 = vmatprep.subr.mxu0 0.0
        %1623 = vmatpush1.msra.mxu0 0.0
        %1624 = vmatprep.subr.mxu0 0.0
        %1625 = vmatpush1.msra.mxu0 0.0
        %1626 = vmatprep.subr.mxu0 0.0
        %1627 = vmatpush1.msra.mxu0 0.0
        %1628 = vmatprep.subr.mxu0 0.0
        %1629 = vmatpush1.msra.mxu0 0.0
        %1630 = vmatprep.subr.mxu0 0.0
        %1631 = vmatpush1.msra.mxu0 0.0
        %1632 = vmatprep.subr.mxu0 0.0
        %1633 = vmatpush1.msra.mxu0 0.0
        %1634 = vmatprep.subr.mxu0 0.0
        %1635 = vmatpush1.msra.mxu0 0.0
        %1636 = vmatprep.subr.mxu0 0.0
        %1637 = vmatpush1.msra.mxu0 0.0
        %1638 = vmatprep.subr.mxu0 0.0
        %1639 = vmatpush1.msra.mxu0 0.0
        %1640 = vmatprep.subr.mxu0 0.0
        %1641 = vmatpush1.msra.mxu0 0.0
        %1642 = vmatprep.subr.mxu0 0.0
        %1643 = vmatpush1.msra.mxu0 0.0
        %1644 = vmatprep.subr.mxu0 0.0
        %1645 = vmatpush1.msra.mxu0 0.0
        %1646 = vmatprep.subr.mxu0 0.0
        %1647 = vmatpush1.msra.mxu0 0.0
        %1648 = vmatprep.mubr.f32.mxu0 0.0
        %v1649 = vand.u32 %v1233, 4294901760
        %1650 = vmatmul.mubr.f32.gmra.mrb[0].mxu0 %v1649
        %v1651 = vpop.f32.mrb[0].mxu0
        %v1652 = vadd.f32 %v1567, %v1651
        %v1653 = vpop.f32.mrb[0].mxu0
        %1654 = vmatprep.mubr.f32.mxu0 0.0
        %v1655 = vand.u32 %v1236, 4294901760
        %1656 = vmatmul.mubr.f32.gmra.mrb[0].mxu0 %v1655
        %v1657 = vpop.f32.mrb[0].mxu0
        %v1658 = vadd.f32 %v1575, %v1657
        %v1659 = vpop.f32.mrb[0].mxu0
        %1660 = vdwg.mxu0
        %1661 = vmatprep.subr.mxu0 0.0
        %v1662 = vand.u32 %v174, 4294901760
        %1663 = vmatpush1.msra.mxu0 %v1662
        %1664 = vmatprep.subr.mxu0 0.0
        %v1665 = vand.u32 %v175, 4294901760
        %1666 = vmatpush1.msra.mxu0 %v1665
        %1667 = vmatprep.subr.mxu0 0.0
        %1668 = vmatpush1.msra.mxu0 0.0
        %1669 = vmatprep.subr.mxu0 0.0
        %1670 = vmatpush1.msra.mxu0 0.0
        %1671 = vmatprep.subr.mxu0 0.0
        %1672 = vmatpush1.msra.mxu0 0.0
        %1673 = vmatprep.subr.mxu0 0.0
        %1674 = vmatpush1.msra.mxu0 0.0
        %1675 = vmatprep.subr.mxu0 0.0
        %1676 = vmatpush1.msra.mxu0 0.0
        %1677 = vmatprep.subr.mxu0 0.0
        %1678 = vmatpush1.msra.mxu0 0.0
        %1679 = vmatprep.subr.mxu0 0.0
        %1680 = vmatpush1.msra.mxu0 0.0
        %1681 = vmatprep.subr.mxu0 0.0
        %1682 = vmatpush1.msra.mxu0 0.0
        %1683 = vmatprep.subr.mxu0 0.0
        %1684 = vmatpush1.msra.mxu0 0.0
        %1685 = vmatprep.subr.mxu0 0.0
        %1686 = vmatpush1.msra.mxu0 0.0
        %1687 = vmatprep.subr.mxu0 0.0
        %1688 = vmatpush1.msra.mxu0 0.0
        %1689 = vmatprep.subr.mxu0 0.0
        %1690 = vmatpush1.msra.mxu0 0.0
        %1691 = vmatprep.subr.mxu0 0.0
        %1692 = vmatpush1.msra.mxu0 0.0
        %1693 = vmatprep.subr.mxu0 0.0
        %1694 = vmatpush1.msra.mxu0 0.0
        %1695 = vmatprep.subr.mxu0 0.0
        %1696 = vmatpush1.msra.mxu0 0.0
        %1697 = vmatprep.subr.mxu0 0.0
        %1698 = vmatpush1.msra.mxu0 0.0
        %1699 = vmatprep.subr.mxu0 0.0
        %1700 = vmatpush1.msra.mxu0 0.0
        %1701 = vmatprep.subr.mxu0 0.0
        %1702 = vmatpush1.msra.mxu0 0.0
        %1703 = vmatprep.subr.mxu0 0.0
        %1704 = vmatpush1.msra.mxu0 0.0
        %1705 = vmatprep.subr.mxu0 0.0
        %1706 = vmatpush1.msra.mxu0 0.0
        %1707 = vmatprep.subr.mxu0 0.0
        %1708 = vmatpush1.msra.mxu0 0.0
        %1709 = vmatprep.subr.mxu0 0.0
        %1710 = vmatpush1.msra.mxu0 0.0
        %1711 = vmatprep.subr.mxu0 0.0
        %1712 = vmatpush1.msra.mxu0 0.0
        %1713 = vmatprep.subr.mxu0 0.0
        %1714 = vmatpush1.msra.mxu0 0.0
        %1715 = vmatprep.subr.mxu0 0.0
        %1716 = vmatpush1.msra.mxu0 0.0
        %1717 = vmatprep.subr.mxu0 0.0
        %1718 = vmatpush1.msra.mxu0 0.0
        %1719 = vmatprep.subr.mxu0 0.0
        %1720 = vmatpush1.msra.mxu0 0.0
        %1721 = vmatprep.subr.mxu0 0.0
        %1722 = vmatpush1.msra.mxu0 0.0
        %1723 = vmatprep.subr.mxu0 0.0
        %1724 = vmatpush1.msra.mxu0 0.0
        %1725 = vmatprep.subr.mxu0 0.0
        %1726 = vmatpush1.msra.mxu0 0.0
        %1727 = vmatprep.mubr.f32.mxu0 0.0
        %v1728 = vand.u32 %v1233, 4294901760
        %1729 = vmatmul.mubr.f32.gmra.mrb[0].mxu0 %v1728
        %v1730 = vpop.f32.mrb[0].mxu0
        %v1731 = vadd.f32 %v1652, %v1730
        %v1732 = vpop.f32.mrb[0].mxu0
        %1733 = vmatprep.mubr.f32.mxu0 0.0
        %v1734 = vand.u32 %v1236, 4294901760
        %1735 = vmatmul.mubr.f32.gmra.mrb[0].mxu0 %v1734
        %v1736 = vpop.f32.mrb[0].mxu0
        %v1737 = vadd.f32 %v1658, %v1736
        %v1738 = vpop.f32.mrb[0].mxu0
        %1739 = vdwg.mxu0
        %v1741 = vsel %vm209, %v1227, 0
        %v1744 = vsel %vm209, %v1228, 0
        %1746 = vmatprep.subr.mxu0 0.0
        %v1747 = vand.u32 %v166, 4294901760
        %1748 = vmatpush1.msra.mxu0 %v1747
        %1749 = vmatprep.subr.mxu0 0.0
        %v1750 = vand.u32 %v167, 4294901760
        %1751 = vmatpush1.msra.mxu0 %v1750
        %1752 = vmatprep.subr.mxu0 0.0
        %1753 = vmatpush1.msra.mxu0 0.0
        %1754 = vmatprep.subr.mxu0 0.0
        %1755 = vmatpush1.msra.mxu0 0.0
        %1756 = vmatprep.subr.mxu0 0.0
        %1757 = vmatpush1.msra.mxu0 0.0
        %1758 = vmatprep.subr.mxu0 0.0
        %1759 = vmatpush1.msra.mxu0 0.0
        %1760 = vmatprep.subr.mxu0 0.0
        %1761 = vmatpush1.msra.mxu0 0.0
        %1762 = vmatprep.subr.mxu0 0.0
        %1763 = vmatpush1.msra.mxu0 0.0
        %1764 = vmatprep.subr.mxu0 0.0
        %1765 = vmatpush1.msra.mxu0 0.0
        %1766 = vmatprep.subr.mxu0 0.0
        %1767 = vmatpush1.msra.mxu0 0.0
        %1768 = vmatprep.subr.mxu0 0.0
        %1769 = vmatpush1.msra.mxu0 0.0
        %1770 = vmatprep.subr.mxu0 0.0
        %1771 = vmatpush1.msra.mxu0 0.0
        %1772 = vmatprep.subr.mxu0 0.0
        %1773 = vmatpush1.msra.mxu0 0.0
        %1774 = vmatprep.subr.mxu0 0.0
        %1775 = vmatpush1.msra.mxu0 0.0
        %1776 = vmatprep.subr.mxu0 0.0
        %1777 = vmatpush1.msra.mxu0 0.0
        %1778 = vmatprep.subr.mxu0 0.0
        %1779 = vmatpush1.msra.mxu0 0.0
        %1780 = vmatprep.subr.mxu0 0.0
        %1781 = vmatpush1.msra.mxu0 0.0
        %1782 = vmatprep.subr.mxu0 0.0
        %1783 = vmatpush1.msra.mxu0 0.0
        %1784 = vmatprep.subr.mxu0 0.0
        %1785 = vmatpush1.msra.mxu0 0.0
        %1786 = vmatprep.subr.mxu0 0.0
        %1787 = vmatpush1.msra.mxu0 0.0
        %1788 = vmatprep.subr.mxu0 0.0
        %1789 = vmatpush1.msra.mxu0 0.0
        %1790 = vmatprep.subr.mxu0 0.0
        %1791 = vmatpush1.msra.mxu0 0.0
        %1792 = vmatprep.subr.mxu0 0.0
        %1793 = vmatpush1.msra.mxu0 0.0
        %1794 = vmatprep.subr.mxu0 0.0
        %1795 = vmatpush1.msra.mxu0 0.0
        %1796 = vmatprep.subr.mxu0 0.0
        %1797 = vmatpush1.msra.mxu0 0.0
        %1798 = vmatprep.subr.mxu0 0.0
        %1799 = vmatpush1.msra.mxu0 0.0
        %1800 = vmatprep.subr.mxu0 0.0
        %1801 = vmatpush1.msra.mxu0 0.0
        %1802 = vmatprep.subr.mxu0 0.0
        %1803 = vmatpush1.msra.mxu0 0.0
        %1804 = vmatprep.subr.mxu0 0.0
        %1805 = vmatpush1.msra.mxu0 0.0
        %1806 = vmatprep.subr.mxu0 0.0
        %1807 = vmatpush1.msra.mxu0 0.0
        %1808 = vmatprep.subr.mxu0 0.0
        %1809 = vmatpush1.msra.mxu0 0.0
        %1810 = vmatprep.subr.mxu0 0.0
        %1811 = vmatpush1.msra.mxu0 0.0
        %1812 = vmatprep.mubr.f32.mxu0 0.0
        %v1813 = vand.u32 %v1741, 4294901760
        %v1814 = vsub.f32 %v1741, %v1813
        %v1815 = vand.u32 %v1814, 4294901760
        %v1816 = vsub.f32 %v1814, %v1815
        %v1817 = vand.u32 %v1816, 4294901760
        %1818 = vmatmul.mubr.f32.gmra.mrb[0].mxu0 %v1817
        %v1819 = vpop.f32.mrb[0].mxu0
        %v1820 = vadd.f32 %v1731, %v1819
        %v1821 = vpop.f32.mrb[0].mxu0
        %1822 = vmatprep.mubr.f32.mxu0 0.0
        %v1823 = vand.u32 %v1744, 4294901760
        %v1824 = vsub.f32 %v1744, %v1823
        %v1825 = vand.u32 %v1824, 4294901760
        %v1826 = vsub.f32 %v1824, %v1825
        %v1827 = vand.u32 %v1826, 4294901760
        %1828 = vmatmul.mubr.f32.gmra.mrb[0].mxu0 %v1827
        %v1829 = vpop.f32.mrb[0].mxu0
        %v1830 = vadd.f32 %v1737, %v1829
        %v1831 = vpop.f32.mrb[0].mxu0
        %1832 = vdwg.mxu0
        %1833 = vmatprep.subr.mxu0 0.0
        %v1834 = vand.u32 %v166, 4294901760
        %v1835 = vsub.f32 %v166, %v1834
        %v1836 = vand.u32 %v1835, 4294901760
        %v1837 = vsub.f32 %v1835, %v1836
        %v1838 = vand.u32 %v1837, 4294901760
        %1839 = vmatpush1.msra.mxu0 %v1838
        %1840 = vmatprep.subr.mxu0 0.0
        %v1841 = vand.u32 %v167, 4294901760
        %v1842 = vsub.f32 %v167, %v1841
        %v1843 = vand.u32 %v1842, 4294901760
        %v1844 = vsub.f32 %v1842, %v1843
        %v1845 = vand.u32 %v1844, 4294901760
        %1846 = vmatpush1.msra.mxu0 %v1845
        %1847 = vmatprep.subr.mxu0 0.0
        %1848 = vmatpush1.msra.mxu0 0.0
        %1849 = vmatprep.subr.mxu0 0.0
        %1850 = vmatpush1.msra.mxu0 0.0
        %1851 = vmatprep.subr.mxu0 0.0
        %1852 = vmatpush1.msra.mxu0 0.0
        %1853 = vmatprep.subr.mxu0 0.0
        %1854 = vmatpush1.msra.mxu0 0.0
        %1855 = vmatprep.subr.mxu0 0.0
        %1856 = vmatpush1.msra.mxu0 0.0
        %1857 = vmatprep.subr.mxu0 0.0
        %1858 = vmatpush1.msra.mxu0 0.0
        %1859 = vmatprep.subr.mxu0 0.0
        %1860 = vmatpush1.msra.mxu0 0.0
        %1861 = vmatprep.subr.mxu0 0.0
        %1862 = vmatpush1.msra.mxu0 0.0
        %1863 = vmatprep.subr.mxu0 0.0
        %1864 = vmatpush1.msra.mxu0 0.0
        %1865 = vmatprep.subr.mxu0 0.0
        %1866 = vmatpush1.msra.mxu0 0.0
        %1867 = vmatprep.subr.mxu0 0.0
        %1868 = vmatpush1.msra.mxu0 0.0
        %1869 = vmatprep.subr.mxu0 0.0
        %1870 = vmatpush1.msra.mxu0 0.0
        %1871 = vmatprep.subr.mxu0 0.0
        %1872 = vmatpush1.msra.mxu0 0.0
        %1873 = vmatprep.subr.mxu0 0.0
        %1874 = vmatpush1.msra.mxu0 0.0
        %1875 = vmatprep.subr.mxu0 0.0
        %1876 = vmatpush1.msra.mxu0 0.0
        %1877 = vmatprep.subr.mxu0 0.0
        %1878 = vmatpush1.msra.mxu0 0.0
        %1879 = vmatprep.subr.mxu0 0.0
        %1880 = vmatpush1.msra.mxu0 0.0
        %1881 = vmatprep.subr.mxu0 0.0
        %1882 = vmatpush1.msra.mxu0 0.0
        %1883 = vmatprep.subr.mxu0 0.0
        %1884 = vmatpush1.msra.mxu0 0.0
        %1885 = vmatprep.subr.mxu0 0.0
        %1886 = vmatpush1.msra.mxu0 0.0
        %1887 = vmatprep.subr.mxu0 0.0
        %1888 = vmatpush1.msra.mxu0 0.0
        %1889 = vmatprep.subr.mxu0 0.0
        %1890 = vmatpush1.msra.mxu0 0.0
        %1891 = vmatprep.subr.mxu0 0.0
        %1892 = vmatpush1.msra.mxu0 0.0
        %1893 = vmatprep.subr.mxu0 0.0
        %1894 = vmatpush1.msra.mxu0 0.0
        %1895 = vmatprep.subr.mxu0 0.0
        %1896 = vmatpush1.msra.mxu0 0.0
        %1897 = vmatprep.subr.mxu0 0.0
        %1898 = vmatpush1.msra.mxu0 0.0
        %1899 = vmatprep.subr.mxu0 0.0
        %1900 = vmatpush1.msra.mxu0 0.0
        %1901 = vmatprep.subr.mxu0 0.0
        %1902 = vmatpush1.msra.mxu0 0.0
        %1903 = vmatprep.subr.mxu0 0.0
        %1904 = vmatpush1.msra.mxu0 0.0
        %1905 = vmatprep.subr.mxu0 0.0
        %1906 = vmatpush1.msra.mxu0 0.0
        %1907 = vmatprep.mubr.f32.mxu0 0.0
        %v1908 = vand.u32 %v1741, 4294901760
        %1909 = vmatmul.mubr.f32.gmra.mrb[0].mxu0 %v1908
        %v1910 = vpop.f32.mrb[0].mxu0
        %v1911 = vadd.f32 %v1820, %v1910
        %v1912 = vpop.f32.mrb[0].mxu0
        %1913 = vmatprep.mubr.f32.mxu0 0.0
        %v1914 = vand.u32 %v1744, 4294901760
        %1915 = vmatmul.mubr.f32.gmra.mrb[0].mxu0 %v1914
        %v1916 = vpop.f32.mrb[0].mxu0
        %v1917 = vadd.f32 %v1830, %v1916
        %v1918 = vpop.f32.mrb[0].mxu0
        %1919 = vdwg.mxu0
        %1920 = vmatprep.subr.mxu0 0.0
        %v1921 = vand.u32 %v166, 4294901760
        %v1922 = vsub.f32 %v166, %v1921
        %1923 = vmatpush1.msra.mxu0 %v1922
        %1924 = vmatprep.subr.mxu0 0.0
        %v1925 = vand.u32 %v167, 4294901760
        %v1926 = vsub.f32 %v167, %v1925
        %1927 = vmatpush1.msra.mxu0 %v1926
        %1928 = vmatprep.subr.mxu0 0.0
        %1929 = vmatpush1.msra.mxu0 0.0
        %1930 = vmatprep.subr.mxu0 0.0
        %1931 = vmatpush1.msra.mxu0 0.0
        %1932 = vmatprep.subr.mxu0 0.0
        %1933 = vmatpush1.msra.mxu0 0.0
        %1934 = vmatprep.subr.mxu0 0.0
        %1935 = vmatpush1.msra.mxu0 0.0
        %1936 = vmatprep.subr.mxu0 0.0
        %1937 = vmatpush1.msra.mxu0 0.0
        %1938 = vmatprep.subr.mxu0 0.0
        %1939 = vmatpush1.msra.mxu0 0.0
        %1940 = vmatprep.subr.mxu0 0.0
        %1941 = vmatpush1.msra.mxu0 0.0
        %1942 = vmatprep.subr.mxu0 0.0
        %1943 = vmatpush1.msra.mxu0 0.0
        %1944 = vmatprep.subr.mxu0 0.0
        %1945 = vmatpush1.msra.mxu0 0.0
        %1946 = vmatprep.subr.mxu0 0.0
        %1947 = vmatpush1.msra.mxu0 0.0
        %1948 = vmatprep.subr.mxu0 0.0
        %1949 = vmatpush1.msra.mxu0 0.0
        %1950 = vmatprep.subr.mxu0 0.0
        %1951 = vmatpush1.msra.mxu0 0.0
        %1952 = vmatprep.subr.mxu0 0.0
        %1953 = vmatpush1.msra.mxu0 0.0
        %1954 = vmatprep.subr.mxu0 0.0
        %1955 = vmatpush1.msra.mxu0 0.0
        %1956 = vmatprep.subr.mxu0 0.0
        %1957 = vmatpush1.msra.mxu0 0.0
        %1958 = vmatprep.subr.mxu0 0.0
        %1959 = vmatpush1.msra.mxu0 0.0
        %1960 = vmatprep.subr.mxu0 0.0
        %1961 = vmatpush1.msra.mxu0 0.0
        %1962 = vmatprep.subr.mxu0 0.0
        %1963 = vmatpush1.msra.mxu0 0.0
        %1964 = vmatprep.subr.mxu0 0.0
        %1965 = vmatpush1.msra.mxu0 0.0
        %1966 = vmatprep.subr.mxu0 0.0
        %1967 = vmatpush1.msra.mxu0 0.0
        %1968 = vmatprep.subr.mxu0 0.0
        %1969 = vmatpush1.msra.mxu0 0.0
        %1970 = vmatprep.subr.mxu0 0.0
        %1971 = vmatpush1.msra.mxu0 0.0
        %1972 = vmatprep.subr.mxu0 0.0
        %1973 = vmatpush1.msra.mxu0 0.0
        %1974 = vmatprep.subr.mxu0 0.0
        %1975 = vmatpush1.msra.mxu0 0.0
        %1976 = vmatprep.subr.mxu0 0.0
        %1977 = vmatpush1.msra.mxu0 0.0
        %1978 = vmatprep.subr.mxu0 0.0
        %1979 = vmatpush1.msra.mxu0 0.0
        %1980 = vmatprep.subr.mxu0 0.0
        %1981 = vmatpush1.msra.mxu0 0.0
        %1982 = vmatprep.subr.mxu0 0.0
        %1983 = vmatpush1.msra.mxu0 0.0
        %1984 = vmatprep.subr.mxu0 0.0
        %1985 = vmatpush1.msra.mxu0 0.0
        %1986 = vmatprep.subr.mxu0 0.0
        %1987 = vmatpush1.msra.mxu0 0.0
        %1988 = vmatprep.mubr.f32.mxu0 0.0
        %v1989 = vand.u32 %v1741, 4294901760
        %v1990 = vsub.f32 %v1741, %v1989
        %1991 = vmatmul.mubr.f32.gmra.mrb[0].mxu0 %v1990
        %v1992 = vpop.f32.mrb[0].mxu0
        %v1993 = vadd.f32 %v1911, %v1992
        %v1994 = vpop.f32.mrb[0].mxu0
        %1995 = vmatprep.mubr.f32.mxu0 0.0
        %v1996 = vand.u32 %v1744, 4294901760
        %v1997 = vsub.f32 %v1744, %v1996
        %1998 = vmatmul.mubr.f32.gmra.mrb[0].mxu0 %v1997
        %v1999 = vpop.f32.mrb[0].mxu0
        %v2000 = vadd.f32 %v1917, %v1999
        %v2001 = vpop.f32.mrb[0].mxu0
        %2002 = vdwg.mxu0
        %2003 = vmatprep.subr.mxu0 0.0
        %v2004 = vand.u32 %v166, 4294901760
        %2005 = vmatpush1.msra.mxu0 %v2004
        %2006 = vmatprep.subr.mxu0 0.0
        %v2007 = vand.u32 %v167, 4294901760
        %2008 = vmatpush1.msra.mxu0 %v2007
        %2009 = vmatprep.subr.mxu0 0.0
        %2010 = vmatpush1.msra.mxu0 0.0
        %2011 = vmatprep.subr.mxu0 0.0
        %2012 = vmatpush1.msra.mxu0 0.0
        %2013 = vmatprep.subr.mxu0 0.0
        %2014 = vmatpush1.msra.mxu0 0.0
        %2015 = vmatprep.subr.mxu0 0.0
        %2016 = vmatpush1.msra.mxu0 0.0
        %2017 = vmatprep.subr.mxu0 0.0
        %2018 = vmatpush1.msra.mxu0 0.0
        %2019 = vmatprep.subr.mxu0 0.0
        %2020 = vmatpush1.msra.mxu0 0.0
        %2021 = vmatprep.subr.mxu0 0.0
        %2022 = vmatpush1.msra.mxu0 0.0
        %2023 = vmatprep.subr.mxu0 0.0
        %2024 = vmatpush1.msra.mxu0 0.0
        %2025 = vmatprep.subr.mxu0 0.0
        %2026 = vmatpush1.msra.mxu0 0.0
        %2027 = vmatprep.subr.mxu0 0.0
        %2028 = vmatpush1.msra.mxu0 0.0
        %2029 = vmatprep.subr.mxu0 0.0
        %2030 = vmatpush1.msra.mxu0 0.0
        %2031 = vmatprep.subr.mxu0 0.0
        %2032 = vmatpush1.msra.mxu0 0.0
        %2033 = vmatprep.subr.mxu0 0.0
        %2034 = vmatpush1.msra.mxu0 0.0
        %2035 = vmatprep.subr.mxu0 0.0
        %2036 = vmatpush1.msra.mxu0 0.0
        %2037 = vmatprep.subr.mxu0 0.0
        %2038 = vmatpush1.msra.mxu0 0.0
        %2039 = vmatprep.subr.mxu0 0.0
        %2040 = vmatpush1.msra.mxu0 0.0
        %2041 = vmatprep.subr.mxu0 0.0
        %2042 = vmatpush1.msra.mxu0 0.0
        %2043 = vmatprep.subr.mxu0 0.0
        %2044 = vmatpush1.msra.mxu0 0.0
        %2045 = vmatprep.subr.mxu0 0.0
        %2046 = vmatpush1.msra.mxu0 0.0
        %2047 = vmatprep.subr.mxu0 0.0
        %2048 = vmatpush1.msra.mxu0 0.0
        %2049 = vmatprep.subr.mxu0 0.0
        %2050 = vmatpush1.msra.mxu0 0.0
        %2051 = vmatprep.subr.mxu0 0.0
        %2052 = vmatpush1.msra.mxu0 0.0
        %2053 = vmatprep.subr.mxu0 0.0
        %2054 = vmatpush1.msra.mxu0 0.0
        %2055 = vmatprep.subr.mxu0 0.0
        %2056 = vmatpush1.msra.mxu0 0.0
        %2057 = vmatprep.subr.mxu0 0.0
        %2058 = vmatpush1.msra.mxu0 0.0
        %2059 = vmatprep.subr.mxu0 0.0
        %2060 = vmatpush1.msra.mxu0 0.0
        %2061 = vmatprep.subr.mxu0 0.0
        %2062 = vmatpush1.msra.mxu0 0.0
        %2063 = vmatprep.subr.mxu0 0.0
        %2064 = vmatpush1.msra.mxu0 0.0
        %2065 = vmatprep.subr.mxu0 0.0
        %2066 = vmatpush1.msra.mxu0 0.0
        %2067 = vmatprep.subr.mxu0 0.0
        %2068 = vmatpush1.msra.mxu0 0.0
        %2069 = vmatprep.mubr.f32.mxu0 0.0
        %v2070 = vand.u32 %v1741, 4294901760
        %v2071 = vsub.f32 %v1741, %v2070
        %v2072 = vand.u32 %v2071, 4294901760
        %2073 = vmatmul.mubr.f32.gmra.mrb[0].mxu0 %v2072
        %v2074 = vpop.f32.mrb[0].mxu0
        %v2075 = vadd.f32 %v1993, %v2074
        %v2076 = vpop.f32.mrb[0].mxu0
        %2077 = vmatprep.mubr.f32.mxu0 0.0
        %v2078 = vand.u32 %v1744, 4294901760
        %v2079 = vsub.f32 %v1744, %v2078
        %v2080 = vand.u32 %v2079, 4294901760
        %2081 = vmatmul.mubr.f32.gmra.mrb[0].mxu0 %v2080
        %v2082 = vpop.f32.mrb[0].mxu0
        %v2083 = vadd.f32 %v2000, %v2082
        %v2084 = vpop.f32.mrb[0].mxu0
        %2085 = vdwg.mxu0
        %2086 = vmatprep.subr.mxu0 0.0
        %v2087 = vand.u32 %v166, 4294901760
        %v2088 = vsub.f32 %v166, %v2087
        %v2089 = vand.u32 %v2088, 4294901760
        %2090 = vmatpush1.msra.mxu0 %v2089
        %2091 = vmatprep.subr.mxu0 0.0
        %v2092 = vand.u32 %v167, 4294901760
        %v2093 = vsub.f32 %v167, %v2092
        %v2094 = vand.u32 %v2093, 4294901760
        %2095 = vmatpush1.msra.mxu0 %v2094
        %2096 = vmatprep.subr.mxu0 0.0
        %2097 = vmatpush1.msra.mxu0 0.0
        %2098 = vmatprep.subr.mxu0 0.0
        %2099 = vmatpush1.msra.mxu0 0.0
        %2100 = vmatprep.subr.mxu0 0.0
        %2101 = vmatpush1.msra.mxu0 0.0
        %2102 = vmatprep.subr.mxu0 0.0
        %2103 = vmatpush1.msra.mxu0 0.0
        %2104 = vmatprep.subr.mxu0 0.0
        %2105 = vmatpush1.msra.mxu0 0.0
        %2106 = vmatprep.subr.mxu0 0.0
        %2107 = vmatpush1.msra.mxu0 0.0
        %2108 = vmatprep.subr.mxu0 0.0
        %2109 = vmatpush1.msra.mxu0 0.0
        %2110 = vmatprep.subr.mxu0 0.0
        %2111 = vmatpush1.msra.mxu0 0.0
        %2112 = vmatprep.subr.mxu0 0.0
        %2113 = vmatpush1.msra.mxu0 0.0
        %2114 = vmatprep.subr.mxu0 0.0
        %2115 = vmatpush1.msra.mxu0 0.0
        %2116 = vmatprep.subr.mxu0 0.0
        %2117 = vmatpush1.msra.mxu0 0.0
        %2118 = vmatprep.subr.mxu0 0.0
        %2119 = vmatpush1.msra.mxu0 0.0
        %2120 = vmatprep.subr.mxu0 0.0
        %2121 = vmatpush1.msra.mxu0 0.0
        %2122 = vmatprep.subr.mxu0 0.0
        %2123 = vmatpush1.msra.mxu0 0.0
        %2124 = vmatprep.subr.mxu0 0.0
        %2125 = vmatpush1.msra.mxu0 0.0
        %2126 = vmatprep.subr.mxu0 0.0
        %2127 = vmatpush1.msra.mxu0 0.0
        %2128 = vmatprep.subr.mxu0 0.0
        %2129 = vmatpush1.msra.mxu0 0.0
        %2130 = vmatprep.subr.mxu0 0.0
        %2131 = vmatpush1.msra.mxu0 0.0
        %2132 = vmatprep.subr.mxu0 0.0
        %2133 = vmatpush1.msra.mxu0 0.0
        %2134 = vmatprep.subr.mxu0 0.0
        %2135 = vmatpush1.msra.mxu0 0.0
        %2136 = vmatprep.subr.mxu0 0.0
        %2137 = vmatpush1.msra.mxu0 0.0
        %2138 = vmatprep.subr.mxu0 0.0
        %2139 = vmatpush1.msra.mxu0 0.0
        %2140 = vmatprep.subr.mxu0 0.0
        %2141 = vmatpush1.msra.mxu0 0.0
        %2142 = vmatprep.subr.mxu0 0.0
        %2143 = vmatpush1.msra.mxu0 0.0
        %2144 = vmatprep.subr.mxu0 0.0
        %2145 = vmatpush1.msra.mxu0 0.0
        %2146 = vmatprep.subr.mxu0 0.0
        %2147 = vmatpush1.msra.mxu0 0.0
        %2148 = vmatprep.subr.mxu0 0.0
        %2149 = vmatpush1.msra.mxu0 0.0
        %2150 = vmatprep.subr.mxu0 0.0
        %2151 = vmatpush1.msra.mxu0 0.0
        %2152 = vmatprep.subr.mxu0 0.0
        %2153 = vmatpush1.msra.mxu0 0.0
        %2154 = vmatprep.subr.mxu0 0.0
        %2155 = vmatpush1.msra.mxu0 0.0
        %2156 = vmatprep.mubr.f32.mxu0 0.0
        %v2157 = vand.u32 %v1741, 4294901760
        %2158 = vmatmul.mubr.f32.gmra.mrb[0].mxu0 %v2157
        %v2159 = vpop.f32.mrb[0].mxu0
        %v2160 = vadd.f32 %v2075, %v2159
        %v2161 = vpop.f32.mrb[0].mxu0
        %2162 = vmatprep.mubr.f32.mxu0 0.0
        %v2163 = vand.u32 %v1744, 4294901760
        %2164 = vmatmul.mubr.f32.gmra.mrb[0].mxu0 %v2163
        %v2165 = vpop.f32.mrb[0].mxu0
        %v2166 = vadd.f32 %v2083, %v2165
        %v2167 = vpop.f32.mrb[0].mxu0
        %2168 = vdwg.mxu0
        %2169 = vmatprep.subr.mxu0 0.0
        %v2170 = vand.u32 %v166, 4294901760
        %2171 = vmatpush1.msra.mxu0 %v2170
        %2172 = vmatprep.subr.mxu0 0.0
        %v2173 = vand.u32 %v167, 4294901760
        %2174 = vmatpush1.msra.mxu0 %v2173
        %2175 = vmatprep.subr.mxu0 0.0
        %2176 = vmatpush1.msra.mxu0 0.0
        %2177 = vmatprep.subr.mxu0 0.0
        %2178 = vmatpush1.msra.mxu0 0.0
        %2179 = vmatprep.subr.mxu0 0.0
        %2180 = vmatpush1.msra.mxu0 0.0
        %2181 = vmatprep.subr.mxu0 0.0
        %2182 = vmatpush1.msra.mxu0 0.0
        %2183 = vmatprep.subr.mxu0 0.0
        %2184 = vmatpush1.msra.mxu0 0.0
        %2185 = vmatprep.subr.mxu0 0.0
        %2186 = vmatpush1.msra.mxu0 0.0
        %2187 = vmatprep.subr.mxu0 0.0
        %2188 = vmatpush1.msra.mxu0 0.0
        %2189 = vmatprep.subr.mxu0 0.0
        %2190 = vmatpush1.msra.mxu0 0.0
        %2191 = vmatprep.subr.mxu0 0.0
        %2192 = vmatpush1.msra.mxu0 0.0
        %2193 = vmatprep.subr.mxu0 0.0
        %2194 = vmatpush1.msra.mxu0 0.0
        %2195 = vmatprep.subr.mxu0 0.0
        %2196 = vmatpush1.msra.mxu0 0.0
        %2197 = vmatprep.subr.mxu0 0.0
        %2198 = vmatpush1.msra.mxu0 0.0
        %2199 = vmatprep.subr.mxu0 0.0
        %2200 = vmatpush1.msra.mxu0 0.0
        %2201 = vmatprep.subr.mxu0 0.0
        %2202 = vmatpush1.msra.mxu0 0.0
        %2203 = vmatprep.subr.mxu0 0.0
        %2204 = vmatpush1.msra.mxu0 0.0
        %2205 = vmatprep.subr.mxu0 0.0
        %2206 = vmatpush1.msra.mxu0 0.0
        %2207 = vmatprep.subr.mxu0 0.0
        %2208 = vmatpush1.msra.mxu0 0.0
        %2209 = vmatprep.subr.mxu0 0.0
        %2210 = vmatpush1.msra.mxu0 0.0
        %2211 = vmatprep.subr.mxu0 0.0
        %2212 = vmatpush1.msra.mxu0 0.0
        %2213 = vmatprep.subr.mxu0 0.0
        %2214 = vmatpush1.msra.mxu0 0.0
        %2215 = vmatprep.subr.mxu0 0.0
        %2216 = vmatpush1.msra.mxu0 0.0
        %2217 = vmatprep.subr.mxu0 0.0
        %2218 = vmatpush1.msra.mxu0 0.0
        %2219 = vmatprep.subr.mxu0 0.0
        %2220 = vmatpush1.msra.mxu0 0.0
        %2221 = vmatprep.subr.mxu0 0.0
        %2222 = vmatpush1.msra.mxu0 0.0
        %2223 = vmatprep.subr.mxu0 0.0
        %2224 = vmatpush1.msra.mxu0 0.0
        %2225 = vmatprep.subr.mxu0 0.0
        %2226 = vmatpush1.msra.mxu0 0.0
        %2227 = vmatprep.subr.mxu0 0.0
        %2228 = vmatpush1.msra.mxu0 0.0
        %2229 = vmatprep.subr.mxu0 0.0
        %2230 = vmatpush1.msra.mxu0 0.0
        %2231 = vmatprep.subr.mxu0 0.0
        %2232 = vmatpush1.msra.mxu0 0.0
        %2233 = vmatprep.subr.mxu0 0.0
        %2234 = vmatpush1.msra.mxu0 0.0
        %2235 = vmatprep.mubr.f32.mxu0 0.0
        %v2236 = vand.u32 %v1741, 4294901760
        %2237 = vmatmul.mubr.f32.gmra.mrb[0].mxu0 %v2236
        %v2238 = vpop.f32.mrb[0].mxu0
        %v2239 = vadd.f32 %v2160, %v2238
        %v2240 = vpop.f32.mrb[0].mxu0
        %2241 = vmatprep.mubr.f32.mxu0 0.0
        %v2242 = vand.u32 %v1744, 4294901760
        %2243 = vmatmul.mubr.f32.gmra.mrb[0].mxu0 %v2242
        %v2244 = vpop.f32.mrb[0].mxu0
        %v2245 = vadd.f32 %v2166, %v2244
        %v2246 = vpop.f32.mrb[0].mxu0
        %2247 = vdwg.mxu0
        %v2249 = vsel %vm209, %v200, 0
        %v2252 = vsel %vm209, %v201, 0
        %v2255 = vsel %vm209, %v202, 0
        %v2258 = vsel %vm209, %v203, 0
        %2260 = vmatprep.subr.mxu0 0.0
        %v2261 = vand.u32 %v2239, 4294901760
        %2262 = vmatpush1.msra.mxu0 %v2261
        %2263 = vmatprep.subr.mxu0 0.0
        %v2264 = vand.u32 %v2245, 4294901760
        %2265 = vmatpush1.msra.mxu0 %v2264
        %2266 = vmatprep.subr.mxu0 0.0
        %2267 = vmatpush1.msra.mxu0 0.0
        %2268 = vmatprep.subr.mxu0 0.0
        %2269 = vmatpush1.msra.mxu0 0.0
        %2270 = vmatprep.subr.mxu0 0.0
        %2271 = vmatpush1.msra.mxu0 0.0
        %2272 = vmatprep.subr.mxu0 0.0
        %2273 = vmatpush1.msra.mxu0 0.0
        %2274 = vmatprep.subr.mxu0 0.0
        %2275 = vmatpush1.msra.mxu0 0.0
        %2276 = vmatprep.subr.mxu0 0.0
        %2277 = vmatpush1.msra.mxu0 0.0
        %2278 = vmatprep.subr.mxu0 0.0
        %2279 = vmatpush1.msra.mxu0 0.0
        %2280 = vmatprep.subr.mxu0 0.0
        %2281 = vmatpush1.msra.mxu0 0.0
        %2282 = vmatprep.subr.mxu0 0.0
        %2283 = vmatpush1.msra.mxu0 0.0
        %2284 = vmatprep.subr.mxu0 0.0
        %2285 = vmatpush1.msra.mxu0 0.0
        %2286 = vmatprep.subr.mxu0 0.0
        %2287 = vmatpush1.msra.mxu0 0.0
        %2288 = vmatprep.subr.mxu0 0.0
        %2289 = vmatpush1.msra.mxu0 0.0
        %2290 = vmatprep.subr.mxu0 0.0
        %2291 = vmatpush1.msra.mxu0 0.0
        %2292 = vmatprep.subr.mxu0 0.0
        %2293 = vmatpush1.msra.mxu0 0.0
        %2294 = vmatprep.subr.mxu0 0.0
        %2295 = vmatpush1.msra.mxu0 0.0
        %2296 = vmatprep.subr.mxu0 0.0
        %2297 = vmatpush1.msra.mxu0 0.0
        %2298 = vmatprep.subr.mxu0 0.0
        %2299 = vmatpush1.msra.mxu0 0.0
        %2300 = vmatprep.subr.mxu0 0.0
        %2301 = vmatpush1.msra.mxu0 0.0
        %2302 = vmatprep.subr.mxu0 0.0
        %2303 = vmatpush1.msra.mxu0 0.0
        %2304 = vmatprep.subr.mxu0 0.0
        %2305 = vmatpush1.msra.mxu0 0.0
        %2306 = vmatprep.subr.mxu0 0.0
        %2307 = vmatpush1.msra.mxu0 0.0
        %2308 = vmatprep.subr.mxu0 0.0
        %2309 = vmatpush1.msra.mxu0 0.0
        %2310 = vmatprep.subr.mxu0 0.0
        %2311 = vmatpush1.msra.mxu0 0.0
        %2312 = vmatprep.subr.mxu0 0.0
        %2313 = vmatpush1.msra.mxu0 0.0
        %2314 = vmatprep.subr.mxu0 0.0
        %2315 = vmatpush1.msra.mxu0 0.0
        %2316 = vmatprep.subr.mxu0 0.0
        %2317 = vmatpush1.msra.mxu0 0.0
        %2318 = vmatprep.subr.mxu0 0.0
        %2319 = vmatpush1.msra.mxu0 0.0
        %2320 = vmatprep.subr.mxu0 0.0
        %2321 = vmatpush1.msra.mxu0 0.0
        %2322 = vmatprep.subr.mxu0 0.0
        %2323 = vmatpush1.msra.mxu0 0.0
        %2324 = vmatprep.subr.mxu0 0.0
        %2325 = vmatpush1.msra.mxu0 0.0
        %2326 = vmatprep.mubr.f32.mxu0 0.0
        %v2327 = vand.u32 %v2249, 4294901760
        %v2328 = vsub.f32 %v2249, %v2327
        %v2329 = vand.u32 %v2328, 4294901760
        %v2330 = vsub.f32 %v2328, %v2329
        %v2331 = vand.u32 %v2330, 4294901760
        %2332 = vmatmul.mubr.f32.gmra.mrb[0].mxu0 %v2331
        %v2333 = vpop.f32.mrb[0].mxu0
        %v2334 = vadd.f32 0.0, %v2333
        %v2335 = vpop.f32.mrb[0].mxu0
        %2336 = vmatprep.mubr.f32.mxu0 0.0
        %v2337 = vand.u32 %v2252, 4294901760
        %v2338 = vsub.f32 %v2252, %v2337
        %v2339 = vand.u32 %v2338, 4294901760
        %v2340 = vsub.f32 %v2338, %v2339
        %v2341 = vand.u32 %v2340, 4294901760
        %2342 = vmatmul.mubr.f32.gmra.mrb[0].mxu0 %v2341
        %v2343 = vpop.f32.mrb[0].mxu0
        %v2344 = vadd.f32 0.0, %v2343
        %v2345 = vpop.f32.mrb[0].mxu0
        %2346 = vmatprep.mubr.f32.mxu0 0.0
        %v2347 = vand.u32 %v2255, 4294901760
        %v2348 = vsub.f32 %v2255, %v2347
        %v2349 = vand.u32 %v2348, 4294901760
        %v2350 = vsub.f32 %v2348, %v2349
        %v2351 = vand.u32 %v2350, 4294901760
        %2352 = vmatmul.mubr.f32.gmra.mrb[0].mxu0 %v2351
        %v2353 = vpop.f32.mrb[0].mxu0
        %v2354 = vadd.f32 0.0, %v2353
        %v2355 = vpop.f32.mrb[0].mxu0
        %2356 = vmatprep.mubr.f32.mxu0 0.0
        %v2357 = vand.u32 %v2258, 4294901760
        %v2358 = vsub.f32 %v2258, %v2357
        %v2359 = vand.u32 %v2358, 4294901760
        %v2360 = vsub.f32 %v2358, %v2359
        %v2361 = vand.u32 %v2360, 4294901760
        %2362 = vmatmul.mubr.f32.gmra.mrb[0].mxu0 %v2361
        %v2363 = vpop.f32.mrb[0].mxu0
        %v2364 = vadd.f32 0.0, %v2363
        %v2365 = vpop.f32.mrb[0].mxu0
        %2366 = vdwg.mxu0
        %2367 = vmatprep.subr.mxu0 0.0
        %v2368 = vand.u32 %v2239, 4294901760
        %v2369 = vsub.f32 %v2239, %v2368
        %v2370 = vand.u32 %v2369, 4294901760
        %v2371 = vsub.f32 %v2369, %v2370
        %v2372 = vand.u32 %v2371, 4294901760
        %2373 = vmatpush1.msra.mxu0 %v2372
        %2374 = vmatprep.subr.mxu0 0.0
        %v2375 = vand.u32 %v2245, 4294901760
        %v2376 = vsub.f32 %v2245, %v2375
        %v2377 = vand.u32 %v2376, 4294901760
        %v2378 = vsub.f32 %v2376, %v2377
        %v2379 = vand.u32 %v2378, 4294901760
        %2380 = vmatpush1.msra.mxu0 %v2379
        %2381 = vmatprep.subr.mxu0 0.0
        %2382 = vmatpush1.msra.mxu0 0.0
        %2383 = vmatprep.subr.mxu0 0.0
        %2384 = vmatpush1.msra.mxu0 0.0
        %2385 = vmatprep.subr.mxu0 0.0
        %2386 = vmatpush1.msra.mxu0 0.0
        %2387 = vmatprep.subr.mxu0 0.0
        %2388 = vmatpush1.msra.mxu0 0.0
        %2389 = vmatprep.subr.mxu0 0.0
        %2390 = vmatpush1.msra.mxu0 0.0
        %2391 = vmatprep.subr.mxu0 0.0
        %2392 = vmatpush1.msra.mxu0 0.0
        %2393 = vmatprep.subr.mxu0 0.0
        %2394 = vmatpush1.msra.mxu0 0.0
        %2395 = vmatprep.subr.mxu0 0.0
        %2396 = vmatpush1.msra.mxu0 0.0
        %2397 = vmatprep.subr.mxu0 0.0
        %2398 = vmatpush1.msra.mxu0 0.0
        %2399 = vmatprep.subr.mxu0 0.0
        %2400 = vmatpush1.msra.mxu0 0.0
        %2401 = vmatprep.subr.mxu0 0.0
        %2402 = vmatpush1.msra.mxu0 0.0
        %2403 = vmatprep.subr.mxu0 0.0
        %2404 = vmatpush1.msra.mxu0 0.0
        %2405 = vmatprep.subr.mxu0 0.0
        %2406 = vmatpush1.msra.mxu0 0.0
        %2407 = vmatprep.subr.mxu0 0.0
        %2408 = vmatpush1.msra.mxu0 0.0
        %2409 = vmatprep.subr.mxu0 0.0
        %2410 = vmatpush1.msra.mxu0 0.0
        %2411 = vmatprep.subr.mxu0 0.0
        %2412 = vmatpush1.msra.mxu0 0.0
        %2413 = vmatprep.subr.mxu0 0.0
        %2414 = vmatpush1.msra.mxu0 0.0
        %2415 = vmatprep.subr.mxu0 0.0
        %2416 = vmatpush1.msra.mxu0 0.0
        %2417 = vmatprep.subr.mxu0 0.0
        %2418 = vmatpush1.msra.mxu0 0.0
        %2419 = vmatprep.subr.mxu0 0.0
        %2420 = vmatpush1.msra.mxu0 0.0
        %2421 = vmatprep.subr.mxu0 0.0
        %2422 = vmatpush1.msra.mxu0 0.0
        %2423 = vmatprep.subr.mxu0 0.0
        %2424 = vmatpush1.msra.mxu0 0.0
        %2425 = vmatprep.subr.mxu0 0.0
        %2426 = vmatpush1.msra.mxu0 0.0
        %2427 = vmatprep.subr.mxu0 0.0
        %2428 = vmatpush1.msra.mxu0 0.0
        %2429 = vmatprep.subr.mxu0 0.0
        %2430 = vmatpush1.msra.mxu0 0.0
        %2431 = vmatprep.subr.mxu0 0.0
        %2432 = vmatpush1.msra.mxu0 0.0
        %2433 = vmatprep.subr.mxu0 0.0
        %2434 = vmatpush1.msra.mxu0 0.0
        %2435 = vmatprep.subr.mxu0 0.0
        %2436 = vmatpush1.msra.mxu0 0.0
        %2437 = vmatprep.subr.mxu0 0.0
        %2438 = vmatpush1.msra.mxu0 0.0
        %2439 = vmatprep.subr.mxu0 0.0
        %2440 = vmatpush1.msra.mxu0 0.0
        %2441 = vmatprep.mubr.f32.mxu0 0.0
        %v2442 = vand.u32 %v2249, 4294901760
        %2443 = vmatmul.mubr.f32.gmra.mrb[0].mxu0 %v2442
        %v2444 = vpop.f32.mrb[0].mxu0
        %v2445 = vadd.f32 %v2334, %v2444
        %v2446 = vpop.f32.mrb[0].mxu0
        %2447 = vmatprep.mubr.f32.mxu0 0.0
        %v2448 = vand.u32 %v2252, 4294901760
        %2449 = vmatmul.mubr.f32.gmra.mrb[0].mxu0 %v2448
        %v2450 = vpop.f32.mrb[0].mxu0
        %v2451 = vadd.f32 %v2344, %v2450
        %v2452 = vpop.f32.mrb[0].mxu0
        %2453 = vmatprep.mubr.f32.mxu0 0.0
        %v2454 = vand.u32 %v2255, 4294901760
        %2455 = vmatmul.mubr.f32.gmra.mrb[0].mxu0 %v2454
        %v2456 = vpop.f32.mrb[0].mxu0
        %v2457 = vadd.f32 %v2354, %v2456
        %v2458 = vpop.f32.mrb[0].mxu0
        %2459 = vmatprep.mubr.f32.mxu0 0.0
        %v2460 = vand.u32 %v2258, 4294901760
        %2461 = vmatmul.mubr.f32.gmra.mrb[0].mxu0 %v2460
        %v2462 = vpop.f32.mrb[0].mxu0
        %v2463 = vadd.f32 %v2364, %v2462
        %v2464 = vpop.f32.mrb[0].mxu0
        %2465 = vdwg.mxu0
        %2466 = vmatprep.subr.mxu0 0.0
        %v2467 = vand.u32 %v2239, 4294901760
        %v2468 = vsub.f32 %v2239, %v2467
        %2469 = vmatpush1.msra.mxu0 %v2468
        %2470 = vmatprep.subr.mxu0 0.0
        %v2471 = vand.u32 %v2245, 4294901760
        %v2472 = vsub.f32 %v2245, %v2471
        %2473 = vmatpush1.msra.mxu0 %v2472
        %2474 = vmatprep.subr.mxu0 0.0
        %2475 = vmatpush1.msra.mxu0 0.0
        %2476 = vmatprep.subr.mxu0 0.0
        %2477 = vmatpush1.msra.mxu0 0.0
        %2478 = vmatprep.subr.mxu0 0.0
        %2479 = vmatpush1.msra.mxu0 0.0
        %2480 = vmatprep.subr.mxu0 0.0
        %2481 = vmatpush1.msra.mxu0 0.0
        %2482 = vmatprep.subr.mxu0 0.0
        %2483 = vmatpush1.msra.mxu0 0.0
        %2484 = vmatprep.subr.mxu0 0.0
        %2485 = vmatpush1.msra.mxu0 0.0
        %2486 = vmatprep.subr.mxu0 0.0
        %2487 = vmatpush1.msra.mxu0 0.0
        %2488 = vmatprep.subr.mxu0 0.0
        %2489 = vmatpush1.msra.mxu0 0.0
        %2490 = vmatprep.subr.mxu0 0.0
        %2491 = vmatpush1.msra.mxu0 0.0
        %2492 = vmatprep.subr.mxu0 0.0
        %2493 = vmatpush1.msra.mxu0 0.0
        %2494 = vmatprep.subr.mxu0 0.0
        %2495 = vmatpush1.msra.mxu0 0.0
        %2496 = vmatprep.subr.mxu0 0.0
        %2497 = vmatpush1.msra.mxu0 0.0
        %2498 = vmatprep.subr.mxu0 0.0
        %2499 = vmatpush1.msra.mxu0 0.0
        %2500 = vmatprep.subr.mxu0 0.0
        %2501 = vmatpush1.msra.mxu0 0.0
        %2502 = vmatprep.subr.mxu0 0.0
        %2503 = vmatpush1.msra.mxu0 0.0
        %2504 = vmatprep.subr.mxu0 0.0
        %2505 = vmatpush1.msra.mxu0 0.0
        %2506 = vmatprep.subr.mxu0 0.0
        %2507 = vmatpush1.msra.mxu0 0.0
        %2508 = vmatprep.subr.mxu0 0.0
        %2509 = vmatpush1.msra.mxu0 0.0
        %2510 = vmatprep.subr.mxu0 0.0
        %2511 = vmatpush1.msra.mxu0 0.0
        %2512 = vmatprep.subr.mxu0 0.0
        %2513 = vmatpush1.msra.mxu0 0.0
        %2514 = vmatprep.subr.mxu0 0.0
        %2515 = vmatpush1.msra.mxu0 0.0
        %2516 = vmatprep.subr.mxu0 0.0
        %2517 = vmatpush1.msra.mxu0 0.0
        %2518 = vmatprep.subr.mxu0 0.0
        %2519 = vmatpush1.msra.mxu0 0.0
        %2520 = vmatprep.subr.mxu0 0.0
        %2521 = vmatpush1.msra.mxu0 0.0
        %2522 = vmatprep.subr.mxu0 0.0
        %2523 = vmatpush1.msra.mxu0 0.0
        %2524 = vmatprep.subr.mxu0 0.0
        %2525 = vmatpush1.msra.mxu0 0.0
        %2526 = vmatprep.subr.mxu0 0.0
        %2527 = vmatpush1.msra.mxu0 0.0
        %2528 = vmatprep.subr.mxu0 0.0
        %2529 = vmatpush1.msra.mxu0 0.0
        %2530 = vmatprep.subr.mxu0 0.0
        %2531 = vmatpush1.msra.mxu0 0.0
        %2532 = vmatprep.subr.mxu0 0.0
        %2533 = vmatpush1.msra.mxu0 0.0
        %2534 = vmatprep.mubr.f32.mxu0 0.0
        %v2535 = vand.u32 %v2249, 4294901760
        %v2536 = vsub.f32 %v2249, %v2535
        %2537 = vmatmul.mubr.f32.gmra.mrb[0].mxu0 %v2536
        %v2538 = vpop.f32.mrb[0].mxu0
        %v2539 = vadd.f32 %v2445, %v2538
        %v2540 = vpop.f32.mrb[0].mxu0
        %2541 = vmatprep.mubr.f32.mxu0 0.0
        %v2542 = vand.u32 %v2252, 4294901760
        %v2543 = vsub.f32 %v2252, %v2542
        %2544 = vmatmul.mubr.f32.gmra.mrb[0].mxu0 %v2543
        %v2545 = vpop.f32.mrb[0].mxu0
        %v2546 = vadd.f32 %v2451, %v2545
        %v2547 = vpop.f32.mrb[0].mxu0
        %2548 = vmatprep.mubr.f32.mxu0 0.0
        %v2549 = vand.u32 %v2255, 4294901760
        %v2550 = vsub.f32 %v2255, %v2549
        %2551 = vmatmul.mubr.f32.gmra.mrb[0].mxu0 %v2550
        %v2552 = vpop.f32.mrb[0].mxu0
        %v2553 = vadd.f32 %v2457, %v2552
        %v2554 = vpop.f32.mrb[0].mxu0
        %2555 = vmatprep.mubr.f32.mxu0 0.0
        %v2556 = vand.u32 %v2258, 4294901760
        %v2557 = vsub.f32 %v2258, %v2556
        %2558 = vmatmul.mubr.f32.gmra.mrb[0].mxu0 %v2557
        %v2559 = vpop.f32.mrb[0].mxu0
        %v2560 = vadd.f32 %v2463, %v2559
        %v2561 = vpop.f32.mrb[0].mxu0
        %2562 = vdwg.mxu0
        %2563 = vmatprep.subr.mxu0 0.0
        %v2564 = vand.u32 %v2239, 4294901760
        %2565 = vmatpush1.msra.mxu0 %v2564
        %2566 = vmatprep.subr.mxu0 0.0
        %v2567 = vand.u32 %v2245, 4294901760
        %2568 = vmatpush1.msra.mxu0 %v2567
        %2569 = vmatprep.subr.mxu0 0.0
        %2570 = vmatpush1.msra.mxu0 0.0
        %2571 = vmatprep.subr.mxu0 0.0
        %2572 = vmatpush1.msra.mxu0 0.0
        %2573 = vmatprep.subr.mxu0 0.0
        %2574 = vmatpush1.msra.mxu0 0.0
        %2575 = vmatprep.subr.mxu0 0.0
        %2576 = vmatpush1.msra.mxu0 0.0
        %2577 = vmatprep.subr.mxu0 0.0
        %2578 = vmatpush1.msra.mxu0 0.0
        %2579 = vmatprep.subr.mxu0 0.0
        %2580 = vmatpush1.msra.mxu0 0.0
        %2581 = vmatprep.subr.mxu0 0.0
        %2582 = vmatpush1.msra.mxu0 0.0
        %2583 = vmatprep.subr.mxu0 0.0
        %2584 = vmatpush1.msra.mxu0 0.0
        %2585 = vmatprep.subr.mxu0 0.0
        %2586 = vmatpush1.msra.mxu0 0.0
        %2587 = vmatprep.subr.mxu0 0.0
        %2588 = vmatpush1.msra.mxu0 0.0
        %2589 = vmatprep.subr.mxu0 0.0
        %2590 = vmatpush1.msra.mxu0 0.0
        %2591 = vmatprep.subr.mxu0 0.0
        %2592 = vmatpush1.msra.mxu0 0.0
        %2593 = vmatprep.subr.mxu0 0.0
        %2594 = vmatpush1.msra.mxu0 0.0
        %2595 = vmatprep.subr.mxu0 0.0
        %2596 = vmatpush1.msra.mxu0 0.0
        %2597 = vmatprep.subr.mxu0 0.0
        %2598 = vmatpush1.msra.mxu0 0.0
        %2599 = vmatprep.subr.mxu0 0.0
        %2600 = vmatpush1.msra.mxu0 0.0
        %2601 = vmatprep.subr.mxu0 0.0
        %2602 = vmatpush1.msra.mxu0 0.0
        %2603 = vmatprep.subr.mxu0 0.0
        %2604 = vmatpush1.msra.mxu0 0.0
        %2605 = vmatprep.subr.mxu0 0.0
        %2606 = vmatpush1.msra.mxu0 0.0
        %2607 = vmatprep.subr.mxu0 0.0
        %2608 = vmatpush1.msra.mxu0 0.0
        %2609 = vmatprep.subr.mxu0 0.0
        %2610 = vmatpush1.msra.mxu0 0.0
        %2611 = vmatprep.subr.mxu0 0.0
        %2612 = vmatpush1.msra.mxu0 0.0
        %2613 = vmatprep.subr.mxu0 0.0
        %2614 = vmatpush1.msra.mxu0 0.0
        %2615 = vmatprep.subr.mxu0 0.0
        %2616 = vmatpush1.msra.mxu0 0.0
        %2617 = vmatprep.subr.mxu0 0.0
        %2618 = vmatpush1.msra.mxu0 0.0
        %2619 = vmatprep.subr.mxu0 0.0
        %2620 = vmatpush1.msra.mxu0 0.0
        %2621 = vmatprep.subr.mxu0 0.0
        %2622 = vmatpush1.msra.mxu0 0.0
        %2623 = vmatprep.subr.mxu0 0.0
        %2624 = vmatpush1.msra.mxu0 0.0
        %2625 = vmatprep.subr.mxu0 0.0
        %2626 = vmatpush1.msra.mxu0 0.0
        %2627 = vmatprep.subr.mxu0 0.0
        %2628 = vmatpush1.msra.mxu0 0.0
        %2629 = vmatprep.mubr.f32.mxu0 0.0
        %v2630 = vand.u32 %v2249, 4294901760
        %v2631 = vsub.f32 %v2249, %v2630
        %v2632 = vand.u32 %v2631, 4294901760
        %2633 = vmatmul.mubr.f32.gmra.mrb[0].mxu0 %v2632
        %v2634 = vpop.f32.mrb[0].mxu0
        %v2635 = vadd.f32 %v2539, %v2634
        %v2636 = vpop.f32.mrb[0].mxu0
        %2637 = vmatprep.mubr.f32.mxu0 0.0
        %v2638 = vand.u32 %v2252, 4294901760
        %v2639 = vsub.f32 %v2252, %v2638
        %v2640 = vand.u32 %v2639, 4294901760
        %2641 = vmatmul.mubr.f32.gmra.mrb[0].mxu0 %v2640
        %v2642 = vpop.f32.mrb[0].mxu0
        %v2643 = vadd.f32 %v2546, %v2642
        %v2644 = vpop.f32.mrb[0].mxu0
        %2645 = vmatprep.mubr.f32.mxu0 0.0
        %v2646 = vand.u32 %v2255, 4294901760
        %v2647 = vsub.f32 %v2255, %v2646
        %v2648 = vand.u32 %v2647, 4294901760
        %2649 = vmatmul.mubr.f32.gmra.mrb[0].mxu0 %v2648
        %v2650 = vpop.f32.mrb[0].mxu0
        %v2651 = vadd.f32 %v2553, %v2650
        %v2652 = vpop.f32.mrb[0].mxu0
        %2653 = vmatprep.mubr.f32.mxu0 0.0
        %v2654 = vand.u32 %v2258, 4294901760
        %v2655 = vsub.f32 %v2258, %v2654
        %v2656 = vand.u32 %v2655, 4294901760
        %2657 = vmatmul.mubr.f32.gmra.mrb[0].mxu0 %v2656
        %v2658 = vpop.f32.mrb[0].mxu0
        %v2659 = vadd.f32 %v2560, %v2658
        %v2660 = vpop.f32.mrb[0].mxu0
        %2661 = vdwg.mxu0
        %2662 = vmatprep.subr.mxu0 0.0
        %v2663 = vand.u32 %v2239, 4294901760
        %v2664 = vsub.f32 %v2239, %v2663
        %v2665 = vand.u32 %v2664, 4294901760
        %2666 = vmatpush1.msra.mxu0 %v2665
        %2667 = vmatprep.subr.mxu0 0.0
        %v2668 = vand.u32 %v2245, 4294901760
        %v2669 = vsub.f32 %v2245, %v2668
        %v2670 = vand.u32 %v2669, 4294901760
        %2671 = vmatpush1.msra.mxu0 %v2670
        %2672 = vmatprep.subr.mxu0 0.0
        %2673 = vmatpush1.msra.mxu0 0.0
        %2674 = vmatprep.subr.mxu0 0.0
        %2675 = vmatpush1.msra.mxu0 0.0
        %2676 = vmatprep.subr.mxu0 0.0
        %2677 = vmatpush1.msra.mxu0 0.0
        %2678 = vmatprep.subr.mxu0 0.0
        %2679 = vmatpush1.msra.mxu0 0.0
        %2680 = vmatprep.subr.mxu0 0.0
        %2681 = vmatpush1.msra.mxu0 0.0
        %2682 = vmatprep.subr.mxu0 0.0
        %2683 = vmatpush1.msra.mxu0 0.0
        %2684 = vmatprep.subr.mxu0 0.0
        %2685 = vmatpush1.msra.mxu0 0.0
        %2686 = vmatprep.subr.mxu0 0.0
        %2687 = vmatpush1.msra.mxu0 0.0
        %2688 = vmatprep.subr.mxu0 0.0
        %2689 = vmatpush1.msra.mxu0 0.0
        %2690 = vmatprep.subr.mxu0 0.0
        %2691 = vmatpush1.msra.mxu0 0.0
        %2692 = vmatprep.subr.mxu0 0.0
        %2693 = vmatpush1.msra.mxu0 0.0
        %2694 = vmatprep.subr.mxu0 0.0
        %2695 = vmatpush1.msra.mxu0 0.0
        %2696 = vmatprep.subr.mxu0 0.0
        %2697 = vmatpush1.msra.mxu0 0.0
        %2698 = vmatprep.subr.mxu0 0.0
        %2699 = vmatpush1.msra.mxu0 0.0
        %2700 = vmatprep.subr.mxu0 0.0
        %2701 = vmatpush1.msra.mxu0 0.0
        %2702 = vmatprep.subr.mxu0 0.0
        %2703 = vmatpush1.msra.mxu0 0.0
        %2704 = vmatprep.subr.mxu0 0.0
        %2705 = vmatpush1.msra.mxu0 0.0
        %2706 = vmatprep.subr.mxu0 0.0
        %2707 = vmatpush1.msra.mxu0 0.0
        %2708 = vmatprep.subr.mxu0 0.0
        %2709 = vmatpush1.msra.mxu0 0.0
        %2710 = vmatprep.subr.mxu0 0.0
        %2711 = vmatpush1.msra.mxu0 0.0
        %2712 = vmatprep.subr.mxu0 0.0
        %2713 = vmatpush1.msra.mxu0 0.0
        %2714 = vmatprep.subr.mxu0 0.0
        %2715 = vmatpush1.msra.mxu0 0.0
        %2716 = vmatprep.subr.mxu0 0.0
        %2717 = vmatpush1.msra.mxu0 0.0
        %2718 = vmatprep.subr.mxu0 0.0
        %2719 = vmatpush1.msra.mxu0 0.0
        %2720 = vmatprep.subr.mxu0 0.0
        %2721 = vmatpush1.msra.mxu0 0.0
        %2722 = vmatprep.subr.mxu0 0.0
        %2723 = vmatpush1.msra.mxu0 0.0
        %2724 = vmatprep.subr.mxu0 0.0
        %2725 = vmatpush1.msra.mxu0 0.0
        %2726 = vmatprep.subr.mxu0 0.0
        %2727 = vmatpush1.msra.mxu0 0.0
        %2728 = vmatprep.subr.mxu0 0.0
        %2729 = vmatpush1.msra.mxu0 0.0
        %2730 = vmatprep.subr.mxu0 0.0
        %2731 = vmatpush1.msra.mxu0 0.0
        %2732 = vmatprep.mubr.f32.mxu0 0.0
        %v2733 = vand.u32 %v2249, 4294901760
        %2734 = vmatmul.mubr.f32.gmra.mrb[0].mxu0 %v2733
        %v2735 = vpop.f32.mrb[0].mxu0
        %v2736 = vadd.f32 %v2635, %v2735
        %v2737 = vpop.f32.mrb[0].mxu0
        %2738 = vmatprep.mubr.f32.mxu0 0.0
        %v2739 = vand.u32 %v2252, 4294901760
        %2740 = vmatmul.mubr.f32.gmra.mrb[0].mxu0 %v2739
        %v2741 = vpop.f32.mrb[0].mxu0
        %v2742 = vadd.f32 %v2643, %v2741
        %v2743 = vpop.f32.mrb[0].mxu0
        %2744 = vmatprep.mubr.f32.mxu0 0.0
        %v2745 = vand.u32 %v2255, 4294901760
        %2746 = vmatmul.mubr.f32.gmra.mrb[0].mxu0 %v2745
        %v2747 = vpop.f32.mrb[0].mxu0
        %v2748 = vadd.f32 %v2651, %v2747
        %v2749 = vpop.f32.mrb[0].mxu0
        %2750 = vmatprep.mubr.f32.mxu0 0.0
        %v2751 = vand.u32 %v2258, 4294901760
        %2752 = vmatmul.mubr.f32.gmra.mrb[0].mxu0 %v2751
        %v2753 = vpop.f32.mrb[0].mxu0
        %v2754 = vadd.f32 %v2659, %v2753
        %v2755 = vpop.f32.mrb[0].mxu0
        %2756 = vdwg.mxu0
        %2757 = vmatprep.subr.mxu0 0.0
        %v2758 = vand.u32 %v2239, 4294901760
        %2759 = vmatpush1.msra.mxu0 %v2758
        %2760 = vmatprep.subr.mxu0 0.0
        %v2761 = vand.u32 %v2245, 4294901760
        %2762 = vmatpush1.msra.mxu0 %v2761
        %2763 = vmatprep.subr.mxu0 0.0
        %2764 = vmatpush1.msra.mxu0 0.0
        %2765 = vmatprep.subr.mxu0 0.0
        %2766 = vmatpush1.msra.mxu0 0.0
        %2767 = vmatprep.subr.mxu0 0.0
        %2768 = vmatpush1.msra.mxu0 0.0
        %2769 = vmatprep.subr.mxu0 0.0
        %2770 = vmatpush1.msra.mxu0 0.0
        %2771 = vmatprep.subr.mxu0 0.0
        %2772 = vmatpush1.msra.mxu0 0.0
        %2773 = vmatprep.subr.mxu0 0.0
        %2774 = vmatpush1.msra.mxu0 0.0
        %2775 = vmatprep.subr.mxu0 0.0
        %2776 = vmatpush1.msra.mxu0 0.0
        %2777 = vmatprep.subr.mxu0 0.0
        %2778 = vmatpush1.msra.mxu0 0.0
        %2779 = vmatprep.subr.mxu0 0.0
        %2780 = vmatpush1.msra.mxu0 0.0
        %2781 = vmatprep.subr.mxu0 0.0
        %2782 = vmatpush1.msra.mxu0 0.0
        %2783 = vmatprep.subr.mxu0 0.0
        %2784 = vmatpush1.msra.mxu0 0.0
        %2785 = vmatprep.subr.mxu0 0.0
        %2786 = vmatpush1.msra.mxu0 0.0
        %2787 = vmatprep.subr.mxu0 0.0
        %2788 = vmatpush1.msra.mxu0 0.0
        %2789 = vmatprep.subr.mxu0 0.0
        %2790 = vmatpush1.msra.mxu0 0.0
        %2791 = vmatprep.subr.mxu0 0.0
        %2792 = vmatpush1.msra.mxu0 0.0
        %2793 = vmatprep.subr.mxu0 0.0
        %2794 = vmatpush1.msra.mxu0 0.0
        %2795 = vmatprep.subr.mxu0 0.0
        %2796 = vmatpush1.msra.mxu0 0.0
        %2797 = vmatprep.subr.mxu0 0.0
        %2798 = vmatpush1.msra.mxu0 0.0
        %2799 = vmatprep.subr.mxu0 0.0
        %2800 = vmatpush1.msra.mxu0 0.0
        %2801 = vmatprep.subr.mxu0 0.0
        %2802 = vmatpush1.msra.mxu0 0.0
        %2803 = vmatprep.subr.mxu0 0.0
        %2804 = vmatpush1.msra.mxu0 0.0
        %2805 = vmatprep.subr.mxu0 0.0
        %2806 = vmatpush1.msra.mxu0 0.0
        %2807 = vmatprep.subr.mxu0 0.0
        %2808 = vmatpush1.msra.mxu0 0.0
        %2809 = vmatprep.subr.mxu0 0.0
        %2810 = vmatpush1.msra.mxu0 0.0
        %2811 = vmatprep.subr.mxu0 0.0
        %2812 = vmatpush1.msra.mxu0 0.0
        %2813 = vmatprep.subr.mxu0 0.0
        %2814 = vmatpush1.msra.mxu0 0.0
        %2815 = vmatprep.subr.mxu0 0.0
        %2816 = vmatpush1.msra.mxu0 0.0
        %2817 = vmatprep.subr.mxu0 0.0
        %2818 = vmatpush1.msra.mxu0 0.0
        %2819 = vmatprep.subr.mxu0 0.0
        %2820 = vmatpush1.msra.mxu0 0.0
        %2821 = vmatprep.subr.mxu0 0.0
        %2822 = vmatpush1.msra.mxu0 0.0
        %2823 = vmatprep.mubr.f32.mxu0 0.0
        %v2824 = vand.u32 %v2249, 4294901760
        %2825 = vmatmul.mubr.f32.gmra.mrb[0].mxu0 %v2824
        %v2826 = vpop.f32.mrb[0].mxu0
        %v2827 = vadd.f32 %v2736, %v2826
        %v2828 = vpop.f32.mrb[0].mxu0
        %2829 = vmatprep.mubr.f32.mxu0 0.0
        %v2830 = vand.u32 %v2252, 4294901760
        %2831 = vmatmul.mubr.f32.gmra.mrb[0].mxu0 %v2830
        %v2832 = vpop.f32.mrb[0].mxu0
        %v2833 = vadd.f32 %v2742, %v2832
        %v2834 = vpop.f32.mrb[0].mxu0
        %2835 = vmatprep.mubr.f32.mxu0 0.0
        %v2836 = vand.u32 %v2255, 4294901760
        %2837 = vmatmul.mubr.f32.gmra.mrb[0].mxu0 %v2836
        %v2838 = vpop.f32.mrb[0].mxu0
        %v2839 = vadd.f32 %v2748, %v2838
        %v2840 = vpop.f32.mrb[0].mxu0
        %2841 = vmatprep.mubr.f32.mxu0 0.0
        %v2842 = vand.u32 %v2258, 4294901760
        %2843 = vmatmul.mubr.f32.gmra.mrb[0].mxu0 %v2842
        %v2844 = vpop.f32.mrb[0].mxu0
        %v2845 = vadd.f32 %v2754, %v2844
        %v2846 = vpop.f32.mrb[0].mxu0
        %2847 = vdwg.mxu0
        %v2849 = vsel %vm209, %v187, 0
        %v2852 = vsel %vm209, %v188, 0
        %v2855 = vsel %vm209, %v189, 0
        %v2858 = vsel %vm209, %v190, 0
        %2860 = vmatprep.subr.mxu0 0.0
        %v2861 = vand.u32 %v1217, 4294901760
        %2862 = vmatpush1.msra.mxu0 %v2861
        %2863 = vmatprep.subr.mxu0 0.0
        %v2864 = vand.u32 %v1223, 4294901760
        %2865 = vmatpush1.msra.mxu0 %v2864
        %2866 = vmatprep.subr.mxu0 0.0
        %2867 = vmatpush1.msra.mxu0 0.0
        %2868 = vmatprep.subr.mxu0 0.0
        %2869 = vmatpush1.msra.mxu0 0.0
        %2870 = vmatprep.subr.mxu0 0.0
        %2871 = vmatpush1.msra.mxu0 0.0
        %2872 = vmatprep.subr.mxu0 0.0
        %2873 = vmatpush1.msra.mxu0 0.0
        %2874 = vmatprep.subr.mxu0 0.0
        %2875 = vmatpush1.msra.mxu0 0.0
        %2876 = vmatprep.subr.mxu0 0.0
        %2877 = vmatpush1.msra.mxu0 0.0
        %2878 = vmatprep.subr.mxu0 0.0
        %2879 = vmatpush1.msra.mxu0 0.0
        %2880 = vmatprep.subr.mxu0 0.0
        %2881 = vmatpush1.msra.mxu0 0.0
        %2882 = vmatprep.subr.mxu0 0.0
        %2883 = vmatpush1.msra.mxu0 0.0
        %2884 = vmatprep.subr.mxu0 0.0
        %2885 = vmatpush1.msra.mxu0 0.0
        %2886 = vmatprep.subr.mxu0 0.0
        %2887 = vmatpush1.msra.mxu0 0.0
        %2888 = vmatprep.subr.mxu0 0.0
        %2889 = vmatpush1.msra.mxu0 0.0
        %2890 = vmatprep.subr.mxu0 0.0
        %2891 = vmatpush1.msra.mxu0 0.0
        %2892 = vmatprep.subr.mxu0 0.0
        %2893 = vmatpush1.msra.mxu0 0.0
        %2894 = vmatprep.subr.mxu0 0.0
        %2895 = vmatpush1.msra.mxu0 0.0
        %2896 = vmatprep.subr.mxu0 0.0
        %2897 = vmatpush1.msra.mxu0 0.0
        %2898 = vmatprep.subr.mxu0 0.0
        %2899 = vmatpush1.msra.mxu0 0.0
        %2900 = vmatprep.subr.mxu0 0.0
        %2901 = vmatpush1.msra.mxu0 0.0
        %2902 = vmatprep.subr.mxu0 0.0
        %2903 = vmatpush1.msra.mxu0 0.0
        %2904 = vmatprep.subr.mxu0 0.0
        %2905 = vmatpush1.msra.mxu0 0.0
        %2906 = vmatprep.subr.mxu0 0.0
        %2907 = vmatpush1.msra.mxu0 0.0
        %2908 = vmatprep.subr.mxu0 0.0
        %2909 = vmatpush1.msra.mxu0 0.0
        %2910 = vmatprep.subr.mxu0 0.0
        %2911 = vmatpush1.msra.mxu0 0.0
        %2912 = vmatprep.subr.mxu0 0.0
        %2913 = vmatpush1.msra.mxu0 0.0
        %2914 = vmatprep.subr.mxu0 0.0
        %2915 = vmatpush1.msra.mxu0 0.0
        %2916 = vmatprep.subr.mxu0 0.0
        %2917 = vmatpush1.msra.mxu0 0.0
        %2918 = vmatprep.subr.mxu0 0.0
        %2919 = vmatpush1.msra.mxu0 0.0
        %2920 = vmatprep.subr.mxu0 0.0
        %2921 = vmatpush1.msra.mxu0 0.0
        %2922 = vmatprep.subr.mxu0 0.0
        %2923 = vmatpush1.msra.mxu0 0.0
        %2924 = vmatprep.subr.mxu0 0.0
        %2925 = vmatpush1.msra.mxu0 0.0
        %2926 = vmatprep.mubr.f32.mxu0 0.0
        %v2927 = vand.u32 %v2849, 4294901760
        %v2928 = vsub.f32 %v2849, %v2927
        %v2929 = vand.u32 %v2928, 4294901760
        %v2930 = vsub.f32 %v2928, %v2929
        %v2931 = vand.u32 %v2930, 4294901760
        %2932 = vmatmul.mubr.f32.gmra.mrb[0].mxu0 %v2931
        %v2933 = vpop.f32.mrb[0].mxu0
        %v2934 = vadd.f32 %v2827, %v2933
        %v2935 = vpop.f32.mrb[0].mxu0
        %2936 = vmatprep.mubr.f32.mxu0 0.0
        %v2937 = vand.u32 %v2852, 4294901760
        %v2938 = vsub.f32 %v2852, %v2937
        %v2939 = vand.u32 %v2938, 4294901760
        %v2940 = vsub.f32 %v2938, %v2939
        %v2941 = vand.u32 %v2940, 4294901760
        %2942 = vmatmul.mubr.f32.gmra.mrb[0].mxu0 %v2941
        %v2943 = vpop.f32.mrb[0].mxu0
        %v2944 = vadd.f32 %v2833, %v2943
        %v2945 = vpop.f32.mrb[0].mxu0
        %2946 = vmatprep.mubr.f32.mxu0 0.0
        %v2947 = vand.u32 %v2855, 4294901760
        %v2948 = vsub.f32 %v2855, %v2947
        %v2949 = vand.u32 %v2948, 4294901760
        %v2950 = vsub.f32 %v2948, %v2949
        %v2951 = vand.u32 %v2950, 4294901760
        %2952 = vmatmul.mubr.f32.gmra.mrb[0].mxu0 %v2951
        %v2953 = vpop.f32.mrb[0].mxu0
        %v2954 = vadd.f32 %v2839, %v2953
        %v2955 = vpop.f32.mrb[0].mxu0
        %2956 = vmatprep.mubr.f32.mxu0 0.0
        %v2957 = vand.u32 %v2858, 4294901760
        %v2958 = vsub.f32 %v2858, %v2957
        %v2959 = vand.u32 %v2958, 4294901760
        %v2960 = vsub.f32 %v2958, %v2959
        %v2961 = vand.u32 %v2960, 4294901760
        %2962 = vmatmul.mubr.f32.gmra.mrb[0].mxu0 %v2961
        %v2963 = vpop.f32.mrb[0].mxu0
        %v2964 = vadd.f32 %v2845, %v2963
        %v2965 = vpop.f32.mrb[0].mxu0
        %2966 = vdwg.mxu0
        %2967 = vmatprep.subr.mxu0 0.0
        %v2968 = vand.u32 %v1217, 4294901760
        %v2969 = vsub.f32 %v1217, %v2968
        %v2970 = vand.u32 %v2969, 4294901760
        %v2971 = vsub.f32 %v2969, %v2970
        %v2972 = vand.u32 %v2971, 4294901760
        %2973 = vmatpush1.msra.mxu0 %v2972
        %2974 = vmatprep.subr.mxu0 0.0
        %v2975 = vand.u32 %v1223, 4294901760
        %v2976 = vsub.f32 %v1223, %v2975
        %v2977 = vand.u32 %v2976, 4294901760
        %v2978 = vsub.f32 %v2976, %v2977
        %v2979 = vand.u32 %v2978, 4294901760
        %2980 = vmatpush1.msra.mxu0 %v2979
        %2981 = vmatprep.subr.mxu0 0.0
        %2982 = vmatpush1.msra.mxu0 0.0
        %2983 = vmatprep.subr.mxu0 0.0
        %2984 = vmatpush1.msra.mxu0 0.0
        %2985 = vmatprep.subr.mxu0 0.0
        %2986 = vmatpush1.msra.mxu0 0.0
        %2987 = vmatprep.subr.mxu0 0.0
        %2988 = vmatpush1.msra.mxu0 0.0
        %2989 = vmatprep.subr.mxu0 0.0
        %2990 = vmatpush1.msra.mxu0 0.0
        %2991 = vmatprep.subr.mxu0 0.0
        %2992 = vmatpush1.msra.mxu0 0.0
        %2993 = vmatprep.subr.mxu0 0.0
        %2994 = vmatpush1.msra.mxu0 0.0
        %2995 = vmatprep.subr.mxu0 0.0
        %2996 = vmatpush1.msra.mxu0 0.0
        %2997 = vmatprep.subr.mxu0 0.0
        %2998 = vmatpush1.msra.mxu0 0.0
        %2999 = vmatprep.subr.mxu0 0.0
        %3000 = vmatpush1.msra.mxu0 0.0
        %3001 = vmatprep.subr.mxu0 0.0
        %3002 = vmatpush1.msra.mxu0 0.0
        %3003 = vmatprep.subr.mxu0 0.0
        %3004 = vmatpush1.msra.mxu0 0.0
        %3005 = vmatprep.subr.mxu0 0.0
        %3006 = vmatpush1.msra.mxu0 0.0
        %3007 = vmatprep.subr.mxu0 0.0
        %3008 = vmatpush1.msra.mxu0 0.0
        %3009 = vmatprep.subr.mxu0 0.0
        %3010 = vmatpush1.msra.mxu0 0.0
        %3011 = vmatprep.subr.mxu0 0.0
        %3012 = vmatpush1.msra.mxu0 0.0
        %3013 = vmatprep.subr.mxu0 0.0
        %3014 = vmatpush1.msra.mxu0 0.0
        %3015 = vmatprep.subr.mxu0 0.0
        %3016 = vmatpush1.msra.mxu0 0.0
        %3017 = vmatprep.subr.mxu0 0.0
        %3018 = vmatpush1.msra.mxu0 0.0
        %3019 = vmatprep.subr.mxu0 0.0
        %3020 = vmatpush1.msra.mxu0 0.0
        %3021 = vmatprep.subr.mxu0 0.0
        %3022 = vmatpush1.msra.mxu0 0.0
        %3023 = vmatprep.subr.mxu0 0.0
        %3024 = vmatpush1.msra.mxu0 0.0
        %3025 = vmatprep.subr.mxu0 0.0
        %3026 = vmatpush1.msra.mxu0 0.0
        %3027 = vmatprep.subr.mxu0 0.0
        %3028 = vmatpush1.msra.mxu0 0.0
        %3029 = vmatprep.subr.mxu0 0.0
        %3030 = vmatpush1.msra.mxu0 0.0
        %3031 = vmatprep.subr.mxu0 0.0
        %3032 = vmatpush1.msra.mxu0 0.0
        %3033 = vmatprep.subr.mxu0 0.0
        %3034 = vmatpush1.msra.mxu0 0.0
        %3035 = vmatprep.subr.mxu0 0.0
        %3036 = vmatpush1.msra.mxu0 0.0
        %3037 = vmatprep.subr.mxu0 0.0
        %3038 = vmatpush1.msra.mxu0 0.0
        %3039 = vmatprep.subr.mxu0 0.0
        %3040 = vmatpush1.msra.mxu0 0.0
        %3041 = vmatprep.mubr.f32.mxu0 0.0
        %v3042 = vand.u32 %v2849, 4294901760
        %3043 = vmatmul.mubr.f32.gmra.mrb[0].mxu0 %v3042
        %v3044 = vpop.f32.mrb[0].mxu0
        %v3045 = vadd.f32 %v2934, %v3044
        %v3046 = vpop.f32.mrb[0].mxu0
        %3047 = vmatprep.mubr.f32.mxu0 0.0
        %v3048 = vand.u32 %v2852, 4294901760
        %3049 = vmatmul.mubr.f32.gmra.mrb[0].mxu0 %v3048
        %v3050 = vpop.f32.mrb[0].mxu0
        %v3051 = vadd.f32 %v2944, %v3050
        %v3052 = vpop.f32.mrb[0].mxu0
        %3053 = vmatprep.mubr.f32.mxu0 0.0
        %v3054 = vand.u32 %v2855, 4294901760
        %3055 = vmatmul.mubr.f32.gmra.mrb[0].mxu0 %v3054
        %v3056 = vpop.f32.mrb[0].mxu0
        %v3057 = vadd.f32 %v2954, %v3056
        %v3058 = vpop.f32.mrb[0].mxu0
        %3059 = vmatprep.mubr.f32.mxu0 0.0
        %v3060 = vand.u32 %v2858, 4294901760
        %3061 = vmatmul.mubr.f32.gmra.mrb[0].mxu0 %v3060
        %v3062 = vpop.f32.mrb[0].mxu0
        %v3063 = vadd.f32 %v2964, %v3062
        %v3064 = vpop.f32.mrb[0].mxu0
        %3065 = vdwg.mxu0
        %3066 = vmatprep.subr.mxu0 0.0
        %v3067 = vand.u32 %v1217, 4294901760
        %v3068 = vsub.f32 %v1217, %v3067
        %3069 = vmatpush1.msra.mxu0 %v3068
        %3070 = vmatprep.subr.mxu0 0.0
        %v3071 = vand.u32 %v1223, 4294901760
        %v3072 = vsub.f32 %v1223, %v3071
        %3073 = vmatpush1.msra.mxu0 %v3072
        %3074 = vmatprep.subr.mxu0 0.0
        %3075 = vmatpush1.msra.mxu0 0.0
        %3076 = vmatprep.subr.mxu0 0.0
        %3077 = vmatpush1.msra.mxu0 0.0
        %3078 = vmatprep.subr.mxu0 0.0
        %3079 = vmatpush1.msra.mxu0 0.0
        %3080 = vmatprep.subr.mxu0 0.0
        %3081 = vmatpush1.msra.mxu0 0.0
        %3082 = vmatprep.subr.mxu0 0.0
        %3083 = vmatpush1.msra.mxu0 0.0
        %3084 = vmatprep.subr.mxu0 0.0
        %3085 = vmatpush1.msra.mxu0 0.0
        %3086 = vmatprep.subr.mxu0 0.0
        %3087 = vmatpush1.msra.mxu0 0.0
        %3088 = vmatprep.subr.mxu0 0.0
        %3089 = vmatpush1.msra.mxu0 0.0
        %3090 = vmatprep.subr.mxu0 0.0
        %3091 = vmatpush1.msra.mxu0 0.0
        %3092 = vmatprep.subr.mxu0 0.0
        %3093 = vmatpush1.msra.mxu0 0.0
        %3094 = vmatprep.subr.mxu0 0.0
        %3095 = vmatpush1.msra.mxu0 0.0
        %3096 = vmatprep.subr.mxu0 0.0
        %3097 = vmatpush1.msra.mxu0 0.0
        %3098 = vmatprep.subr.mxu0 0.0
        %3099 = vmatpush1.msra.mxu0 0.0
        %3100 = vmatprep.subr.mxu0 0.0
        %3101 = vmatpush1.msra.mxu0 0.0
        %3102 = vmatprep.subr.mxu0 0.0
        %3103 = vmatpush1.msra.mxu0 0.0
        %3104 = vmatprep.subr.mxu0 0.0
        %3105 = vmatpush1.msra.mxu0 0.0
        %3106 = vmatprep.subr.mxu0 0.0
        %3107 = vmatpush1.msra.mxu0 0.0
        %3108 = vmatprep.subr.mxu0 0.0
        %3109 = vmatpush1.msra.mxu0 0.0
        %3110 = vmatprep.subr.mxu0 0.0
        %3111 = vmatpush1.msra.mxu0 0.0
        %3112 = vmatprep.subr.mxu0 0.0
        %3113 = vmatpush1.msra.mxu0 0.0
        %3114 = vmatprep.subr.mxu0 0.0
        %3115 = vmatpush1.msra.mxu0 0.0
        %3116 = vmatprep.subr.mxu0 0.0
        %3117 = vmatpush1.msra.mxu0 0.0
        %3118 = vmatprep.subr.mxu0 0.0
        %3119 = vmatpush1.msra.mxu0 0.0
        %3120 = vmatprep.subr.mxu0 0.0
        %3121 = vmatpush1.msra.mxu0 0.0
        %3122 = vmatprep.subr.mxu0 0.0
        %3123 = vmatpush1.msra.mxu0 0.0
        %3124 = vmatprep.subr.mxu0 0.0
        %3125 = vmatpush1.msra.mxu0 0.0
        %3126 = vmatprep.subr.mxu0 0.0
        %3127 = vmatpush1.msra.mxu0 0.0
        %3128 = vmatprep.subr.mxu0 0.0
        %3129 = vmatpush1.msra.mxu0 0.0
        %3130 = vmatprep.subr.mxu0 0.0
        %3131 = vmatpush1.msra.mxu0 0.0
        %3132 = vmatprep.subr.mxu0 0.0
        %3133 = vmatpush1.msra.mxu0 0.0
        %3134 = vmatprep.mubr.f32.mxu0 0.0
        %v3135 = vand.u32 %v2849, 4294901760
        %v3136 = vsub.f32 %v2849, %v3135
        %3137 = vmatmul.mubr.f32.gmra.mrb[0].mxu0 %v3136
        %v3138 = vpop.f32.mrb[0].mxu0
        %v3139 = vadd.f32 %v3045, %v3138
        %v3140 = vpop.f32.mrb[0].mxu0
        %3141 = vmatprep.mubr.f32.mxu0 0.0
        %v3142 = vand.u32 %v2852, 4294901760
        %v3143 = vsub.f32 %v2852, %v3142
        %3144 = vmatmul.mubr.f32.gmra.mrb[0].mxu0 %v3143
        %v3145 = vpop.f32.mrb[0].mxu0
        %v3146 = vadd.f32 %v3051, %v3145
        %v3147 = vpop.f32.mrb[0].mxu0
        %3148 = vmatprep.mubr.f32.mxu0 0.0
        %v3149 = vand.u32 %v2855, 4294901760
        %v3150 = vsub.f32 %v2855, %v3149
        %3151 = vmatmul.mubr.f32.gmra.mrb[0].mxu0 %v3150
        %v3152 = vpop.f32.mrb[0].mxu0
        %v3153 = vadd.f32 %v3057, %v3152
        %v3154 = vpop.f32.mrb[0].mxu0
        %3155 = vmatprep.mubr.f32.mxu0 0.0
        %v3156 = vand.u32 %v2858, 4294901760
        %v3157 = vsub.f32 %v2858, %v3156
        %3158 = vmatmul.mubr.f32.gmra.mrb[0].mxu0 %v3157
        %v3159 = vpop.f32.mrb[0].mxu0
        %v3160 = vadd.f32 %v3063, %v3159
        %v3161 = vpop.f32.mrb[0].mxu0
        %3162 = vdwg.mxu0
        %3163 = vmatprep.subr.mxu0 0.0
        %v3164 = vand.u32 %v1217, 4294901760
        %3165 = vmatpush1.msra.mxu0 %v3164
        %3166 = vmatprep.subr.mxu0 0.0
        %v3167 = vand.u32 %v1223, 4294901760
        %3168 = vmatpush1.msra.mxu0 %v3167
        %3169 = vmatprep.subr.mxu0 0.0
        %3170 = vmatpush1.msra.mxu0 0.0
        %3171 = vmatprep.subr.mxu0 0.0
        %3172 = vmatpush1.msra.mxu0 0.0
        %3173 = vmatprep.subr.mxu0 0.0
        %3174 = vmatpush1.msra.mxu0 0.0
        %3175 = vmatprep.subr.mxu0 0.0
        %3176 = vmatpush1.msra.mxu0 0.0
        %3177 = vmatprep.subr.mxu0 0.0
        %3178 = vmatpush1.msra.mxu0 0.0
        %3179 = vmatprep.subr.mxu0 0.0
        %3180 = vmatpush1.msra.mxu0 0.0
        %3181 = vmatprep.subr.mxu0 0.0
        %3182 = vmatpush1.msra.mxu0 0.0
        %3183 = vmatprep.subr.mxu0 0.0
        %3184 = vmatpush1.msra.mxu0 0.0
        %3185 = vmatprep.subr.mxu0 0.0
        %3186 = vmatpush1.msra.mxu0 0.0
        %3187 = vmatprep.subr.mxu0 0.0
        %3188 = vmatpush1.msra.mxu0 0.0
        %3189 = vmatprep.subr.mxu0 0.0
        %3190 = vmatpush1.msra.mxu0 0.0
        %3191 = vmatprep.subr.mxu0 0.0
        %3192 = vmatpush1.msra.mxu0 0.0
        %3193 = vmatprep.subr.mxu0 0.0
        %3194 = vmatpush1.msra.mxu0 0.0
        %3195 = vmatprep.subr.mxu0 0.0
        %3196 = vmatpush1.msra.mxu0 0.0
        %3197 = vmatprep.subr.mxu0 0.0
        %3198 = vmatpush1.msra.mxu0 0.0
        %3199 = vmatprep.subr.mxu0 0.0
        %3200 = vmatpush1.msra.mxu0 0.0
        %3201 = vmatprep.subr.mxu0 0.0
        %3202 = vmatpush1.msra.mxu0 0.0
        %3203 = vmatprep.subr.mxu0 0.0
        %3204 = vmatpush1.msra.mxu0 0.0
        %3205 = vmatprep.subr.mxu0 0.0
        %3206 = vmatpush1.msra.mxu0 0.0
        %3207 = vmatprep.subr.mxu0 0.0
        %3208 = vmatpush1.msra.mxu0 0.0
        %3209 = vmatprep.subr.mxu0 0.0
        %3210 = vmatpush1.msra.mxu0 0.0
        %3211 = vmatprep.subr.mxu0 0.0
        %3212 = vmatpush1.msra.mxu0 0.0
        %3213 = vmatprep.subr.mxu0 0.0
        %3214 = vmatpush1.msra.mxu0 0.0
        %3215 = vmatprep.subr.mxu0 0.0
        %3216 = vmatpush1.msra.mxu0 0.0
        %3217 = vmatprep.subr.mxu0 0.0
        %3218 = vmatpush1.msra.mxu0 0.0
        %3219 = vmatprep.subr.mxu0 0.0
        %3220 = vmatpush1.msra.mxu0 0.0
        %3221 = vmatprep.subr.mxu0 0.0
        %3222 = vmatpush1.msra.mxu0 0.0
        %3223 = vmatprep.subr.mxu0 0.0
        %3224 = vmatpush1.msra.mxu0 0.0
        %3225 = vmatprep.subr.mxu0 0.0
        %3226 = vmatpush1.msra.mxu0 0.0
        %3227 = vmatprep.subr.mxu0 0.0
        %3228 = vmatpush1.msra.mxu0 0.0
        %3229 = vmatprep.mubr.f32.mxu0 0.0
        %v3230 = vand.u32 %v2849, 4294901760
        %v3231 = vsub.f32 %v2849, %v3230
        %v3232 = vand.u32 %v3231, 4294901760
        %3233 = vmatmul.mubr.f32.gmra.mrb[0].mxu0 %v3232
        %v3234 = vpop.f32.mrb[0].mxu0
        %v3235 = vadd.f32 %v3139, %v3234
        %v3236 = vpop.f32.mrb[0].mxu0
        %3237 = vmatprep.mubr.f32.mxu0 0.0
        %v3238 = vand.u32 %v2852, 4294901760
        %v3239 = vsub.f32 %v2852, %v3238
        %v3240 = vand.u32 %v3239, 4294901760
        %3241 = vmatmul.mubr.f32.gmra.mrb[0].mxu0 %v3240
        %v3242 = vpop.f32.mrb[0].mxu0
        %v3243 = vadd.f32 %v3146, %v3242
        %v3244 = vpop.f32.mrb[0].mxu0
        %3245 = vmatprep.mubr.f32.mxu0 0.0
        %v3246 = vand.u32 %v2855, 4294901760
        %v3247 = vsub.f32 %v2855, %v3246
        %v3248 = vand.u32 %v3247, 4294901760
        %3249 = vmatmul.mubr.f32.gmra.mrb[0].mxu0 %v3248
        %v3250 = vpop.f32.mrb[0].mxu0
        %v3251 = vadd.f32 %v3153, %v3250
        %v3252 = vpop.f32.mrb[0].mxu0
        %3253 = vmatprep.mubr.f32.mxu0 0.0
        %v3254 = vand.u32 %v2858, 4294901760
        %v3255 = vsub.f32 %v2858, %v3254
        %v3256 = vand.u32 %v3255, 4294901760
        %3257 = vmatmul.mubr.f32.gmra.mrb[0].mxu0 %v3256
        %v3258 = vpop.f32.mrb[0].mxu0
        %v3259 = vadd.f32 %v3160, %v3258
        %v3260 = vpop.f32.mrb[0].mxu0
        %3261 = vdwg.mxu0
        %3262 = vmatprep.subr.mxu0 0.0
        %v3263 = vand.u32 %v1217, 4294901760
        %v3264 = vsub.f32 %v1217, %v3263
        %v3265 = vand.u32 %v3264, 4294901760
        %3266 = vmatpush1.msra.mxu0 %v3265
        %3267 = vmatprep.subr.mxu0 0.0
        %v3268 = vand.u32 %v1223, 4294901760
        %v3269 = vsub.f32 %v1223, %v3268
        %v3270 = vand.u32 %v3269, 4294901760
        %3271 = vmatpush1.msra.mxu0 %v3270
        %3272 = vmatprep.subr.mxu0 0.0
        %3273 = vmatpush1.msra.mxu0 0.0
        %3274 = vmatprep.subr.mxu0 0.0
        %3275 = vmatpush1.msra.mxu0 0.0
        %3276 = vmatprep.subr.mxu0 0.0
        %3277 = vmatpush1.msra.mxu0 0.0
        %3278 = vmatprep.subr.mxu0 0.0
        %3279 = vmatpush1.msra.mxu0 0.0
        %3280 = vmatprep.subr.mxu0 0.0
        %3281 = vmatpush1.msra.mxu0 0.0
        %3282 = vmatprep.subr.mxu0 0.0
        %3283 = vmatpush1.msra.mxu0 0.0
        %3284 = vmatprep.subr.mxu0 0.0
        %3285 = vmatpush1.msra.mxu0 0.0
        %3286 = vmatprep.subr.mxu0 0.0
        %3287 = vmatpush1.msra.mxu0 0.0
        %3288 = vmatprep.subr.mxu0 0.0
        %3289 = vmatpush1.msra.mxu0 0.0
        %3290 = vmatprep.subr.mxu0 0.0
        %3291 = vmatpush1.msra.mxu0 0.0
        %3292 = vmatprep.subr.mxu0 0.0
        %3293 = vmatpush1.msra.mxu0 0.0
        %3294 = vmatprep.subr.mxu0 0.0
        %3295 = vmatpush1.msra.mxu0 0.0
        %3296 = vmatprep.subr.mxu0 0.0
        %3297 = vmatpush1.msra.mxu0 0.0
        %3298 = vmatprep.subr.mxu0 0.0
        %3299 = vmatpush1.msra.mxu0 0.0
        %3300 = vmatprep.subr.mxu0 0.0
        %3301 = vmatpush1.msra.mxu0 0.0
        %3302 = vmatprep.subr.mxu0 0.0
        %3303 = vmatpush1.msra.mxu0 0.0
        %3304 = vmatprep.subr.mxu0 0.0
        %3305 = vmatpush1.msra.mxu0 0.0
        %3306 = vmatprep.subr.mxu0 0.0
        %3307 = vmatpush1.msra.mxu0 0.0
        %3308 = vmatprep.subr.mxu0 0.0
        %3309 = vmatpush1.msra.mxu0 0.0
        %3310 = vmatprep.subr.mxu0 0.0
        %3311 = vmatpush1.msra.mxu0 0.0
        %3312 = vmatprep.subr.mxu0 0.0
        %3313 = vmatpush1.msra.mxu0 0.0
        %3314 = vmatprep.subr.mxu0 0.0
        %3315 = vmatpush1.msra.mxu0 0.0
        %3316 = vmatprep.subr.mxu0 0.0
        %3317 = vmatpush1.msra.mxu0 0.0
        %3318 = vmatprep.subr.mxu0 0.0
        %3319 = vmatpush1.msra.mxu0 0.0
        %3320 = vmatprep.subr.mxu0 0.0
        %3321 = vmatpush1.msra.mxu0 0.0
        %3322 = vmatprep.subr.mxu0 0.0
        %3323 = vmatpush1.msra.mxu0 0.0
        %3324 = vmatprep.subr.mxu0 0.0
        %3325 = vmatpush1.msra.mxu0 0.0
        %3326 = vmatprep.subr.mxu0 0.0
        %3327 = vmatpush1.msra.mxu0 0.0
        %3328 = vmatprep.subr.mxu0 0.0
        %3329 = vmatpush1.msra.mxu0 0.0
        %3330 = vmatprep.subr.mxu0 0.0
        %3331 = vmatpush1.msra.mxu0 0.0
        %3332 = vmatprep.mubr.f32.mxu0 0.0
        %v3333 = vand.u32 %v2849, 4294901760
        %3334 = vmatmul.mubr.f32.gmra.mrb[0].mxu0 %v3333
        %v3335 = vpop.f32.mrb[0].mxu0
        %v3336 = vadd.f32 %v3235, %v3335
        %v3337 = vpop.f32.mrb[0].mxu0
        %3338 = vmatprep.mubr.f32.mxu0 0.0
        %v3339 = vand.u32 %v2852, 4294901760
        %3340 = vmatmul.mubr.f32.gmra.mrb[0].mxu0 %v3339
        %v3341 = vpop.f32.mrb[0].mxu0
        %v3342 = vadd.f32 %v3243, %v3341
        %v3343 = vpop.f32.mrb[0].mxu0
        %3344 = vmatprep.mubr.f32.mxu0 0.0
        %v3345 = vand.u32 %v2855, 4294901760
        %3346 = vmatmul.mubr.f32.gmra.mrb[0].mxu0 %v3345
        %v3347 = vpop.f32.mrb[0].mxu0
        %v3348 = vadd.f32 %v3251, %v3347
        %v3349 = vpop.f32.mrb[0].mxu0
        %3350 = vmatprep.mubr.f32.mxu0 0.0
        %v3351 = vand.u32 %v2858, 4294901760
        %3352 = vmatmul.mubr.f32.gmra.mrb[0].mxu0 %v3351
        %v3353 = vpop.f32.mrb[0].mxu0
        %v3354 = vadd.f32 %v3259, %v3353
        %v3355 = vpop.f32.mrb[0].mxu0
        %3356 = vdwg.mxu0
        %3357 = vmatprep.subr.mxu0 0.0
        %v3358 = vand.u32 %v1217, 4294901760
        %3359 = vmatpush1.msra.mxu0 %v3358
        %3360 = vmatprep.subr.mxu0 0.0
        %v3361 = vand.u32 %v1223, 4294901760
        %3362 = vmatpush1.msra.mxu0 %v3361
        %3363 = vmatprep.subr.mxu0 0.0
        %3364 = vmatpush1.msra.mxu0 0.0
        %3365 = vmatprep.subr.mxu0 0.0
        %3366 = vmatpush1.msra.mxu0 0.0
        %3367 = vmatprep.subr.mxu0 0.0
        %3368 = vmatpush1.msra.mxu0 0.0
        %3369 = vmatprep.subr.mxu0 0.0
        %3370 = vmatpush1.msra.mxu0 0.0
        %3371 = vmatprep.subr.mxu0 0.0
        %3372 = vmatpush1.msra.mxu0 0.0
        %3373 = vmatprep.subr.mxu0 0.0
        %3374 = vmatpush1.msra.mxu0 0.0
        %3375 = vmatprep.subr.mxu0 0.0
        %3376 = vmatpush1.msra.mxu0 0.0
        %3377 = vmatprep.subr.mxu0 0.0
        %3378 = vmatpush1.msra.mxu0 0.0
        %3379 = vmatprep.subr.mxu0 0.0
        %3380 = vmatpush1.msra.mxu0 0.0
        %3381 = vmatprep.subr.mxu0 0.0
        %3382 = vmatpush1.msra.mxu0 0.0
        %3383 = vmatprep.subr.mxu0 0.0
        %3384 = vmatpush1.msra.mxu0 0.0
        %3385 = vmatprep.subr.mxu0 0.0
        %3386 = vmatpush1.msra.mxu0 0.0
        %3387 = vmatprep.subr.mxu0 0.0
        %3388 = vmatpush1.msra.mxu0 0.0
        %3389 = vmatprep.subr.mxu0 0.0
        %3390 = vmatpush1.msra.mxu0 0.0
        %3391 = vmatprep.subr.mxu0 0.0
        %3392 = vmatpush1.msra.mxu0 0.0
        %3393 = vmatprep.subr.mxu0 0.0
        %3394 = vmatpush1.msra.mxu0 0.0
        %3395 = vmatprep.subr.mxu0 0.0
        %3396 = vmatpush1.msra.mxu0 0.0
        %3397 = vmatprep.subr.mxu0 0.0
        %3398 = vmatpush1.msra.mxu0 0.0
        %3399 = vmatprep.subr.mxu0 0.0
        %3400 = vmatpush1.msra.mxu0 0.0
        %3401 = vmatprep.subr.mxu0 0.0
        %3402 = vmatpush1.msra.mxu0 0.0
        %3403 = vmatprep.subr.mxu0 0.0
        %3404 = vmatpush1.msra.mxu0 0.0
        %3405 = vmatprep.subr.mxu0 0.0
        %3406 = vmatpush1.msra.mxu0 0.0
        %3407 = vmatprep.subr.mxu0 0.0
        %3408 = vmatpush1.msra.mxu0 0.0
        %3409 = vmatprep.subr.mxu0 0.0
        %3410 = vmatpush1.msra.mxu0 0.0
        %3411 = vmatprep.subr.mxu0 0.0
        %3412 = vmatpush1.msra.mxu0 0.0
        %3413 = vmatprep.subr.mxu0 0.0
        %3414 = vmatpush1.msra.mxu0 0.0
        %3415 = vmatprep.subr.mxu0 0.0
        %3416 = vmatpush1.msra.mxu0 0.0
        %3417 = vmatprep.subr.mxu0 0.0
        %3418 = vmatpush1.msra.mxu0 0.0
        %3419 = vmatprep.subr.mxu0 0.0
        %3420 = vmatpush1.msra.mxu0 0.0
        %3421 = vmatprep.subr.mxu0 0.0
        %3422 = vmatpush1.msra.mxu0 0.0
        %3423 = vmatprep.mubr.f32.mxu0 0.0
        %v3424 = vand.u32 %v2849, 4294901760
        %3425 = vmatmul.mubr.f32.gmra.mrb[0].mxu0 %v3424
        %v3426 = vpop.f32.mrb[0].mxu0
        %v3427 = vadd.f32 %v3336, %v3426
        %v3428 = vpop.f32.mrb[0].mxu0
        %3429 = vmatprep.mubr.f32.mxu0 0.0
        %v3430 = vand.u32 %v2852, 4294901760
        %3431 = vmatmul.mubr.f32.gmra.mrb[0].mxu0 %v3430
        %v3432 = vpop.f32.mrb[0].mxu0
        %v3433 = vadd.f32 %v3342, %v3432
        %v3434 = vpop.f32.mrb[0].mxu0
        %3435 = vmatprep.mubr.f32.mxu0 0.0
        %v3436 = vand.u32 %v2855, 4294901760
        %3437 = vmatmul.mubr.f32.gmra.mrb[0].mxu0 %v3436
        %v3438 = vpop.f32.mrb[0].mxu0
        %v3439 = vadd.f32 %v3348, %v3438
        %v3440 = vpop.f32.mrb[0].mxu0
        %3441 = vmatprep.mubr.f32.mxu0 0.0
        %v3442 = vand.u32 %v2858, 4294901760
        %3443 = vmatmul.mubr.f32.gmra.mrb[0].mxu0 %v3442
        %v3444 = vpop.f32.mrb[0].mxu0
        %v3445 = vadd.f32 %v3354, %v3444
        %v3446 = vpop.f32.mrb[0].mxu0
        %3447 = vdwg.mxu0
        %vm3448 = vcmask 261120
        %3449 = vst.msk [vmem:[%s152] sm:$0xff] %vm3448, %v3427
        %3450 = vst.msk [vmem:[%s152 + $0x8] sm:$0xff] %vm3448, %v3433
        %3451 = vst.msk [vmem:[%s152 + $0x10] sm:$0xff] %vm3448, %v3439
        %3452 = vst.msk [vmem:[%s152 + $0x18] sm:$0xff] %vm3448, %v3445
        %s3453 = sand.u32 %s68, 1
        %s3454 = scalar_lea.sflag [#allocation4], %s3453
        %s3455 = sand.u32 %s68, 1
        %s3456 = smul.addr %s3455, 32
        %s3457 = scalar_lea.vmem [#allocation5], %s3456
        // Predicated region
        $region29: #{tpu_custom_call.1} parent=23 // pred_check
          %p3458 = pneg %p78
        $region30: #{tpu_custom_call.1} parent=23 // pred_check_branch
          %3460 = sbr.rel (%p3458) target = $region32
        $region31: #{tpu_custom_call.1} parent=23 // pred_region
          %s3461 = smul.u32 4, %s23
          %s3463 = ssub.s32 512, 512
          %3464 = vsyncadd %s3454, %s3463
          %s3465 = smul.addr %s22, 4
          %s3466 = sadd.s32 %s3461, %s3465
          %s3467 = smul.addr %s3466, 128
          %s3468 = scalar_lea.hbm %s1, %s3467
          %s3469 = sshll.u32 %s3457, 4
          %s3470 = int_to_ptr.vmem [resolvable:$true] %s3469
          %3475 = dma.vmem_to_hbm [thread:$0]  %s3470, 512, %s3468, %s3454, 128, 128, 8
        $region32: #{tpu_custom_call.1} parent=23 // pred_fallthru
          _
      $region24: #{tpu_custom_call.1} parent=5 // pred_fallthru
        _
      %p3476 = scmp.le.s32.totalorder 2, %s13
      // Predicated region
      $region33: #{tpu_custom_call.1} parent=5 // pred_check
        %p3477 = pneg %p3476
      $region34: #{tpu_custom_call.1} parent=5 // pred_check_branch
        %3479 = sbr.rel (%p3477) target = $region36
      $region35: #{tpu_custom_call.1} parent=5 // pred_region
        %s3480 = ssub.s32 %s13, 2
        // Predicated region
        $region37: #{tpu_custom_call.1} parent=35 // pred_check
          %p3481 = pneg %p84
        $region38: #{tpu_custom_call.1} parent=35 // pred_check_branch
          %3483 = sbr.rel (%p3481) target = $region40
        $region39: #{tpu_custom_call.1} parent=35 // pred_region
          %s3484 = sand.u32 %s69, 1
          %s3485 = scalar_lea.sflag [#allocation4], %s3484
          %s3486 = sand.u32 %s69, 1
          %s3487 = smul.addr %s3486, 32
          %s3488 = scalar_lea.vmem [#allocation5], %s3487
          %3489 = dma.done %s3485, 512
        $region40: #{tpu_custom_call.1} parent=35 // pred_fallthru
          _
      $region36: #{tpu_custom_call.1} parent=5 // pred_fallthru
        _
    $region6: #{tpu_custom_call.1} parent=1 // loop_footer
      %s17 = sadd.s32 1, %s13
    $region7: #{tpu_custom_call.1} parent=1 // loop_footer_branch
      %12 = sbr.rel target = $region3
    $region8: #{tpu_custom_call.1} parent=1 // loop_exit
      _
    %3490 = vsyncpa [#allocation3], 1
    %s3491 = scalar_lea.sflag [#allocation3], 1
    %3492 = vsyncpa %s3491, 1
    %3493 = vsyncpa [#allocation4], 1
    %s3494 = scalar_lea.sflag [#allocation4], 1
    %3495 = vsyncpa %s3494, 1

</llo_original>
